<compile_context>
chip_gen: v6e
topology: v6e:2x2x1
jax: 0.10.0
libtpu: 0.0.40
codegen_flags: <defaults>
</compile_context>

<pallas_src>
import jax
import jax.numpy as jnp
from jax import lax
from jax.experimental import pallas as pl
from jax.experimental.pallas import tpu as pltpu

N_SUB = 4     # fixed RK4 substeps per output interval
TB_MAX = 32   # max output timesteps integrated per grid step


def _make_flow_kernel(NB, D, H, T, TB, n_sub, order):
    q = D // 2
    f_out = D if order == 1 else q

    def kernel(ts_ref,               # SMEM scalar prefetch: (T,) f32 time grid
               z0_ref,               # (NB, D)  initial-state batch tile
               w1_ref, b1_ref,       # (D, H), (1, H)
               w2_ref, b2_ref,       # (H, f_out), (1, f_out)
               out_ref,              # (TB, NB*D) lane-dense output block
               state_ref,            # VMEM (NB, D) f32 carried ODE state
               traj_ref):            # VMEM (TB, NB, D) f32 per-chunk trajectory
        it = pl.program_id(1)        # time-chunk index (sequential axis)
        t_base = it * TB

        # Hoist invariant loads / broadcasts out of the unrolled RK4 loop:
        # read once per grid step instead of once per inlined stage.
        w1 = w1_ref[...]
        w2 = w2_ref[...]
        b1 = jnp.broadcast_to(b1_ref[...], (NB, H))
        b2 = jnp.broadcast_to(b2_ref[...], (NB, f_out))

        def odefunc(z):
            # diffeq MLP (2 small MXU matmuls + EUP tanh).
            h = jnp.tanh(jnp.dot(z, w1, preferred_element_type=jnp.float32) + b1)
            dv = jnp.dot(h, w2, preferred_element_type=jnp.float32) + b2
            if order == 1:
                # first_order: d(sv)/dt = diffeq(sv)
                return dv
            # second_order: d[s, v]/dt = [v, diffeq(sv)] -- lane slice + concat
            # on XLU/VPU, no extra MXU work.
            return jnp.concatenate([z[:, q:], dv], axis=1)

        @pl.when(it == 0)
        def _():
            state_ref[...] = z0_ref[...].astype(jnp.float32)

        def time_step(t_local, carry):
            t_global = t_base + t_local

            @pl.when(jnp.logical_and(t_global > 0, t_global < T))
            def _():
                t0 = ts_ref[t_global - 1]
                t1 = ts_ref[t_global]
                dt = (t1 - t0) / n_sub

                def substep(_, z):
                    k1 = odefunc(z)
                    k2 = odefunc(z + 0.5 * dt * k1)
                    k3 = odefunc(z + 0.5 * dt * k2)
                    k4 = odefunc(z + dt * k3)
                    return z + (dt / 6.0) * (k1 + 2.0 * k2 + 2.0 * k3 + k4)

                state_ref[...] = lax.fori_loop(0, n_sub, substep, state_ref[...],
                                               unroll=True)

            traj_ref[t_local] = state_ref[...]
            return carry

        lax.fori_loop(0, TB, time_step, 0)

        # Single lane-dense store for the whole time chunk: NB*D lanes
        # (multiple of 128 at these shapes) instead of TB masked D-wide stores.
        out_ref[...] = traj_ref[...].reshape(TB, NB * D).astype(out_ref.dtype)

    return kernel


def flow_forward(z0, ts, w1, b1, w2, b2, order=2, n_sub=N_SUB, tb=TB_MAX, nb=None):
    """Pallas flow: z0 (N, D), ts (T,) -> zt (N, T, D), using ODEfunc(order)."""
    N, D = z0.shape
    q = D // 2
    H = w1.shape[1]
    T = ts.shape[0]
    f_out = D if order == 1 else q
    assert w2.shape == (H, f_out) and b2.shape == (1, f_out)

    # Batch tiling (the "parallel" grid axis; useful on v7x megacore). Fall
    # back to a single tile if tiling would break lane-dense output alignment.
    if nb is None:
        nb = min(N, 128)
    if (N % nb != 0) or (nb != N and (nb * D) % 128 != 0):
        nb = N
    n_tiles = N // nb

    # Time chunking: `tb` output timesteps per grid step (whole T if small).
    tb = min(tb, T)
    n_chunks = -(-T // tb)          # cdiv
    t_pad = n_chunks * tb

    kernel = _make_flow_kernel(nb, D, H, T, tb, n_sub, order)

    # Advisory cost hint for XLA scheduling around the custom call.
    flops = 2 * T * n_sub * 4 * (N * D * H + N * H * f_out)
    transcendentals = T * n_sub * 4 * N * H
    bytes_accessed = 4 * (T + N * D + D * H + H + H * f_out + f_out + t_pad * N * D)

    out_flat = pl.pallas_call(
        kernel,
        out_shape=jax.ShapeDtypeStruct((t_pad, N * D), z0.dtype),
        grid_spec=pltpu.PrefetchScalarGridSpec(
            num_scalar_prefetch=1,
            grid=(n_tiles, n_chunks),
            in_specs=[
                pl.BlockSpec((nb, D), lambda n, i, ts_s: (n, 0)),       # z0 tile
                pl.BlockSpec((D, H), lambda n, i, ts_s: (0, 0)),        # W1
                pl.BlockSpec((1, H), lambda n, i, ts_s: (0, 0)),        # b1
                pl.BlockSpec((H, f_out), lambda n, i, ts_s: (0, 0)),    # W2
                pl.BlockSpec((1, f_out), lambda n, i, ts_s: (0, 0)),    # b2
            ],
            out_specs=pl.BlockSpec((tb, nb * D), lambda n, i, ts_s: (i, n)),
            scratch_shapes=[
                pltpu.VMEM((nb, D), jnp.float32),        # carried ODE state
                pltpu.VMEM((tb, nb, D), jnp.float32),    # per-chunk trajectory
            ],
        ),
        compiler_params=pltpu.CompilerParams(
            dimension_semantics=("parallel", "arbitrary")),
        cost_estimate=pl.CostEstimate(
            flops=flops, transcendentals=transcendentals,
            bytes_accessed=bytes_accessed),
    )(ts, z0, w1, b1, w2, b2)

    # (T, N*D) -> (T, N, D) -> permute([1, 0, 2]) -> (N, T, D)
    zt = out_flat[:T].reshape(T, N, D)
    return jnp.transpose(zt, (1, 0, 2))


def flow_forward_ref(z0, ts, w1, b1, w2, b2, order=2, n_sub=N_SUB):
    """Pure-JAX reference with the original ODEfunc slice/concat semantics."""
    q = z0.shape[1] // 2

    def diffeq(z):
        return jnp.tanh(z @ w1 + b1) @ w2 + b2

    def odefunc(z):
        if order == 1:
            return diffeq(z)
        return jnp.concatenate([z[:, q:], diffeq(z)], axis=1)

    def rk4_interval(z, t0, t1):
        dt = (t1 - t0) / n_sub
        for _ in range(n_sub):
            k1 = odefunc(z)
            k2 = odefunc(z + 0.5 * dt * k1)
            k3 = odefunc(z + 0.5 * dt * k2)
            k4 = odefunc(z + dt * k3)
            z = z + (dt / 6.0) * (k1 + 2.0 * k2 + 2.0 * k3 + k4)
        return z

    outs = [z0]
    z = z0
    for i in range(1, ts.shape[0]):
        z = rk4_interval(z, ts[i - 1], ts[i])
        outs.append(z)
    return jnp.transpose(jnp.stack(outs, axis=0), (1, 0, 2))


if __name__ == "__main__":
    # Small shapes consistent with ODEfunc: sv (N, 2q), ts (T,)
    N, q, H, T = 8, 16, 32, 8
    D = 2 * q

    key = jax.random.PRNGKey(0)
    k_z, k_w1, k_b1, k_w2, k_b2, k_w2f, k_b2f = jax.random.split(key, 7)

    z0 = jax.random.normal(k_z, (N, D), jnp.float32)
    ts = jnp.linspace(0.0, 1.0, T, dtype=jnp.float32)

    # Deterministic synthetic diffeq parameters.
    w1 = 0.3 * jax.random.normal(k_w1, (D, H), jnp.float32)
    b1 = 0.1 * jax.random.normal(k_b1, (1, H), jnp.float32)
    # order=2: diffeq maps R^{2q} -> R^q (acceleration)
    w2 = 0.3 * jax.random.normal(k_w2, (H, q), jnp.float32)
    b2 = 0.1 * jax.random.normal(k_b2, (1, q), jnp.float32)
    # order=1: diffeq maps R^D -> R^D
    w2f = 0.3 * jax.random.normal(k_w2f, (H, D), jnp.float32)
    b2f = 0.1 * jax.random.normal(k_b2f, (1, D), jnp.float32)

    # Second-order ODEfunc path.
    zt2 = jax.block_until_ready(flow_forward(z0, ts, w1, b1, w2, b2, order=2))
    zt2_ref = jax.block_until_ready(flow_forward_ref(z0, ts, w1, b1, w2, b2, order=2))
    assert zt2.shape == (N, T, D), zt2.shape
    assert jnp.allclose(zt2, zt2_ref, rtol=1e-4, atol=1e-4), \
        float(jnp.max(jnp.abs(zt2 - zt2_ref)))

    # First-order ODEfunc path.
    zt1 = jax.block_until_ready(flow_forward(z0, ts, w1, b1, w2f, b2f, order=1))
    zt1_ref = jax.block_until_ready(flow_forward_ref(z0, ts, w1, b1, w2f, b2f, order=1))
    assert zt1.shape == (N, T, D), zt1.shape
    assert jnp.allclose(zt1, zt1_ref, rtol=1e-4, atol=1e-4), \
        float(jnp.max(jnp.abs(zt1 - zt1_ref)))

    print("KERNEL_OK")
</pallas_src>

<mosaic_0001>
module attributes {stable_mosaic.version = 11 : i64} {
  func.func @kernel(%arg0: i32, %arg1: i32, %arg2: memref<8xf32, #tpu.memory_space<smem>>, %arg3: memref<8x32xf32, #tpu.memory_space<vmem>>, %arg4: memref<32x32xf32, #tpu.memory_space<vmem>>, %arg5: memref<1x32xf32, #tpu.memory_space<vmem>>, %arg6: memref<32x16xf32, #tpu.memory_space<vmem>>, %arg7: memref<1x16xf32, #tpu.memory_space<vmem>>, %arg8: memref<8x256xf32, #tpu.memory_space<vmem>>, %arg9: memref<8x32xf32, #tpu.memory_space<vmem>>, %arg10: memref<8x8x32xf32, #tpu.memory_space<vmem>>) attributes {dimension_semantics = [#tpu.dimension_semantics<parallel>, #tpu.dimension_semantics<arbitrary>], iteration_bounds = array<i64: 1, 1>, scalar_prefetch = 1 : i64, scratch_operands = 2 : i64, tpu.core_type = #tpu.core_type<tc>, window_params = [{transform_indices = @transform_0, window_bounds = array<i64: 8, 32>}, {pipeline_mode = #tpu.pipeline_mode<synchronous>, transform_indices = @transform_1, window_bounds = array<i64: 32, 32>}, {pipeline_mode = #tpu.pipeline_mode<synchronous>, transform_indices = @transform_2, window_bounds = array<i64: 1, 32>}, {pipeline_mode = #tpu.pipeline_mode<synchronous>, transform_indices = @transform_3, window_bounds = array<i64: 32, 16>}, {pipeline_mode = #tpu.pipeline_mode<synchronous>, transform_indices = @transform_4, window_bounds = array<i64: 1, 16>}, {transform_indices = @transform_5, window_bounds = array<i64: 8, 256>}]} {
    %c8_i32 = arith.constant 8 : i32
    %0 = arith.muli %arg1, %c8_i32 : i32
    %c0 = arith.constant 0 : index
    %c0_0 = arith.constant 0 : index
    %1 = vector.load %arg4[%c0, %c0_0] : memref<32x32xf32, #tpu.memory_space<vmem>>, vector<32x32xf32>
    %c0_1 = arith.constant 0 : index
    %c0_2 = arith.constant 0 : index
    %2 = vector.load %arg6[%c0_1, %c0_2] : memref<32x16xf32, #tpu.memory_space<vmem>>, vector<32x16xf32>
    %c0_3 = arith.constant 0 : index
    %c0_4 = arith.constant 0 : index
    %3 = vector.load %arg5[%c0_3, %c0_4] : memref<1x32xf32, #tpu.memory_space<vmem>>, vector<1x32xf32>
    %4 = vector.shape_cast %3 : vector<1x32xf32> to vector<1x32xf32>
    %5 = vector.broadcast %4 : vector<1x32xf32> to vector<8x32xf32>
    %c0_5 = arith.constant 0 : index
    %c0_6 = arith.constant 0 : index
    %6 = vector.load %arg7[%c0_5, %c0_6] : memref<1x16xf32, #tpu.memory_space<vmem>>, vector<1x16xf32>
    %7 = vector.shape_cast %6 : vector<1x16xf32> to vector<1x16xf32>
    %8 = vector.broadcast %7 : vector<1x16xf32> to vector<8x16xf32>
    %c0_i32 = arith.constant 0 : i32
    %9 = arith.cmpi eq, %arg1, %c0_i32 : i32
    %10 = arith.extui %9 : i1 to i32
    %c0_i32_7 = arith.constant 0 : i32
    %11 = arith.cmpi ne, %10, %c0_i32_7 : i32
    scf.if %11 {
      %c0_16 = arith.constant 0 : index
      %c0_17 = arith.constant 0 : index
      %16 = vector.load %arg3[%c0_16, %c0_17] : memref<8x32xf32, #tpu.memory_space<vmem>>, vector<8x32xf32>
      %c0_18 = arith.constant 0 : index
      %c0_19 = arith.constant 0 : index
      %17 = vector.load %arg9[%c0_18, %c0_19] : memref<8x32xf32, #tpu.memory_space<vmem>>, vector<8x32xf32>
      tpu.vector_store %arg9[%c0_18, %c0_19], %16 {strides = array<i32>} : memref<8x32xf32, #tpu.memory_space<vmem>>, vector<8x32xf32>,
    } else {
    }
    %c0_i32_8 = arith.constant 0 : i32
    %c8_i32_9 = arith.constant 8 : i32
    %12 = arith.addi %c0_i32_8, %c8_i32_9 : i32
    %c1_i32 = arith.constant 1 : i32
    scf.for %arg11 = %c0_i32_8 to %12 step %c1_i32  : i32 {
      %16 = arith.addi %0, %arg11 : i32
      %c0_i32_16 = arith.constant 0 : i32
      %17 = arith.cmpi sgt, %16, %c0_i32_16 : i32
      %c8_i32_17 = arith.constant 8 : i32
      %18 = arith.cmpi slt, %16, %c8_i32_17 : i32
      %19 = arith.andi %17, %18 : i1
      %20 = arith.extui %19 : i1 to i32
      %c0_i32_18 = arith.constant 0 : i32
      %21 = arith.cmpi ne, %20, %c0_i32_18 : i32
      scf.if %21 {
        %c1_i32_23 = arith.constant 1 : i32
        %27 = arith.subi %16, %c1_i32_23 : i32
        %28 = arith.index_cast %27 : i32 to index
        %29 = memref.load %arg2[%28] : memref<8xf32, #tpu.memory_space<smem>>
        %30 = arith.index_cast %16 : i32 to index
        %31 = memref.load %arg2[%30] : memref<8xf32, #tpu.memory_space<smem>>
        %32 = arith.subf %31, %29 : f32
        %cst = arith.constant 4.000000e+00 : f32
        %33 = arith.divf %32, %cst : f32
        %c0_24 = arith.constant 0 : index
        %c0_25 = arith.constant 0 : index
        %34 = vector.load %arg9[%c0_24, %c0_25] : memref<8x32xf32, #tpu.memory_space<vmem>>, vector<8x32xf32>
        %c0_i32_26 = arith.constant 0 : i32
        %cst_27 = arith.constant dense<0.000000e+00> : vector<8x32xf32>
        %35 = tpu.matmul %34, %1, %cst_27 {dimension_numbers = #tpu.dot_dimension_numbers<[1], [0], [0], [1], [0, 0, 1, 1], [], []>} : vector<8x32xf32>, vector<32x32xf32>, vector<8x32xf32> -> vector<8x32xf32>
        %36 = arith.addf %35, %5 : vector<8x32xf32>
        %37 = math.tanh %36 : vector<8x32xf32>
        %cst_28 = arith.constant dense<0.000000e+00> : vector<8x16xf32>
        %38 = tpu.matmul %37, %2, %cst_28 {dimension_numbers = #tpu.dot_dimension_numbers<[1], [0], [0], [1], [0, 0, 1, 1], [], []>} : vector<8x32xf32>, vector<32x16xf32>, vector<8x16xf32> -> vector<8x16xf32>
        %39 = arith.addf %38, %8 : vector<8x16xf32>
        %40 = vector.extract_strided_slice %34 {offsets = [0, 16], sizes = [8, 16], strides = [1, 1]} : vector<8x32xf32> to vector<8x16xf32>
        %41 = tpu.concatenate %40, %39 in 1 : vector<8x16xf32>, vector<8x16xf32> -> vector<8x32xf32>
        %cst_29 = arith.constant 5.000000e-01 : f32
        %42 = arith.mulf %cst_29, %33 : f32
        %43 = vector.broadcast %42 : f32 to vector<8x32xf32>
        %44 = arith.mulf %43, %41 : vector<8x32xf32>
        %45 = arith.addf %34, %44 : vector<8x32xf32>
        %cst_30 = arith.constant dense<0.000000e+00> : vector<8x32xf32>
        %46 = tpu.matmul %45, %1, %cst_30 {dimension_numbers = #tpu.dot_dimension_numbers<[1], [0], [0], [1], [0, 0, 1, 1], [], []>} : vector<8x32xf32>, vector<32x32xf32>, vector<8x32xf32> -> vector<8x32xf32>
        %47 = arith.addf %46, %5 : vector<8x32xf32>
        %48 = math.tanh %47 : vector<8x32xf32>
        %cst_31 = arith.constant dense<0.000000e+00> : vector<8x16xf32>
        %49 = tpu.matmul %48, %2, %cst_31 {dimension_numbers = #tpu.dot_dimension_numbers<[1], [0], [0], [1], [0, 0, 1, 1], [], []>} : vector<8x32xf32>, vector<32x16xf32>, vector<8x16xf32> -> vector<8x16xf32>
        %50 = arith.addf %49, %8 : vector<8x16xf32>
        %51 = vector.extract_strided_slice %45 {offsets = [0, 16], sizes = [8, 16], strides = [1, 1]} : vector<8x32xf32> to vector<8x16xf32>
        %52 = tpu.concatenate %51, %50 in 1 : vector<8x16xf32>, vector<8x16xf32> -> vector<8x32xf32>
        %cst_32 = arith.constant 5.000000e-01 : f32
        %53 = arith.mulf %cst_32, %33 : f32
        %54 = vector.broadcast %53 : f32 to vector<8x32xf32>
        %55 = arith.mulf %54, %52 : vector<8x32xf32>
        %56 = arith.addf %34, %55 : vector<8x32xf32>
        %cst_33 = arith.constant dense<0.000000e+00> : vector<8x32xf32>
        %57 = tpu.matmul %56, %1, %cst_33 {dimension_numbers = #tpu.dot_dimension_numbers<[1], [0], [0], [1], [0, 0, 1, 1], [], []>} : vector<8x32xf32>, vector<32x32xf32>, vector<8x32xf32> -> vector<8x32xf32>
        %58 = arith.addf %57, %5 : vector<8x32xf32>
        %59 = math.tanh %58 : vector<8x32xf32>
        %cst_34 = arith.constant dense<0.000000e+00> : vector<8x16xf32>
        %60 = tpu.matmul %59, %2, %cst_34 {dimension_numbers = #tpu.dot_dimension_numbers<[1], [0], [0], [1], [0, 0, 1, 1], [], []>} : vector<8x32xf32>, vector<32x16xf32>, vector<8x16xf32> -> vector<8x16xf32>
        %61 = arith.addf %60, %8 : vector<8x16xf32>
        %62 = vector.extract_strided_slice %56 {offsets = [0, 16], sizes = [8, 16], strides = [1, 1]} : vector<8x32xf32> to vector<8x16xf32>
        %63 = tpu.concatenate %62, %61 in 1 : vector<8x16xf32>, vector<8x16xf32> -> vector<8x32xf32>
        %64 = vector.broadcast %33 : f32 to vector<8x32xf32>
        %65 = arith.mulf %64, %63 : vector<8x32xf32>
        %66 = arith.addf %34, %65 : vector<8x32xf32>
        %cst_35 = arith.constant dense<0.000000e+00> : vector<8x32xf32>
        %67 = tpu.matmul %66, %1, %cst_35 {dimension_numbers = #tpu.dot_dimension_numbers<[1], [0], [0], [1], [0, 0, 1, 1], [], []>} : vector<8x32xf32>, vector<32x32xf32>, vector<8x32xf32> -> vector<8x32xf32>
        %68 = arith.addf %67, %5 : vector<8x32xf32>
        %69 = math.tanh %68 : vector<8x32xf32>
        %cst_36 = arith.constant dense<0.000000e+00> : vector<8x16xf32>
        %70 = tpu.matmul %69, %2, %cst_36 {dimension_numbers = #tpu.dot_dimension_numbers<[1], [0], [0], [1], [0, 0, 1, 1], [], []>} : vector<8x32xf32>, vector<32x16xf32>, vector<8x16xf32> -> vector<8x16xf32>
        %71 = arith.addf %70, %8 : vector<8x16xf32>
        %72 = vector.extract_strided_slice %66 {offsets = [0, 16], sizes = [8, 16], strides = [1, 1]} : vector<8x32xf32> to vector<8x16xf32>
        %73 = tpu.concatenate %72, %71 in 1 : vector<8x16xf32>, vector<8x16xf32> -> vector<8x32xf32>
        %cst_37 = arith.constant 6.000000e+00 : f32
        %74 = arith.divf %33, %cst_37 : f32
        %cst_38 = arith.constant 2.000000e+00 : f32
        %75 = vector.broadcast %cst_38 : f32 to vector<8x32xf32>
        %76 = arith.mulf %75, %52 : vector<8x32xf32>
        %77 = arith.addf %41, %76 : vector<8x32xf32>
        %cst_39 = arith.constant 2.000000e+00 : f32
        %78 = vector.broadcast %cst_39 : f32 to vector<8x32xf32>
        %79 = arith.mulf %78, %63 : vector<8x32xf32>
        %80 = arith.addf %77, %79 : vector<8x32xf32>
        %81 = arith.addf %80, %73 : vector<8x32xf32>
        %82 = vector.broadcast %74 : f32 to vector<8x32xf32>
        %83 = arith.mulf %82, %81 : vector<8x32xf32>
        %84 = arith.addf %34, %83 : vector<8x32xf32>
        %c1_i32_40 = arith.constant 1 : i32
        %cst_41 = arith.constant dense<0.000000e+00> : vector<8x32xf32>
        %85 = tpu.matmul %84, %1, %cst_41 {dimension_numbers = #tpu.dot_dimension_numbers<[1], [0], [0], [1], [0, 0, 1, 1], [], []>} : vector<8x32xf32>, vector<32x32xf32>, vector<8x32xf32> -> vector<8x32xf32>
        %86 = arith.addf %85, %5 : vector<8x32xf32>
        %87 = math.tanh %86 : vector<8x32xf32>
        %cst_42 = arith.constant dense<0.000000e+00> : vector<8x16xf32>
        %88 = tpu.matmul %87, %2, %cst_42 {dimension_numbers = #tpu.dot_dimension_numbers<[1], [0], [0], [1], [0, 0, 1, 1], [], []>} : vector<8x32xf32>, vector<32x16xf32>, vector<8x16xf32> -> vector<8x16xf32>
        %89 = arith.addf %88, %8 : vector<8x16xf32>
        %90 = vector.extract_strided_slice %84 {offsets = [0, 16], sizes = [8, 16], strides = [1, 1]} : vector<8x32xf32> to vector<8x16xf32>
        %91 = tpu.concatenate %90, %89 in 1 : vector<8x16xf32>, vector<8x16xf32> -> vector<8x32xf32>
        %cst_43 = arith.constant 5.000000e-01 : f32
        %92 = arith.mulf %cst_43, %33 : f32
        %93 = vector.broadcast %92 : f32 to vector<8x32xf32>
        %94 = arith.mulf %93, %91 : vector<8x32xf32>
        %95 = arith.addf %84, %94 : vector<8x32xf32>
        %cst_44 = arith.constant dense<0.000000e+00> : vector<8x32xf32>
        %96 = tpu.matmul %95, %1, %cst_44 {dimension_numbers = #tpu.dot_dimension_numbers<[1], [0], [0], [1], [0, 0, 1, 1], [], []>} : vector<8x32xf32>, vector<32x32xf32>, vector<8x32xf32> -> vector<8x32xf32>
        %97 = arith.addf %96, %5 : vector<8x32xf32>
        %98 = math.tanh %97 : vector<8x32xf32>
        %cst_45 = arith.constant dense<0.000000e+00> : vector<8x16xf32>
        %99 = tpu.matmul %98, %2, %cst_45 {dimension_numbers = #tpu.dot_dimension_numbers<[1], [0], [0], [1], [0, 0, 1, 1], [], []>} : vector<8x32xf32>, vector<32x16xf32>, vector<8x16xf32> -> vector<8x16xf32>
        %100 = arith.addf %99, %8 : vector<8x16xf32>
        %101 = vector.extract_strided_slice %95 {offsets = [0, 16], sizes = [8, 16], strides = [1, 1]} : vector<8x32xf32> to vector<8x16xf32>
        %102 = tpu.concatenate %101, %100 in 1 : vector<8x16xf32>, vector<8x16xf32> -> vector<8x32xf32>
        %cst_46 = arith.constant 5.000000e-01 : f32
        %103 = arith.mulf %cst_46, %33 : f32
        %104 = vector.broadcast %103 : f32 to vector<8x32xf32>
        %105 = arith.mulf %104, %102 : vector<8x32xf32>
        %106 = arith.addf %84, %105 : vector<8x32xf32>
        %cst_47 = arith.constant dense<0.000000e+00> : vector<8x32xf32>
        %107 = tpu.matmul %106, %1, %cst_47 {dimension_numbers = #tpu.dot_dimension_numbers<[1], [0], [0], [1], [0, 0, 1, 1], [], []>} : vector<8x32xf32>, vector<32x32xf32>, vector<8x32xf32> -> vector<8x32xf32>
        %108 = arith.addf %107, %5 : vector<8x32xf32>
        %109 = math.tanh %108 : vector<8x32xf32>
        %cst_48 = arith.constant dense<0.000000e+00> : vector<8x16xf32>
        %110 = tpu.matmul %109, %2, %cst_48 {dimension_numbers = #tpu.dot_dimension_numbers<[1], [0], [0], [1], [0, 0, 1, 1], [], []>} : vector<8x32xf32>, vector<32x16xf32>, vector<8x16xf32> -> vector<8x16xf32>
        %111 = arith.addf %110, %8 : vector<8x16xf32>
        %112 = vector.extract_strided_slice %106 {offsets = [0, 16], sizes = [8, 16], strides = [1, 1]} : vector<8x32xf32> to vector<8x16xf32>
        %113 = tpu.concatenate %112, %111 in 1 : vector<8x16xf32>, vector<8x16xf32> -> vector<8x32xf32>
        %114 = vector.broadcast %33 : f32 to vector<8x32xf32>
        %115 = arith.mulf %114, %113 : vector<8x32xf32>
        %116 = arith.addf %84, %115 : vector<8x32xf32>
        %cst_49 = arith.constant dense<0.000000e+00> : vector<8x32xf32>
        %117 = tpu.matmul %116, %1, %cst_49 {dimension_numbers = #tpu.dot_dimension_numbers<[1], [0], [0], [1], [0, 0, 1, 1], [], []>} : vector<8x32xf32>, vector<32x32xf32>, vector<8x32xf32> -> vector<8x32xf32>
        %118 = arith.addf %117, %5 : vector<8x32xf32>
        %119 = math.tanh %118 : vector<8x32xf32>
        %cst_50 = arith.constant dense<0.000000e+00> : vector<8x16xf32>
        %120 = tpu.matmul %119, %2, %cst_50 {dimension_numbers = #tpu.dot_dimension_numbers<[1], [0], [0], [1], [0, 0, 1, 1], [], []>} : vector<8x32xf32>, vector<32x16xf32>, vector<8x16xf32> -> vector<8x16xf32>
        %121 = arith.addf %120, %8 : vector<8x16xf32>
        %122 = vector.extract_strided_slice %116 {offsets = [0, 16], sizes = [8, 16], strides = [1, 1]} : vector<8x32xf32> to vector<8x16xf32>
        %123 = tpu.concatenate %122, %121 in 1 : vector<8x16xf32>, vector<8x16xf32> -> vector<8x32xf32>
        %cst_51 = arith.constant 6.000000e+00 : f32
        %124 = arith.divf %33, %cst_51 : f32
        %cst_52 = arith.constant 2.000000e+00 : f32
        %125 = vector.broadcast %cst_52 : f32 to vector<8x32xf32>
        %126 = arith.mulf %125, %102 : vector<8x32xf32>
        %127 = arith.addf %91, %126 : vector<8x32xf32>
        %cst_53 = arith.constant 2.000000e+00 : f32
        %128 = vector.broadcast %cst_53 : f32 to vector<8x32xf32>
        %129 = arith.mulf %128, %113 : vector<8x32xf32>
        %130 = arith.addf %127, %129 : vector<8x32xf32>
        %131 = arith.addf %130, %123 : vector<8x32xf32>
        %132 = vector.broadcast %124 : f32 to vector<8x32xf32>
        %133 = arith.mulf %132, %131 : vector<8x32xf32>
        %134 = arith.addf %84, %133 : vector<8x32xf32>
        %c2_i32 = arith.constant 2 : i32
        %cst_54 = arith.constant dense<0.000000e+00> : vector<8x32xf32>
        %135 = tpu.matmul %134, %1, %cst_54 {dimension_numbers = #tpu.dot_dimension_numbers<[1], [0], [0], [1], [0, 0, 1, 1], [], []>} : vector<8x32xf32>, vector<32x32xf32>, vector<8x32xf32> -> vector<8x32xf32>
        %136 = arith.addf %135, %5 : vector<8x32xf32>
        %137 = math.tanh %136 : vector<8x32xf32>
        %cst_55 = arith.constant dense<0.000000e+00> : vector<8x16xf32>
        %138 = tpu.matmul %137, %2, %cst_55 {dimension_numbers = #tpu.dot_dimension_numbers<[1], [0], [0], [1], [0, 0, 1, 1], [], []>} : vector<8x32xf32>, vector<32x16xf32>, vector<8x16xf32> -> vector<8x16xf32>
        %139 = arith.addf %138, %8 : vector<8x16xf32>
        %140 = vector.extract_strided_slice %134 {offsets = [0, 16], sizes = [8, 16], strides = [1, 1]} : vector<8x32xf32> to vector<8x16xf32>
        %141 = tpu.concatenate %140, %139 in 1 : vector<8x16xf32>, vector<8x16xf32> -> vector<8x32xf32>
        %cst_56 = arith.constant 5.000000e-01 : f32
        %142 = arith.mulf %cst_56, %33 : f32
        %143 = vector.broadcast %142 : f32 to vector<8x32xf32>
        %144 = arith.mulf %143, %141 : vector<8x32xf32>
        %145 = arith.addf %134, %144 : vector<8x32xf32>
        %cst_57 = arith.constant dense<0.000000e+00> : vector<8x32xf32>
        %146 = tpu.matmul %145, %1, %cst_57 {dimension_numbers = #tpu.dot_dimension_numbers<[1], [0], [0], [1], [0, 0, 1, 1], [], []>} : vector<8x32xf32>, vector<32x32xf32>, vector<8x32xf32> -> vector<8x32xf32>
        %147 = arith.addf %146, %5 : vector<8x32xf32>
        %148 = math.tanh %147 : vector<8x32xf32>
        %cst_58 = arith.constant dense<0.000000e+00> : vector<8x16xf32>
        %149 = tpu.matmul %148, %2, %cst_58 {dimension_numbers = #tpu.dot_dimension_numbers<[1], [0], [0], [1], [0, 0, 1, 1], [], []>} : vector<8x32xf32>, vector<32x16xf32>, vector<8x16xf32> -> vector<8x16xf32>
        %150 = arith.addf %149, %8 : vector<8x16xf32>
        %151 = vector.extract_strided_slice %145 {offsets = [0, 16], sizes = [8, 16], strides = [1, 1]} : vector<8x32xf32> to vector<8x16xf32>
        %152 = tpu.concatenate %151, %150 in 1 : vector<8x16xf32>, vector<8x16xf32> -> vector<8x32xf32>
        %cst_59 = arith.constant 5.000000e-01 : f32
        %153 = arith.mulf %cst_59, %33 : f32
        %154 = vector.broadcast %153 : f32 to vector<8x32xf32>
        %155 = arith.mulf %154, %152 : vector<8x32xf32>
        %156 = arith.addf %134, %155 : vector<8x32xf32>
        %cst_60 = arith.constant dense<0.000000e+00> : vector<8x32xf32>
        %157 = tpu.matmul %156, %1, %cst_60 {dimension_numbers = #tpu.dot_dimension_numbers<[1], [0], [0], [1], [0, 0, 1, 1], [], []>} : vector<8x32xf32>, vector<32x32xf32>, vector<8x32xf32> -> vector<8x32xf32>
        %158 = arith.addf %157, %5 : vector<8x32xf32>
        %159 = math.tanh %158 : vector<8x32xf32>
        %cst_61 = arith.constant dense<0.000000e+00> : vector<8x16xf32>
        %160 = tpu.matmul %159, %2, %cst_61 {dimension_numbers = #tpu.dot_dimension_numbers<[1], [0], [0], [1], [0, 0, 1, 1], [], []>} : vector<8x32xf32>, vector<32x16xf32>, vector<8x16xf32> -> vector<8x16xf32>
        %161 = arith.addf %160, %8 : vector<8x16xf32>
        %162 = vector.extract_strided_slice %156 {offsets = [0, 16], sizes = [8, 16], strides = [1, 1]} : vector<8x32xf32> to vector<8x16xf32>
        %163 = tpu.concatenate %162, %161 in 1 : vector<8x16xf32>, vector<8x16xf32> -> vector<8x32xf32>
        %164 = vector.broadcast %33 : f32 to vector<8x32xf32>
        %165 = arith.mulf %164, %163 : vector<8x32xf32>
        %166 = arith.addf %134, %165 : vector<8x32xf32>
        %cst_62 = arith.constant dense<0.000000e+00> : vector<8x32xf32>
        %167 = tpu.matmul %166, %1, %cst_62 {dimension_numbers = #tpu.dot_dimension_numbers<[1], [0], [0], [1], [0, 0, 1, 1], [], []>} : vector<8x32xf32>, vector<32x32xf32>, vector<8x32xf32> -> vector<8x32xf32>
        %168 = arith.addf %167, %5 : vector<8x32xf32>
        %169 = math.tanh %168 : vector<8x32xf32>
        %cst_63 = arith.constant dense<0.000000e+00> : vector<8x16xf32>
        %170 = tpu.matmul %169, %2, %cst_63 {dimension_numbers = #tpu.dot_dimension_numbers<[1], [0], [0], [1], [0, 0, 1, 1], [], []>} : vector<8x32xf32>, vector<32x16xf32>, vector<8x16xf32> -> vector<8x16xf32>
        %171 = arith.addf %170, %8 : vector<8x16xf32>
        %172 = vector.extract_strided_slice %166 {offsets = [0, 16], sizes = [8, 16], strides = [1, 1]} : vector<8x32xf32> to vector<8x16xf32>
        %173 = tpu.concatenate %172, %171 in 1 : vector<8x16xf32>, vector<8x16xf32> -> vector<8x32xf32>
        %cst_64 = arith.constant 6.000000e+00 : f32
        %174 = arith.divf %33, %cst_64 : f32
        %cst_65 = arith.constant 2.000000e+00 : f32
        %175 = vector.broadcast %cst_65 : f32 to vector<8x32xf32>
        %176 = arith.mulf %175, %152 : vector<8x32xf32>
        %177 = arith.addf %141, %176 : vector<8x32xf32>
        %cst_66 = arith.constant 2.000000e+00 : f32
        %178 = vector.broadcast %cst_66 : f32 to vector<8x32xf32>
        %179 = arith.mulf %178, %163 : vector<8x32xf32>
        %180 = arith.addf %177, %179 : vector<8x32xf32>
        %181 = arith.addf %180, %173 : vector<8x32xf32>
        %182 = vector.broadcast %174 : f32 to vector<8x32xf32>
        %183 = arith.mulf %182, %181 : vector<8x32xf32>
        %184 = arith.addf %134, %183 : vector<8x32xf32>
        %c3_i32 = arith.constant 3 : i32
        %cst_67 = arith.constant dense<0.000000e+00> : vector<8x32xf32>
        %185 = tpu.matmul %184, %1, %cst_67 {dimension_numbers = #tpu.dot_dimension_numbers<[1], [0], [0], [1], [0, 0, 1, 1], [], []>} : vector<8x32xf32>, vector<32x32xf32>, vector<8x32xf32> -> vector<8x32xf32>
        %186 = arith.addf %185, %5 : vector<8x32xf32>
        %187 = math.tanh %186 : vector<8x32xf32>
        %cst_68 = arith.constant dense<0.000000e+00> : vector<8x16xf32>
        %188 = tpu.matmul %187, %2, %cst_68 {dimension_numbers = #tpu.dot_dimension_numbers<[1], [0], [0], [1], [0, 0, 1, 1], [], []>} : vector<8x32xf32>, vector<32x16xf32>, vector<8x16xf32> -> vector<8x16xf32>
        %189 = arith.addf %188, %8 : vector<8x16xf32>
        %190 = vector.extract_strided_slice %184 {offsets = [0, 16], sizes = [8, 16], strides = [1, 1]} : vector<8x32xf32> to vector<8x16xf32>
        %191 = tpu.concatenate %190, %189 in 1 : vector<8x16xf32>, vector<8x16xf32> -> vector<8x32xf32>
        %cst_69 = arith.constant 5.000000e-01 : f32
        %192 = arith.mulf %cst_69, %33 : f32
        %193 = vector.broadcast %192 : f32 to vector<8x32xf32>
        %194 = arith.mulf %193, %191 : vector<8x32xf32>
        %195 = arith.addf %184, %194 : vector<8x32xf32>
        %cst_70 = arith.constant dense<0.000000e+00> : vector<8x32xf32>
        %196 = tpu.matmul %195, %1, %cst_70 {dimension_numbers = #tpu.dot_dimension_numbers<[1], [0], [0], [1], [0, 0, 1, 1], [], []>} : vector<8x32xf32>, vector<32x32xf32>, vector<8x32xf32> -> vector<8x32xf32>
        %197 = arith.addf %196, %5 : vector<8x32xf32>
        %198 = math.tanh %197 : vector<8x32xf32>
        %cst_71 = arith.constant dense<0.000000e+00> : vector<8x16xf32>
        %199 = tpu.matmul %198, %2, %cst_71 {dimension_numbers = #tpu.dot_dimension_numbers<[1], [0], [0], [1], [0, 0, 1, 1], [], []>} : vector<8x32xf32>, vector<32x16xf32>, vector<8x16xf32> -> vector<8x16xf32>
        %200 = arith.addf %199, %8 : vector<8x16xf32>
        %201 = vector.extract_strided_slice %195 {offsets = [0, 16], sizes = [8, 16], strides = [1, 1]} : vector<8x32xf32> to vector<8x16xf32>
        %202 = tpu.concatenate %201, %200 in 1 : vector<8x16xf32>, vector<8x16xf32> -> vector<8x32xf32>
        %cst_72 = arith.constant 5.000000e-01 : f32
        %203 = arith.mulf %cst_72, %33 : f32
        %204 = vector.broadcast %203 : f32 to vector<8x32xf32>
        %205 = arith.mulf %204, %202 : vector<8x32xf32>
        %206 = arith.addf %184, %205 : vector<8x32xf32>
        %cst_73 = arith.constant dense<0.000000e+00> : vector<8x32xf32>
        %207 = tpu.matmul %206, %1, %cst_73 {dimension_numbers = #tpu.dot_dimension_numbers<[1], [0], [0], [1], [0, 0, 1, 1], [], []>} : vector<8x32xf32>, vector<32x32xf32>, vector<8x32xf32> -> vector<8x32xf32>
        %208 = arith.addf %207, %5 : vector<8x32xf32>
        %209 = math.tanh %208 : vector<8x32xf32>
        %cst_74 = arith.constant dense<0.000000e+00> : vector<8x16xf32>
        %210 = tpu.matmul %209, %2, %cst_74 {dimension_numbers = #tpu.dot_dimension_numbers<[1], [0], [0], [1], [0, 0, 1, 1], [], []>} : vector<8x32xf32>, vector<32x16xf32>, vector<8x16xf32> -> vector<8x16xf32>
        %211 = arith.addf %210, %8 : vector<8x16xf32>
        %212 = vector.extract_strided_slice %206 {offsets = [0, 16], sizes = [8, 16], strides = [1, 1]} : vector<8x32xf32> to vector<8x16xf32>
        %213 = tpu.concatenate %212, %211 in 1 : vector<8x16xf32>, vector<8x16xf32> -> vector<8x32xf32>
        %214 = vector.broadcast %33 : f32 to vector<8x32xf32>
        %215 = arith.mulf %214, %213 : vector<8x32xf32>
        %216 = arith.addf %184, %215 : vector<8x32xf32>
        %cst_75 = arith.constant dense<0.000000e+00> : vector<8x32xf32>
        %217 = tpu.matmul %216, %1, %cst_75 {dimension_numbers = #tpu.dot_dimension_numbers<[1], [0], [0], [1], [0, 0, 1, 1], [], []>} : vector<8x32xf32>, vector<32x32xf32>, vector<8x32xf32> -> vector<8x32xf32>
        %218 = arith.addf %217, %5 : vector<8x32xf32>
        %219 = math.tanh %218 : vector<8x32xf32>
        %cst_76 = arith.constant dense<0.000000e+00> : vector<8x16xf32>
        %220 = tpu.matmul %219, %2, %cst_76 {dimension_numbers = #tpu.dot_dimension_numbers<[1], [0], [0], [1], [0, 0, 1, 1], [], []>} : vector<8x32xf32>, vector<32x16xf32>, vector<8x16xf32> -> vector<8x16xf32>
        %221 = arith.addf %220, %8 : vector<8x16xf32>
        %222 = vector.extract_strided_slice %216 {offsets = [0, 16], sizes = [8, 16], strides = [1, 1]} : vector<8x32xf32> to vector<8x16xf32>
        %223 = tpu.concatenate %222, %221 in 1 : vector<8x16xf32>, vector<8x16xf32> -> vector<8x32xf32>
        %cst_77 = arith.constant 6.000000e+00 : f32
        %224 = arith.divf %33, %cst_77 : f32
        %cst_78 = arith.constant 2.000000e+00 : f32
        %225 = vector.broadcast %cst_78 : f32 to vector<8x32xf32>
        %226 = arith.mulf %225, %202 : vector<8x32xf32>
        %227 = arith.addf %191, %226 : vector<8x32xf32>
        %cst_79 = arith.constant 2.000000e+00 : f32
        %228 = vector.broadcast %cst_79 : f32 to vector<8x32xf32>
        %229 = arith.mulf %228, %213 : vector<8x32xf32>
        %230 = arith.addf %227, %229 : vector<8x32xf32>
        %231 = arith.addf %230, %223 : vector<8x32xf32>
        %232 = vector.broadcast %224 : f32 to vector<8x32xf32>
        %233 = arith.mulf %232, %231 : vector<8x32xf32>
        %234 = arith.addf %184, %233 : vector<8x32xf32>
        %c0_80 = arith.constant 0 : index
        %c0_81 = arith.constant 0 : index
        %235 = vector.load %arg9[%c0_80, %c0_81] : memref<8x32xf32, #tpu.memory_space<vmem>>, vector<8x32xf32>
        tpu.vector_store %arg9[%c0_80, %c0_81], %234 {strides = array<i32>} : memref<8x32xf32, #tpu.memory_space<vmem>>, vector<8x32xf32>,
      } else {
      }
      %c0_19 = arith.constant 0 : index
      %c0_20 = arith.constant 0 : index
      %22 = vector.load %arg9[%c0_19, %c0_20] : memref<8x32xf32, #tpu.memory_space<vmem>>, vector<8x32xf32>
      %23 = arith.index_cast %arg11 : i32 to index
      %c0_21 = arith.constant 0 : index
      %c0_22 = arith.constant 0 : index
      %24 = vector.load %arg10[%23, %c0_21, %c0_22] : memref<8x8x32xf32, #tpu.memory_space<vmem>>, vector<1x8x32xf32>
      %25 = vector.shape_cast %24 : vector<1x8x32xf32> to vector<8x32xf32>
      %26 = vector.shape_cast %22 : vector<8x32xf32> to vector<1x8x32xf32>
      tpu.vector_store %arg10[%23, %c0_21, %c0_22], %26 {strides = array<i32>} : memref<8x8x32xf32, #tpu.memory_space<vmem>>, vector<1x8x32xf32>,
    }
    %c8_i32_10 = arith.constant 8 : i32
    %c0_11 = arith.constant 0 : index
    %c0_12 = arith.constant 0 : index
    %c0_13 = arith.constant 0 : index
    %13 = vector.load %arg10[%c0_11, %c0_12, %c0_13] : memref<8x8x32xf32, #tpu.memory_space<vmem>>, vector<8x8x32xf32>
    %14 = vector.shape_cast %13 : vector<8x8x32xf32> to vector<8x256xf32>
    %c0_14 = arith.constant 0 : index
    %c0_15 = arith.constant 0 : index
    %15 = vector.load %arg8[%c0_14, %c0_15] : memref<8x256xf32, #tpu.memory_space<vmem>>, vector<8x256xf32>
    tpu.vector_store %arg8[%c0_14, %c0_15], %14 {strides = array<i32>} : memref<8x256xf32, #tpu.memory_space<vmem>>, vector<8x256xf32>,
    return
  }
  func.func @transform_0(%arg0: i32, %arg1: i32, %arg2: memref<8xf32, #tpu.memory_space<smem>>) -> (i32, i32) {
    %c0_i32 = arith.constant 0 : i32
    %c0_i32_0 = arith.constant 0 : i32
    return %arg0, %c0_i32 : i32, i32
  }
  func.func @transform_1(%arg0: i32, %arg1: i32, %arg2: memref<8xf32, #tpu.memory_space<smem>>) -> (i32, i32) {
    %c0_i32 = arith.constant 0 : i32
    %c0_i32_0 = arith.constant 0 : i32
    %c0_i32_1 = arith.constant 0 : i32
    return %c0_i32, %c0_i32_0 : i32, i32
  }
  func.func @transform_2(%arg0: i32, %arg1: i32, %arg2: memref<8xf32, #tpu.memory_space<smem>>) -> (i32, i32) {
    %c0_i32 = arith.constant 0 : i32
    %c0_i32_0 = arith.constant 0 : i32
    %c0_i32_1 = arith.constant 0 : i32
    return %c0_i32, %c0_i32_0 : i32, i32
  }
  func.func @transform_3(%arg0: i32, %arg1: i32, %arg2: memref<8xf32, #tpu.memory_space<smem>>) -> (i32, i32) {
    %c0_i32 = arith.constant 0 : i32
    %c0_i32_0 = arith.constant 0 : i32
    %c0_i32_1 = arith.constant 0 : i32
    return %c0_i32, %c0_i32_0 : i32, i32
  }
  func.func @transform_4(%arg0: i32, %arg1: i32, %arg2: memref<8xf32, #tpu.memory_space<smem>>) -> (i32, i32) {
    %c0_i32 = arith.constant 0 : i32
    %c0_i32_0 = arith.constant 0 : i32
    %c0_i32_1 = arith.constant 0 : i32
    return %c0_i32, %c0_i32_0 : i32, i32
  }
  func.func @transform_5(%arg0: i32, %arg1: i32, %arg2: memref<8xf32, #tpu.memory_space<smem>>) -> (i32, i32) {
    %c0_i32 = arith.constant 0 : i32
    return %arg1, %arg0 : i32, i32
  }
}

</mosaic_0001>

<llo_original>
// kernel: tpu_custom_call.1
$region0: #{tpu_custom_call.1}
  #allocation0 [shape = 'u32[]', space=smem, size = 0x4, offset = 0x4, fixed_abs, tag = 'smem constant byte address 0x4 - core index']
  #allocation1 [shape = 'u32[144,128]{1,0:T(1,128)}', space=vmem, size = 0x12000, scoped, tag = 'internal scratch']
  #allocation2 [shape = 'f32[8,32]{1,0:T(8,128)}', space=vmem, size = 0x1000, scoped, tag = 'scratch operand']
  #allocation3 [shape = 'f32[8,8,32]{2,1,0:T(8,128)}', space=vmem, size = 0x8000, scoped, tag = 'scratch operand']
  #allocation4 [shape = 's32[1]{0}', space=sflag, size = 0x4, scoped, tag = 'scoped memory for tpu_custom_call.1']
  #allocation5 [shape = 'u8[512]{0}', space=smem, size = 0x200, scoped, tag = 'prefetched SMEM operand 0']
  %s0 = inlined_call_operand.vmem [shape: f32[8], index: 0, kind: input, shape index: {}]
  %s1 = inlined_call_operand.vmem [shape: f32[8,32], index: 1, kind: input, shape index: {}]
  %s2 = inlined_call_operand.vmem [shape: f32[32,32], index: 2, kind: input, shape index: {}]
  %s3 = inlined_call_operand.vmem [shape: f32[1,32], index: 3, kind: input, shape index: {}]
  %s4 = inlined_call_operand.vmem [shape: f32[32,16], index: 4, kind: input, shape index: {}]
  %s5 = inlined_call_operand.vmem [shape: f32[1,16], index: 5, kind: input, shape index: {}]
  %s6 = inlined_call_operand.hbm [shape: f32[8,256], index: 6, kind: output, shape index: {}]
  %s7 = sld [smem:[#allocation0]]
  $region45: #{tpu_custom_call.1} parent=0
    _
  %s9 = ssub.s32 1, %s7
  %s10 = scalar_select 0, %s9, %s7
  %s11 = sshll.u32 %s0, 4
  %s12 = int_to_ptr.vmem [resolvable:$true] %s11
  %14 = dma.vmem_to_smem %s12, 16, [#allocation5], [#allocation4]
  %15 = dma.done [#allocation4], 16
  %16 = sfence
  $region1: #{tpu_custom_call.1} parent=0
    #allocation6 [shape = 'u8[8192]{0}', space=vmem, size = 0x2000, scoped, tag = 'output window, operand 0, single buffered']
    #allocation7 [shape = 's32[1]{0}', space=sflag, size = 0x4, scoped, tag = 'scoped memory for tpu_custom_call.1']
    %17 = vsyncpa [#allocation7], 0
    // Predicated region
    $region2: #{tpu_custom_call.1} parent=1 // pred_check
      _
    $region3: #{tpu_custom_call.1} parent=1 // pred_check_branch
      %19 = sbr.rel (0) target = $region5
    $region4: #{tpu_custom_call.1} parent=1 // pred_region
      _
    $region5: #{tpu_custom_call.1} parent=1 // pred_fallthru
      _
    // Predicated region
    $region6: #{tpu_custom_call.1} parent=1 // pred_check
      _
    $region7: #{tpu_custom_call.1} parent=1 // pred_check_branch
      %21 = sbr.rel (0) target = $region9
    $region8: #{tpu_custom_call.1} parent=1 // pred_region
      _
    $region9: #{tpu_custom_call.1} parent=1 // pred_fallthru
      _
    // Predicated region
    $region10: #{tpu_custom_call.1} parent=1 // pred_check
      _
    $region11: #{tpu_custom_call.1} parent=1 // pred_check_branch
      %23 = sbr.rel (0) target = $region13
    $region12: #{tpu_custom_call.1} parent=1 // pred_region
      _
    $region13: #{tpu_custom_call.1} parent=1 // pred_fallthru
      _
    // Predicated region
    $region14: #{tpu_custom_call.1} parent=1 // pred_check
      _
    $region15: #{tpu_custom_call.1} parent=1 // pred_check_branch
      %25 = sbr.rel (0) target = $region17
    $region16: #{tpu_custom_call.1} parent=1 // pred_region
      _
    $region17: #{tpu_custom_call.1} parent=1 // pred_fallthru
      _
    // Predicated region
    $region18: #{tpu_custom_call.1} parent=1 // pred_check
      _
    $region19: #{tpu_custom_call.1} parent=1 // pred_check_branch
      %27 = sbr.rel (0) target = $region21
    $region20: #{tpu_custom_call.1} parent=1 // pred_region
      _
    $region21: #{tpu_custom_call.1} parent=1 // pred_fallthru
      _
    %s28 = smul.u32 0, 8
    %v29 = vld [vmem:[%s2] sm:$0xff]
    %v30 = vld [vmem:[%s2 + $0x8] sm:$0xff]
    %v31 = vld [vmem:[%s2 + $0x10] sm:$0xff]
    %v32 = vld [vmem:[%s2 + $0x18] sm:$0xff]
    %v33 = vld [vmem:[%s4] sm:$0xff]
    %v34 = vld [vmem:[%s4 + $0x8] sm:$0xff]
    %v35 = vld [vmem:[%s4 + $0x10] sm:$0xff]
    %v36 = vld [vmem:[%s4 + $0x18] sm:$0xff]
    %v37 = vld [vmem:[%s3] sm:$0x1]
    %v39 = vlaneseq
    %v40 = vshrl.u32 %v39, 7
    %v41 = vsub.s32 0, %v40
    %v42 = vrot.slane %v37, %v41
    %v44 = vld [vmem:[%s5] sm:$0x1]
    %v46 = vlaneseq
    %v47 = vshrl.u32 %v46, 7
    %v48 = vsub.s32 0, %v47
    %v49 = vrot.slane %v44, %v48
    %p51 = scmp.eq.s32.totalorder 0, 0
    // Predicated region
    $region22: #{tpu_custom_call.1} parent=1 // pred_check
      %p52 = pneg %p51
    $region23: #{tpu_custom_call.1} parent=1 // pred_check_branch
      %54 = sbr.rel (%p52) target = $region25
    $region24: #{tpu_custom_call.1} parent=1 // pred_region
      %v55 = vld [vmem:[%s1] sm:$0xff]
      %vm56 = vcmask 261120
      %57 = vst.msk [vmem:[#allocation2] sm:$0xff] %vm56, %v55
    $region25: #{tpu_custom_call.1} parent=1 // pred_fallthru
      _
    loop: start=0, step=1, limit=8
    $region26: #{tpu_custom_call.1} parent=1 // loop_pre_header
      _
    $region27: #{tpu_custom_call.1} parent=1 // loop_header
      %s59 = sphi 0, %s63
      %p60 = scmp.ge.s32.totalorder %s59, 8
    $region28: #{tpu_custom_call.1} parent=1 // loop_header_branch
      %62 = sbr.rel (%p60) target = $region32
    $region29: #{tpu_custom_call.1} parent=1 // loop_body
      %s64 = sadd.s32 %s28, %s59
      %p65 = scmp.gt.s32.totalorder %s64, 0
      %p66 = scmp.lt.s32.totalorder %s64, 8
      %p67 = pnand %p65, %p66
      %p68 = pneg %p67
      // Predicated region
      $region33: #{tpu_custom_call.1} parent=29 // pred_check
        _
      $region34: #{tpu_custom_call.1} parent=29 // pred_check_branch
        %70 = sbr.rel (%p67) target = $region36
      $region35: #{tpu_custom_call.1} parent=29 // pred_region
        %s71 = ssub.s32 %s64, 1
        %s72 = sld [smem:[#allocation5 + %s71]]
        %s73 = sld [smem:[#allocation5 + %s64]]
        %s74 = ssub.f32 %s73, %s72
        %v75 = vrcp.pop 4.0
        %s76 = vtos %v75
        %s77 = smul.f32 %s74, %s76
        %v78 = vld [vmem:[#allocation2] sm:$0xff]
        %vm79 = vcmask 261120
        %v81 = vsel %vm79, %v78, 0
        %83 = vmatprep.subr.mxu0 0.0
        %84 = vmatpush1.msra.mxu0 0.0
        %85 = vmatprep.subr.mxu0 0.0
        %86 = vmatpush1.msra.mxu0 0.0
        %87 = vmatprep.subr.mxu0 0.0
        %88 = vmatpush1.msra.mxu0 0.0
        %89 = vmatprep.subr.mxu0 0.0
        %90 = vmatpush1.msra.mxu0 0.0
        %91 = vmatprep.subr.mxu0 0.0
        %92 = vmatpush1.msra.mxu0 0.0
        %93 = vmatprep.subr.mxu0 0.0
        %94 = vmatpush1.msra.mxu0 0.0
        %95 = vmatprep.subr.mxu0 0.0
        %96 = vmatpush1.msra.mxu0 0.0
        %97 = vmatprep.subr.mxu0 0.0
        %98 = vmatpush1.msra.mxu0 0.0
        %99 = vmatprep.subr.mxu0 0.0
        %100 = vmatpush1.msra.mxu0 0.0
        %101 = vmatprep.subr.mxu0 0.0
        %102 = vmatpush1.msra.mxu0 0.0
        %103 = vmatprep.subr.mxu0 0.0
        %104 = vmatpush1.msra.mxu0 0.0
        %105 = vmatprep.subr.mxu0 0.0
        %106 = vmatpush1.msra.mxu0 0.0
        %107 = vmatprep.subr.mxu0 0.0
        %108 = vmatpush1.msra.mxu0 %v32
        %109 = vmatprep.subr.mxu0 0.0
        %110 = vmatpush1.msra.mxu0 %v31
        %111 = vmatprep.subr.mxu0 0.0
        %112 = vmatpush1.msra.mxu0 %v30
        %113 = vmatprep.subr.mxu0 0.0
        %114 = vmatpush1.msra.mxu0 %v29
        %115 = vmatprep.subr.mxu0 0.0
        %116 = vmatpush2.msra.mxu0 0.0
        %117 = vmatprep.subr.mxu0 0.0
        %118 = vmatpush2.msra.mxu0 0.0
        %119 = vmatprep.subr.mxu0 0.0
        %120 = vmatpush2.msra.mxu0 0.0
        %121 = vmatprep.subr.mxu0 0.0
        %122 = vmatpush2.msra.mxu0 0.0
        %123 = vmatprep.subr.mxu0 0.0
        %124 = vmatpush2.msra.mxu0 0.0
        %125 = vmatprep.subr.mxu0 0.0
        %126 = vmatpush2.msra.mxu0 0.0
        %127 = vmatprep.subr.mxu0 0.0
        %128 = vmatpush2.msra.mxu0 0.0
        %129 = vmatprep.subr.mxu0 0.0
        %130 = vmatpush2.msra.mxu0 0.0
        %131 = vmatprep.subr.mxu0 0.0
        %132 = vmatpush2.msra.mxu0 0.0
        %133 = vmatprep.subr.mxu0 0.0
        %134 = vmatpush2.msra.mxu0 0.0
        %135 = vmatprep.subr.mxu0 0.0
        %136 = vmatpush2.msra.mxu0 0.0
        %137 = vmatprep.subr.mxu0 0.0
        %138 = vmatpush2.msra.mxu0 0.0
        %139 = vmatprep.subr.mxu0 0.0
        %140 = vmatpush2.msra.mxu0 0.0
        %141 = vmatprep.subr.mxu0 0.0
        %142 = vmatpush2.msra.mxu0 0.0
        %143 = vmatprep.subr.mxu0 0.0
        %144 = vmatpush2.msra.mxu0 0.0
        %145 = vmatprep.subr.mxu0 0.0
        %146 = vmatpush2.msra.mxu0 0.0
        %147 = vmatprep.mubr.f32.mxu0 0.0
        %148 = vmatmul.mubr.f32.gmra.mxu0 %v81
        %v149 = vpop.f32.mrf.mxu0
        %v150 = vadd.f32 %v42, %v149
        %v151 = vpop.f32.mrf.mxu0
        %152 = vdwg.mxu0
        %v153 = vtanh.pop %v150
        %v155 = vsel %vm79, %v153, 0
        %157 = vmatprep.subr.mxu0 0.0
        %158 = vmatpush1.msra.mxu0 0.0
        %159 = vmatprep.subr.mxu0 0.0
        %160 = vmatpush1.msra.mxu0 0.0
        %161 = vmatprep.subr.mxu0 0.0
        %162 = vmatpush1.msra.mxu0 0.0
        %163 = vmatprep.subr.mxu0 0.0
        %164 = vmatpush1.msra.mxu0 0.0
        %165 = vmatprep.subr.mxu0 0.0
        %166 = vmatpush1.msra.mxu0 0.0
        %167 = vmatprep.subr.mxu0 0.0
        %168 = vmatpush1.msra.mxu0 0.0
        %169 = vmatprep.subr.mxu0 0.0
        %170 = vmatpush1.msra.mxu0 0.0
        %171 = vmatprep.subr.mxu0 0.0
        %172 = vmatpush1.msra.mxu0 0.0
        %173 = vmatprep.subr.mxu0 0.0
        %174 = vmatpush1.msra.mxu0 0.0
        %175 = vmatprep.subr.mxu0 0.0
        %176 = vmatpush1.msra.mxu0 0.0
        %177 = vmatprep.subr.mxu0 0.0
        %178 = vmatpush1.msra.mxu0 0.0
        %179 = vmatprep.subr.mxu0 0.0
        %180 = vmatpush1.msra.mxu0 0.0
        %181 = vmatprep.subr.mxu0 0.0
        %182 = vmatpush1.msra.mxu0 %v36
        %183 = vmatprep.subr.mxu0 0.0
        %184 = vmatpush1.msra.mxu0 %v35
        %185 = vmatprep.subr.mxu0 0.0
        %186 = vmatpush1.msra.mxu0 %v34
        %187 = vmatprep.subr.mxu0 0.0
        %188 = vmatpush1.msra.mxu0 %v33
        %189 = vmatprep.subr.mxu0 0.0
        %190 = vmatpush2.msra.mxu0 0.0
        %191 = vmatprep.subr.mxu0 0.0
        %192 = vmatpush2.msra.mxu0 0.0
        %193 = vmatprep.subr.mxu0 0.0
        %194 = vmatpush2.msra.mxu0 0.0
        %195 = vmatprep.subr.mxu0 0.0
        %196 = vmatpush2.msra.mxu0 0.0
        %197 = vmatprep.subr.mxu0 0.0
        %198 = vmatpush2.msra.mxu0 0.0
        %199 = vmatprep.subr.mxu0 0.0
        %200 = vmatpush2.msra.mxu0 0.0
        %201 = vmatprep.subr.mxu0 0.0
        %202 = vmatpush2.msra.mxu0 0.0
        %203 = vmatprep.subr.mxu0 0.0
        %204 = vmatpush2.msra.mxu0 0.0
        %205 = vmatprep.subr.mxu0 0.0
        %206 = vmatpush2.msra.mxu0 0.0
        %207 = vmatprep.subr.mxu0 0.0
        %208 = vmatpush2.msra.mxu0 0.0
        %209 = vmatprep.subr.mxu0 0.0
        %210 = vmatpush2.msra.mxu0 0.0
        %211 = vmatprep.subr.mxu0 0.0
        %212 = vmatpush2.msra.mxu0 0.0
        %213 = vmatprep.subr.mxu0 0.0
        %214 = vmatpush2.msra.mxu0 0.0
        %215 = vmatprep.subr.mxu0 0.0
        %216 = vmatpush2.msra.mxu0 0.0
        %217 = vmatprep.subr.mxu0 0.0
        %218 = vmatpush2.msra.mxu0 0.0
        %219 = vmatprep.subr.mxu0 0.0
        %220 = vmatpush2.msra.mxu0 0.0
        %221 = vmatprep.mubr.f32.mxu0 0.0
        %222 = vmatmul.mubr.f32.gmra.mxu0 %v155
        %v223 = vpop.f32.mrf.mxu0
        %v224 = vadd.f32 %v49, %v223
        %v225 = vpop.f32.mrf.mxu0
        %226 = vdwg.mxu0
        %227 = vrot.lane.b32.xlu0 %v78, 112
        %v228 = vpop.permute.xlu0 %227
        %231 = vrot.lane.b32.xlu0 %v224, 16
        %v232 = vpop.permute.xlu0 %231
        %vm234 = vcmask 130048
        %v235 = vsel %vm234, %v228, %v232
        %s236 = smul.f32 %s77, 0.5
        %v237 = vstv %s236
        %v238 = vmul.f32 %v237, %v235
        %v239 = vadd.f32 %v78, %v238
        %v241 = vsel %vm79, %v239, 0
        %243 = vmatprep.subr.mxu0 0.0
        %244 = vmatpush1.msra.mxu0 0.0
        %245 = vmatprep.subr.mxu0 0.0
        %246 = vmatpush1.msra.mxu0 0.0
        %247 = vmatprep.subr.mxu0 0.0
        %248 = vmatpush1.msra.mxu0 0.0
        %249 = vmatprep.subr.mxu0 0.0
        %250 = vmatpush1.msra.mxu0 0.0
        %251 = vmatprep.subr.mxu0 0.0
        %252 = vmatpush1.msra.mxu0 0.0
        %253 = vmatprep.subr.mxu0 0.0
        %254 = vmatpush1.msra.mxu0 0.0
        %255 = vmatprep.subr.mxu0 0.0
        %256 = vmatpush1.msra.mxu0 0.0
        %257 = vmatprep.subr.mxu0 0.0
        %258 = vmatpush1.msra.mxu0 0.0
        %259 = vmatprep.subr.mxu0 0.0
        %260 = vmatpush1.msra.mxu0 0.0
        %261 = vmatprep.subr.mxu0 0.0
        %262 = vmatpush1.msra.mxu0 0.0
        %263 = vmatprep.subr.mxu0 0.0
        %264 = vmatpush1.msra.mxu0 0.0
        %265 = vmatprep.subr.mxu0 0.0
        %266 = vmatpush1.msra.mxu0 0.0
        %267 = vmatprep.subr.mxu0 0.0
        %268 = vmatpush1.msra.mxu0 %v32
        %269 = vmatprep.subr.mxu0 0.0
        %270 = vmatpush1.msra.mxu0 %v31
        %271 = vmatprep.subr.mxu0 0.0
        %272 = vmatpush1.msra.mxu0 %v30
        %273 = vmatprep.subr.mxu0 0.0
        %274 = vmatpush1.msra.mxu0 %v29
        %275 = vmatprep.subr.mxu0 0.0
        %276 = vmatpush2.msra.mxu0 0.0
        %277 = vmatprep.subr.mxu0 0.0
        %278 = vmatpush2.msra.mxu0 0.0
        %279 = vmatprep.subr.mxu0 0.0
        %280 = vmatpush2.msra.mxu0 0.0
        %281 = vmatprep.subr.mxu0 0.0
        %282 = vmatpush2.msra.mxu0 0.0
        %283 = vmatprep.subr.mxu0 0.0
        %284 = vmatpush2.msra.mxu0 0.0
        %285 = vmatprep.subr.mxu0 0.0
        %286 = vmatpush2.msra.mxu0 0.0
        %287 = vmatprep.subr.mxu0 0.0
        %288 = vmatpush2.msra.mxu0 0.0
        %289 = vmatprep.subr.mxu0 0.0
        %290 = vmatpush2.msra.mxu0 0.0
        %291 = vmatprep.subr.mxu0 0.0
        %292 = vmatpush2.msra.mxu0 0.0
        %293 = vmatprep.subr.mxu0 0.0
        %294 = vmatpush2.msra.mxu0 0.0
        %295 = vmatprep.subr.mxu0 0.0
        %296 = vmatpush2.msra.mxu0 0.0
        %297 = vmatprep.subr.mxu0 0.0
        %298 = vmatpush2.msra.mxu0 0.0
        %299 = vmatprep.subr.mxu0 0.0
        %300 = vmatpush2.msra.mxu0 0.0
        %301 = vmatprep.subr.mxu0 0.0
        %302 = vmatpush2.msra.mxu0 0.0
        %303 = vmatprep.subr.mxu0 0.0
        %304 = vmatpush2.msra.mxu0 0.0
        %305 = vmatprep.subr.mxu0 0.0
        %306 = vmatpush2.msra.mxu0 0.0
        %307 = vmatprep.mubr.f32.mxu0 0.0
        %308 = vmatmul.mubr.f32.gmra.mxu0 %v241
        %v309 = vpop.f32.mrf.mxu0
        %v310 = vadd.f32 %v42, %v309
        %v311 = vpop.f32.mrf.mxu0
        %312 = vdwg.mxu0
        %v313 = vtanh.pop %v310
        %v315 = vsel %vm79, %v313, 0
        %317 = vmatprep.subr.mxu0 0.0
        %318 = vmatpush1.msra.mxu0 0.0
        %319 = vmatprep.subr.mxu0 0.0
        %320 = vmatpush1.msra.mxu0 0.0
        %321 = vmatprep.subr.mxu0 0.0
        %322 = vmatpush1.msra.mxu0 0.0
        %323 = vmatprep.subr.mxu0 0.0
        %324 = vmatpush1.msra.mxu0 0.0
        %325 = vmatprep.subr.mxu0 0.0
        %326 = vmatpush1.msra.mxu0 0.0
        %327 = vmatprep.subr.mxu0 0.0
        %328 = vmatpush1.msra.mxu0 0.0
        %329 = vmatprep.subr.mxu0 0.0
        %330 = vmatpush1.msra.mxu0 0.0
        %331 = vmatprep.subr.mxu0 0.0
        %332 = vmatpush1.msra.mxu0 0.0
        %333 = vmatprep.subr.mxu0 0.0
        %334 = vmatpush1.msra.mxu0 0.0
        %335 = vmatprep.subr.mxu0 0.0
        %336 = vmatpush1.msra.mxu0 0.0
        %337 = vmatprep.subr.mxu0 0.0
        %338 = vmatpush1.msra.mxu0 0.0
        %339 = vmatprep.subr.mxu0 0.0
        %340 = vmatpush1.msra.mxu0 0.0
        %341 = vmatprep.subr.mxu0 0.0
        %342 = vmatpush1.msra.mxu0 %v36
        %343 = vmatprep.subr.mxu0 0.0
        %344 = vmatpush1.msra.mxu0 %v35
        %345 = vmatprep.subr.mxu0 0.0
        %346 = vmatpush1.msra.mxu0 %v34
        %347 = vmatprep.subr.mxu0 0.0
        %348 = vmatpush1.msra.mxu0 %v33
        %349 = vmatprep.subr.mxu0 0.0
        %350 = vmatpush2.msra.mxu0 0.0
        %351 = vmatprep.subr.mxu0 0.0
        %352 = vmatpush2.msra.mxu0 0.0
        %353 = vmatprep.subr.mxu0 0.0
        %354 = vmatpush2.msra.mxu0 0.0
        %355 = vmatprep.subr.mxu0 0.0
        %356 = vmatpush2.msra.mxu0 0.0
        %357 = vmatprep.subr.mxu0 0.0
        %358 = vmatpush2.msra.mxu0 0.0
        %359 = vmatprep.subr.mxu0 0.0
        %360 = vmatpush2.msra.mxu0 0.0
        %361 = vmatprep.subr.mxu0 0.0
        %362 = vmatpush2.msra.mxu0 0.0
        %363 = vmatprep.subr.mxu0 0.0
        %364 = vmatpush2.msra.mxu0 0.0
        %365 = vmatprep.subr.mxu0 0.0
        %366 = vmatpush2.msra.mxu0 0.0
        %367 = vmatprep.subr.mxu0 0.0
        %368 = vmatpush2.msra.mxu0 0.0
        %369 = vmatprep.subr.mxu0 0.0
        %370 = vmatpush2.msra.mxu0 0.0
        %371 = vmatprep.subr.mxu0 0.0
        %372 = vmatpush2.msra.mxu0 0.0
        %373 = vmatprep.subr.mxu0 0.0
        %374 = vmatpush2.msra.mxu0 0.0
        %375 = vmatprep.subr.mxu0 0.0
        %376 = vmatpush2.msra.mxu0 0.0
        %377 = vmatprep.subr.mxu0 0.0
        %378 = vmatpush2.msra.mxu0 0.0
        %379 = vmatprep.subr.mxu0 0.0
        %380 = vmatpush2.msra.mxu0 0.0
        %381 = vmatprep.mubr.f32.mxu0 0.0
        %382 = vmatmul.mubr.f32.gmra.mxu0 %v315
        %v383 = vpop.f32.mrf.mxu0
        %v384 = vadd.f32 %v49, %v383
        %v385 = vpop.f32.mrf.mxu0
        %386 = vdwg.mxu0
        %387 = vrot.lane.b32.xlu0 %v239, 112
        %v388 = vpop.permute.xlu0 %387
        %391 = vrot.lane.b32.xlu0 %v384, 16
        %v392 = vpop.permute.xlu0 %391
        %v394 = vsel %vm234, %v388, %v392
        %v395 = vmul.f32 %v237, %v394
        %v396 = vadd.f32 %v78, %v395
        %v398 = vsel %vm79, %v396, 0
        %400 = vmatprep.subr.mxu0 0.0
        %401 = vmatpush1.msra.mxu0 0.0
        %402 = vmatprep.subr.mxu0 0.0
        %403 = vmatpush1.msra.mxu0 0.0
        %404 = vmatprep.subr.mxu0 0.0
        %405 = vmatpush1.msra.mxu0 0.0
        %406 = vmatprep.subr.mxu0 0.0
        %407 = vmatpush1.msra.mxu0 0.0
        %408 = vmatprep.subr.mxu0 0.0
        %409 = vmatpush1.msra.mxu0 0.0
        %410 = vmatprep.subr.mxu0 0.0
        %411 = vmatpush1.msra.mxu0 0.0
        %412 = vmatprep.subr.mxu0 0.0
        %413 = vmatpush1.msra.mxu0 0.0
        %414 = vmatprep.subr.mxu0 0.0
        %415 = vmatpush1.msra.mxu0 0.0
        %416 = vmatprep.subr.mxu0 0.0
        %417 = vmatpush1.msra.mxu0 0.0
        %418 = vmatprep.subr.mxu0 0.0
        %419 = vmatpush1.msra.mxu0 0.0
        %420 = vmatprep.subr.mxu0 0.0
        %421 = vmatpush1.msra.mxu0 0.0
        %422 = vmatprep.subr.mxu0 0.0
        %423 = vmatpush1.msra.mxu0 0.0
        %424 = vmatprep.subr.mxu0 0.0
        %425 = vmatpush1.msra.mxu0 %v32
        %426 = vmatprep.subr.mxu0 0.0
        %427 = vmatpush1.msra.mxu0 %v31
        %428 = vmatprep.subr.mxu0 0.0
        %429 = vmatpush1.msra.mxu0 %v30
        %430 = vmatprep.subr.mxu0 0.0
        %431 = vmatpush1.msra.mxu0 %v29
        %432 = vmatprep.subr.mxu0 0.0
        %433 = vmatpush2.msra.mxu0 0.0
        %434 = vmatprep.subr.mxu0 0.0
        %435 = vmatpush2.msra.mxu0 0.0
        %436 = vmatprep.subr.mxu0 0.0
        %437 = vmatpush2.msra.mxu0 0.0
        %438 = vmatprep.subr.mxu0 0.0
        %439 = vmatpush2.msra.mxu0 0.0
        %440 = vmatprep.subr.mxu0 0.0
        %441 = vmatpush2.msra.mxu0 0.0
        %442 = vmatprep.subr.mxu0 0.0
        %443 = vmatpush2.msra.mxu0 0.0
        %444 = vmatprep.subr.mxu0 0.0
        %445 = vmatpush2.msra.mxu0 0.0
        %446 = vmatprep.subr.mxu0 0.0
        %447 = vmatpush2.msra.mxu0 0.0
        %448 = vmatprep.subr.mxu0 0.0
        %449 = vmatpush2.msra.mxu0 0.0
        %450 = vmatprep.subr.mxu0 0.0
        %451 = vmatpush2.msra.mxu0 0.0
        %452 = vmatprep.subr.mxu0 0.0
        %453 = vmatpush2.msra.mxu0 0.0
        %454 = vmatprep.subr.mxu0 0.0
        %455 = vmatpush2.msra.mxu0 0.0
        %456 = vmatprep.subr.mxu0 0.0
        %457 = vmatpush2.msra.mxu0 0.0
        %458 = vmatprep.subr.mxu0 0.0
        %459 = vmatpush2.msra.mxu0 0.0
        %460 = vmatprep.subr.mxu0 0.0
        %461 = vmatpush2.msra.mxu0 0.0
        %462 = vmatprep.subr.mxu0 0.0
        %463 = vmatpush2.msra.mxu0 0.0
        %464 = vmatprep.mubr.f32.mxu0 0.0
        %465 = vmatmul.mubr.f32.gmra.mxu0 %v398
        %v466 = vpop.f32.mrf.mxu0
        %v467 = vadd.f32 %v42, %v466
        %v468 = vpop.f32.mrf.mxu0
        %469 = vdwg.mxu0
        %v470 = vtanh.pop %v467
        %v472 = vsel %vm79, %v470, 0
        %474 = vmatprep.subr.mxu0 0.0
        %475 = vmatpush1.msra.mxu0 0.0
        %476 = vmatprep.subr.mxu0 0.0
        %477 = vmatpush1.msra.mxu0 0.0
        %478 = vmatprep.subr.mxu0 0.0
        %479 = vmatpush1.msra.mxu0 0.0
        %480 = vmatprep.subr.mxu0 0.0
        %481 = vmatpush1.msra.mxu0 0.0
        %482 = vmatprep.subr.mxu0 0.0
        %483 = vmatpush1.msra.mxu0 0.0
        %484 = vmatprep.subr.mxu0 0.0
        %485 = vmatpush1.msra.mxu0 0.0
        %486 = vmatprep.subr.mxu0 0.0
        %487 = vmatpush1.msra.mxu0 0.0
        %488 = vmatprep.subr.mxu0 0.0
        %489 = vmatpush1.msra.mxu0 0.0
        %490 = vmatprep.subr.mxu0 0.0
        %491 = vmatpush1.msra.mxu0 0.0
        %492 = vmatprep.subr.mxu0 0.0
        %493 = vmatpush1.msra.mxu0 0.0
        %494 = vmatprep.subr.mxu0 0.0
        %495 = vmatpush1.msra.mxu0 0.0
        %496 = vmatprep.subr.mxu0 0.0
        %497 = vmatpush1.msra.mxu0 0.0
        %498 = vmatprep.subr.mxu0 0.0
        %499 = vmatpush1.msra.mxu0 %v36
        %500 = vmatprep.subr.mxu0 0.0
        %501 = vmatpush1.msra.mxu0 %v35
        %502 = vmatprep.subr.mxu0 0.0
        %503 = vmatpush1.msra.mxu0 %v34
        %504 = vmatprep.subr.mxu0 0.0
        %505 = vmatpush1.msra.mxu0 %v33
        %506 = vmatprep.subr.mxu0 0.0
        %507 = vmatpush2.msra.mxu0 0.0
        %508 = vmatprep.subr.mxu0 0.0
        %509 = vmatpush2.msra.mxu0 0.0
        %510 = vmatprep.subr.mxu0 0.0
        %511 = vmatpush2.msra.mxu0 0.0
        %512 = vmatprep.subr.mxu0 0.0
        %513 = vmatpush2.msra.mxu0 0.0
        %514 = vmatprep.subr.mxu0 0.0
        %515 = vmatpush2.msra.mxu0 0.0
        %516 = vmatprep.subr.mxu0 0.0
        %517 = vmatpush2.msra.mxu0 0.0
        %518 = vmatprep.subr.mxu0 0.0
        %519 = vmatpush2.msra.mxu0 0.0
        %520 = vmatprep.subr.mxu0 0.0
        %521 = vmatpush2.msra.mxu0 0.0
        %522 = vmatprep.subr.mxu0 0.0
        %523 = vmatpush2.msra.mxu0 0.0
        %524 = vmatprep.subr.mxu0 0.0
        %525 = vmatpush2.msra.mxu0 0.0
        %526 = vmatprep.subr.mxu0 0.0
        %527 = vmatpush2.msra.mxu0 0.0
        %528 = vmatprep.subr.mxu0 0.0
        %529 = vmatpush2.msra.mxu0 0.0
        %530 = vmatprep.subr.mxu0 0.0
        %531 = vmatpush2.msra.mxu0 0.0
        %532 = vmatprep.subr.mxu0 0.0
        %533 = vmatpush2.msra.mxu0 0.0
        %534 = vmatprep.subr.mxu0 0.0
        %535 = vmatpush2.msra.mxu0 0.0
        %536 = vmatprep.subr.mxu0 0.0
        %537 = vmatpush2.msra.mxu0 0.0
        %538 = vmatprep.mubr.f32.mxu0 0.0
        %539 = vmatmul.mubr.f32.gmra.mxu0 %v472
        %v540 = vpop.f32.mrf.mxu0
        %v541 = vadd.f32 %v49, %v540
        %v542 = vpop.f32.mrf.mxu0
        %543 = vdwg.mxu0
        %544 = vrot.lane.b32.xlu0 %v396, 112
        %v545 = vpop.permute.xlu0 %544
        %548 = vrot.lane.b32.xlu0 %v541, 16
        %v549 = vpop.permute.xlu0 %548
        %v551 = vsel %vm234, %v545, %v549
        %v552 = vstv %s77
        %v553 = vmul.f32 %v552, %v551
        %v554 = vadd.f32 %v78, %v553
        %v556 = vsel %vm79, %v554, 0
        %558 = vmatprep.subr.mxu0 0.0
        %559 = vmatpush1.msra.mxu0 0.0
        %560 = vmatprep.subr.mxu0 0.0
        %561 = vmatpush1.msra.mxu0 0.0
        %562 = vmatprep.subr.mxu0 0.0
        %563 = vmatpush1.msra.mxu0 0.0
        %564 = vmatprep.subr.mxu0 0.0
        %565 = vmatpush1.msra.mxu0 0.0
        %566 = vmatprep.subr.mxu0 0.0
        %567 = vmatpush1.msra.mxu0 0.0
        %568 = vmatprep.subr.mxu0 0.0
        %569 = vmatpush1.msra.mxu0 0.0
        %570 = vmatprep.subr.mxu0 0.0
        %571 = vmatpush1.msra.mxu0 0.0
        %572 = vmatprep.subr.mxu0 0.0
        %573 = vmatpush1.msra.mxu0 0.0
        %574 = vmatprep.subr.mxu0 0.0
        %575 = vmatpush1.msra.mxu0 0.0
        %576 = vmatprep.subr.mxu0 0.0
        %577 = vmatpush1.msra.mxu0 0.0
        %578 = vmatprep.subr.mxu0 0.0
        %579 = vmatpush1.msra.mxu0 0.0
        %580 = vmatprep.subr.mxu0 0.0
        %581 = vmatpush1.msra.mxu0 0.0
        %582 = vmatprep.subr.mxu0 0.0
        %583 = vmatpush1.msra.mxu0 %v32
        %584 = vmatprep.subr.mxu0 0.0
        %585 = vmatpush1.msra.mxu0 %v31
        %586 = vmatprep.subr.mxu0 0.0
        %587 = vmatpush1.msra.mxu0 %v30
        %588 = vmatprep.subr.mxu0 0.0
        %589 = vmatpush1.msra.mxu0 %v29
        %590 = vmatprep.subr.mxu0 0.0
        %591 = vmatpush2.msra.mxu0 0.0
        %592 = vmatprep.subr.mxu0 0.0
        %593 = vmatpush2.msra.mxu0 0.0
        %594 = vmatprep.subr.mxu0 0.0
        %595 = vmatpush2.msra.mxu0 0.0
        %596 = vmatprep.subr.mxu0 0.0
        %597 = vmatpush2.msra.mxu0 0.0
        %598 = vmatprep.subr.mxu0 0.0
        %599 = vmatpush2.msra.mxu0 0.0
        %600 = vmatprep.subr.mxu0 0.0
        %601 = vmatpush2.msra.mxu0 0.0
        %602 = vmatprep.subr.mxu0 0.0
        %603 = vmatpush2.msra.mxu0 0.0
        %604 = vmatprep.subr.mxu0 0.0
        %605 = vmatpush2.msra.mxu0 0.0
        %606 = vmatprep.subr.mxu0 0.0
        %607 = vmatpush2.msra.mxu0 0.0
        %608 = vmatprep.subr.mxu0 0.0
        %609 = vmatpush2.msra.mxu0 0.0
        %610 = vmatprep.subr.mxu0 0.0
        %611 = vmatpush2.msra.mxu0 0.0
        %612 = vmatprep.subr.mxu0 0.0
        %613 = vmatpush2.msra.mxu0 0.0
        %614 = vmatprep.subr.mxu0 0.0
        %615 = vmatpush2.msra.mxu0 0.0
        %616 = vmatprep.subr.mxu0 0.0
        %617 = vmatpush2.msra.mxu0 0.0
        %618 = vmatprep.subr.mxu0 0.0
        %619 = vmatpush2.msra.mxu0 0.0
        %620 = vmatprep.subr.mxu0 0.0
        %621 = vmatpush2.msra.mxu0 0.0
        %622 = vmatprep.mubr.f32.mxu0 0.0
        %623 = vmatmul.mubr.f32.gmra.mxu0 %v556
        %v624 = vpop.f32.mrf.mxu0
        %v625 = vadd.f32 %v42, %v624
        %v626 = vpop.f32.mrf.mxu0
        %627 = vdwg.mxu0
        %v628 = vtanh.pop %v625
        %v630 = vsel %vm79, %v628, 0
        %632 = vmatprep.subr.mxu0 0.0
        %633 = vmatpush1.msra.mxu0 0.0
        %634 = vmatprep.subr.mxu0 0.0
        %635 = vmatpush1.msra.mxu0 0.0
        %636 = vmatprep.subr.mxu0 0.0
        %637 = vmatpush1.msra.mxu0 0.0
        %638 = vmatprep.subr.mxu0 0.0
        %639 = vmatpush1.msra.mxu0 0.0
        %640 = vmatprep.subr.mxu0 0.0
        %641 = vmatpush1.msra.mxu0 0.0
        %642 = vmatprep.subr.mxu0 0.0
        %643 = vmatpush1.msra.mxu0 0.0
        %644 = vmatprep.subr.mxu0 0.0
        %645 = vmatpush1.msra.mxu0 0.0
        %646 = vmatprep.subr.mxu0 0.0
        %647 = vmatpush1.msra.mxu0 0.0
        %648 = vmatprep.subr.mxu0 0.0
        %649 = vmatpush1.msra.mxu0 0.0
        %650 = vmatprep.subr.mxu0 0.0
        %651 = vmatpush1.msra.mxu0 0.0
        %652 = vmatprep.subr.mxu0 0.0
        %653 = vmatpush1.msra.mxu0 0.0
        %654 = vmatprep.subr.mxu0 0.0
        %655 = vmatpush1.msra.mxu0 0.0
        %656 = vmatprep.subr.mxu0 0.0
        %657 = vmatpush1.msra.mxu0 %v36
        %658 = vmatprep.subr.mxu0 0.0
        %659 = vmatpush1.msra.mxu0 %v35
        %660 = vmatprep.subr.mxu0 0.0
        %661 = vmatpush1.msra.mxu0 %v34
        %662 = vmatprep.subr.mxu0 0.0
        %663 = vmatpush1.msra.mxu0 %v33
        %664 = vmatprep.subr.mxu0 0.0
        %665 = vmatpush2.msra.mxu0 0.0
        %666 = vmatprep.subr.mxu0 0.0
        %667 = vmatpush2.msra.mxu0 0.0
        %668 = vmatprep.subr.mxu0 0.0
        %669 = vmatpush2.msra.mxu0 0.0
        %670 = vmatprep.subr.mxu0 0.0
        %671 = vmatpush2.msra.mxu0 0.0
        %672 = vmatprep.subr.mxu0 0.0
        %673 = vmatpush2.msra.mxu0 0.0
        %674 = vmatprep.subr.mxu0 0.0
        %675 = vmatpush2.msra.mxu0 0.0
        %676 = vmatprep.subr.mxu0 0.0
        %677 = vmatpush2.msra.mxu0 0.0
        %678 = vmatprep.subr.mxu0 0.0
        %679 = vmatpush2.msra.mxu0 0.0
        %680 = vmatprep.subr.mxu0 0.0
        %681 = vmatpush2.msra.mxu0 0.0
        %682 = vmatprep.subr.mxu0 0.0
        %683 = vmatpush2.msra.mxu0 0.0
        %684 = vmatprep.subr.mxu0 0.0
        %685 = vmatpush2.msra.mxu0 0.0
        %686 = vmatprep.subr.mxu0 0.0
        %687 = vmatpush2.msra.mxu0 0.0
        %688 = vmatprep.subr.mxu0 0.0
        %689 = vmatpush2.msra.mxu0 0.0
        %690 = vmatprep.subr.mxu0 0.0
        %691 = vmatpush2.msra.mxu0 0.0
        %692 = vmatprep.subr.mxu0 0.0
        %693 = vmatpush2.msra.mxu0 0.0
        %694 = vmatprep.subr.mxu0 0.0
        %695 = vmatpush2.msra.mxu0 0.0
        %696 = vmatprep.mubr.f32.mxu0 0.0
        %697 = vmatmul.mubr.f32.gmra.mxu0 %v630
        %v698 = vpop.f32.mrf.mxu0
        %v699 = vadd.f32 %v49, %v698
        %v700 = vpop.f32.mrf.mxu0
        %701 = vdwg.mxu0
        %702 = vrot.lane.b32.xlu0 %v554, 112
        %v703 = vpop.permute.xlu0 %702
        %706 = vrot.lane.b32.xlu0 %v699, 16
        %v707 = vpop.permute.xlu0 %706
        %v709 = vsel %vm234, %v703, %v707
        %v710 = vrcp.pop 6.0
        %s711 = vtos %v710
        %s712 = smul.f32 %s77, %s711
        %v713 = vmul.f32 %v394, 2.0
        %v714 = vadd.f32 %v235, %v713
        %v715 = vmul.f32 %v551, 2.0
        %v716 = vadd.f32 %v714, %v715
        %v717 = vadd.f32 %v716, %v709
        %v718 = vstv %s712
        %v719 = vmul.f32 %v718, %v717
        %v720 = vadd.f32 %v78, %v719
        %v722 = vsel %vm79, %v720, 0
        %724 = vmatprep.subr.mxu0 0.0
        %725 = vmatpush1.msra.mxu0 0.0
        %726 = vmatprep.subr.mxu0 0.0
        %727 = vmatpush1.msra.mxu0 0.0
        %728 = vmatprep.subr.mxu0 0.0
        %729 = vmatpush1.msra.mxu0 0.0
        %730 = vmatprep.subr.mxu0 0.0
        %731 = vmatpush1.msra.mxu0 0.0
        %732 = vmatprep.subr.mxu0 0.0
        %733 = vmatpush1.msra.mxu0 0.0
        %734 = vmatprep.subr.mxu0 0.0
        %735 = vmatpush1.msra.mxu0 0.0
        %736 = vmatprep.subr.mxu0 0.0
        %737 = vmatpush1.msra.mxu0 0.0
        %738 = vmatprep.subr.mxu0 0.0
        %739 = vmatpush1.msra.mxu0 0.0
        %740 = vmatprep.subr.mxu0 0.0
        %741 = vmatpush1.msra.mxu0 0.0
        %742 = vmatprep.subr.mxu0 0.0
        %743 = vmatpush1.msra.mxu0 0.0
        %744 = vmatprep.subr.mxu0 0.0
        %745 = vmatpush1.msra.mxu0 0.0
        %746 = vmatprep.subr.mxu0 0.0
        %747 = vmatpush1.msra.mxu0 0.0
        %748 = vmatprep.subr.mxu0 0.0
        %749 = vmatpush1.msra.mxu0 %v32
        %750 = vmatprep.subr.mxu0 0.0
        %751 = vmatpush1.msra.mxu0 %v31
        %752 = vmatprep.subr.mxu0 0.0
        %753 = vmatpush1.msra.mxu0 %v30
        %754 = vmatprep.subr.mxu0 0.0
        %755 = vmatpush1.msra.mxu0 %v29
        %756 = vmatprep.subr.mxu0 0.0
        %757 = vmatpush2.msra.mxu0 0.0
        %758 = vmatprep.subr.mxu0 0.0
        %759 = vmatpush2.msra.mxu0 0.0
        %760 = vmatprep.subr.mxu0 0.0
        %761 = vmatpush2.msra.mxu0 0.0
        %762 = vmatprep.subr.mxu0 0.0
        %763 = vmatpush2.msra.mxu0 0.0
        %764 = vmatprep.subr.mxu0 0.0
        %765 = vmatpush2.msra.mxu0 0.0
        %766 = vmatprep.subr.mxu0 0.0
        %767 = vmatpush2.msra.mxu0 0.0
        %768 = vmatprep.subr.mxu0 0.0
        %769 = vmatpush2.msra.mxu0 0.0
        %770 = vmatprep.subr.mxu0 0.0
        %771 = vmatpush2.msra.mxu0 0.0
        %772 = vmatprep.subr.mxu0 0.0
        %773 = vmatpush2.msra.mxu0 0.0
        %774 = vmatprep.subr.mxu0 0.0
        %775 = vmatpush2.msra.mxu0 0.0
        %776 = vmatprep.subr.mxu0 0.0
        %777 = vmatpush2.msra.mxu0 0.0
        %778 = vmatprep.subr.mxu0 0.0
        %779 = vmatpush2.msra.mxu0 0.0
        %780 = vmatprep.subr.mxu0 0.0
        %781 = vmatpush2.msra.mxu0 0.0
        %782 = vmatprep.subr.mxu0 0.0
        %783 = vmatpush2.msra.mxu0 0.0
        %784 = vmatprep.subr.mxu0 0.0
        %785 = vmatpush2.msra.mxu0 0.0
        %786 = vmatprep.subr.mxu0 0.0
        %787 = vmatpush2.msra.mxu0 0.0
        %788 = vmatprep.mubr.f32.mxu0 0.0
        %789 = vmatmul.mubr.f32.gmra.mxu0 %v722
        %v790 = vpop.f32.mrf.mxu0
        %v791 = vadd.f32 %v42, %v790
        %v792 = vpop.f32.mrf.mxu0
        %793 = vdwg.mxu0
        %v794 = vtanh.pop %v791
        %v796 = vsel %vm79, %v794, 0
        %798 = vmatprep.subr.mxu0 0.0
        %799 = vmatpush1.msra.mxu0 0.0
        %800 = vmatprep.subr.mxu0 0.0
        %801 = vmatpush1.msra.mxu0 0.0
        %802 = vmatprep.subr.mxu0 0.0
        %803 = vmatpush1.msra.mxu0 0.0
        %804 = vmatprep.subr.mxu0 0.0
        %805 = vmatpush1.msra.mxu0 0.0
        %806 = vmatprep.subr.mxu0 0.0
        %807 = vmatpush1.msra.mxu0 0.0
        %808 = vmatprep.subr.mxu0 0.0
        %809 = vmatpush1.msra.mxu0 0.0
        %810 = vmatprep.subr.mxu0 0.0
        %811 = vmatpush1.msra.mxu0 0.0
        %812 = vmatprep.subr.mxu0 0.0
        %813 = vmatpush1.msra.mxu0 0.0
        %814 = vmatprep.subr.mxu0 0.0
        %815 = vmatpush1.msra.mxu0 0.0
        %816 = vmatprep.subr.mxu0 0.0
        %817 = vmatpush1.msra.mxu0 0.0
        %818 = vmatprep.subr.mxu0 0.0
        %819 = vmatpush1.msra.mxu0 0.0
        %820 = vmatprep.subr.mxu0 0.0
        %821 = vmatpush1.msra.mxu0 0.0
        %822 = vmatprep.subr.mxu0 0.0
        %823 = vmatpush1.msra.mxu0 %v36
        %824 = vmatprep.subr.mxu0 0.0
        %825 = vmatpush1.msra.mxu0 %v35
        %826 = vmatprep.subr.mxu0 0.0
        %827 = vmatpush1.msra.mxu0 %v34
        %828 = vmatprep.subr.mxu0 0.0
        %829 = vmatpush1.msra.mxu0 %v33
        %830 = vmatprep.subr.mxu0 0.0
        %831 = vmatpush2.msra.mxu0 0.0
        %832 = vmatprep.subr.mxu0 0.0
        %833 = vmatpush2.msra.mxu0 0.0
        %834 = vmatprep.subr.mxu0 0.0
        %835 = vmatpush2.msra.mxu0 0.0
        %836 = vmatprep.subr.mxu0 0.0
        %837 = vmatpush2.msra.mxu0 0.0
        %838 = vmatprep.subr.mxu0 0.0
        %839 = vmatpush2.msra.mxu0 0.0
        %840 = vmatprep.subr.mxu0 0.0
        %841 = vmatpush2.msra.mxu0 0.0
        %842 = vmatprep.subr.mxu0 0.0
        %843 = vmatpush2.msra.mxu0 0.0
        %844 = vmatprep.subr.mxu0 0.0
        %845 = vmatpush2.msra.mxu0 0.0
        %846 = vmatprep.subr.mxu0 0.0
        %847 = vmatpush2.msra.mxu0 0.0
        %848 = vmatprep.subr.mxu0 0.0
        %849 = vmatpush2.msra.mxu0 0.0
        %850 = vmatprep.subr.mxu0 0.0
        %851 = vmatpush2.msra.mxu0 0.0
        %852 = vmatprep.subr.mxu0 0.0
        %853 = vmatpush2.msra.mxu0 0.0
        %854 = vmatprep.subr.mxu0 0.0
        %855 = vmatpush2.msra.mxu0 0.0
        %856 = vmatprep.subr.mxu0 0.0
        %857 = vmatpush2.msra.mxu0 0.0
        %858 = vmatprep.subr.mxu0 0.0
        %859 = vmatpush2.msra.mxu0 0.0
        %860 = vmatprep.subr.mxu0 0.0
        %861 = vmatpush2.msra.mxu0 0.0
        %862 = vmatprep.mubr.f32.mxu0 0.0
        %863 = vmatmul.mubr.f32.gmra.mxu0 %v796
        %v864 = vpop.f32.mrf.mxu0
        %v865 = vadd.f32 %v49, %v864
        %v866 = vpop.f32.mrf.mxu0
        %867 = vdwg.mxu0
        %868 = vrot.lane.b32.xlu0 %v720, 112
        %v869 = vpop.permute.xlu0 %868
        %872 = vrot.lane.b32.xlu0 %v865, 16
        %v873 = vpop.permute.xlu0 %872
        %v875 = vsel %vm234, %v869, %v873
        %v876 = vmul.f32 %v237, %v875
        %v877 = vadd.f32 %v720, %v876
        %v879 = vsel %vm79, %v877, 0
        %881 = vmatprep.subr.mxu0 0.0
        %882 = vmatpush1.msra.mxu0 0.0
        %883 = vmatprep.subr.mxu0 0.0
        %884 = vmatpush1.msra.mxu0 0.0
        %885 = vmatprep.subr.mxu0 0.0
        %886 = vmatpush1.msra.mxu0 0.0
        %887 = vmatprep.subr.mxu0 0.0
        %888 = vmatpush1.msra.mxu0 0.0
        %889 = vmatprep.subr.mxu0 0.0
        %890 = vmatpush1.msra.mxu0 0.0
        %891 = vmatprep.subr.mxu0 0.0
        %892 = vmatpush1.msra.mxu0 0.0
        %893 = vmatprep.subr.mxu0 0.0
        %894 = vmatpush1.msra.mxu0 0.0
        %895 = vmatprep.subr.mxu0 0.0
        %896 = vmatpush1.msra.mxu0 0.0
        %897 = vmatprep.subr.mxu0 0.0
        %898 = vmatpush1.msra.mxu0 0.0
        %899 = vmatprep.subr.mxu0 0.0
        %900 = vmatpush1.msra.mxu0 0.0
        %901 = vmatprep.subr.mxu0 0.0
        %902 = vmatpush1.msra.mxu0 0.0
        %903 = vmatprep.subr.mxu0 0.0
        %904 = vmatpush1.msra.mxu0 0.0
        %905 = vmatprep.subr.mxu0 0.0
        %906 = vmatpush1.msra.mxu0 %v32
        %907 = vmatprep.subr.mxu0 0.0
        %908 = vmatpush1.msra.mxu0 %v31
        %909 = vmatprep.subr.mxu0 0.0
        %910 = vmatpush1.msra.mxu0 %v30
        %911 = vmatprep.subr.mxu0 0.0
        %912 = vmatpush1.msra.mxu0 %v29
        %913 = vmatprep.subr.mxu0 0.0
        %914 = vmatpush2.msra.mxu0 0.0
        %915 = vmatprep.subr.mxu0 0.0
        %916 = vmatpush2.msra.mxu0 0.0
        %917 = vmatprep.subr.mxu0 0.0
        %918 = vmatpush2.msra.mxu0 0.0
        %919 = vmatprep.subr.mxu0 0.0
        %920 = vmatpush2.msra.mxu0 0.0
        %921 = vmatprep.subr.mxu0 0.0
        %922 = vmatpush2.msra.mxu0 0.0
        %923 = vmatprep.subr.mxu0 0.0
        %924 = vmatpush2.msra.mxu0 0.0
        %925 = vmatprep.subr.mxu0 0.0
        %926 = vmatpush2.msra.mxu0 0.0
        %927 = vmatprep.subr.mxu0 0.0
        %928 = vmatpush2.msra.mxu0 0.0
        %929 = vmatprep.subr.mxu0 0.0
        %930 = vmatpush2.msra.mxu0 0.0
        %931 = vmatprep.subr.mxu0 0.0
        %932 = vmatpush2.msra.mxu0 0.0
        %933 = vmatprep.subr.mxu0 0.0
        %934 = vmatpush2.msra.mxu0 0.0
        %935 = vmatprep.subr.mxu0 0.0
        %936 = vmatpush2.msra.mxu0 0.0
        %937 = vmatprep.subr.mxu0 0.0
        %938 = vmatpush2.msra.mxu0 0.0
        %939 = vmatprep.subr.mxu0 0.0
        %940 = vmatpush2.msra.mxu0 0.0
        %941 = vmatprep.subr.mxu0 0.0
        %942 = vmatpush2.msra.mxu0 0.0
        %943 = vmatprep.subr.mxu0 0.0
        %944 = vmatpush2.msra.mxu0 0.0
        %945 = vmatprep.mubr.f32.mxu0 0.0
        %946 = vmatmul.mubr.f32.gmra.mxu0 %v879
        %v947 = vpop.f32.mrf.mxu0
        %v948 = vadd.f32 %v42, %v947
        %v949 = vpop.f32.mrf.mxu0
        %950 = vdwg.mxu0
        %v951 = vtanh.pop %v948
        %v953 = vsel %vm79, %v951, 0
        %955 = vmatprep.subr.mxu0 0.0
        %956 = vmatpush1.msra.mxu0 0.0
        %957 = vmatprep.subr.mxu0 0.0
        %958 = vmatpush1.msra.mxu0 0.0
        %959 = vmatprep.subr.mxu0 0.0
        %960 = vmatpush1.msra.mxu0 0.0
        %961 = vmatprep.subr.mxu0 0.0
        %962 = vmatpush1.msra.mxu0 0.0
        %963 = vmatprep.subr.mxu0 0.0
        %964 = vmatpush1.msra.mxu0 0.0
        %965 = vmatprep.subr.mxu0 0.0
        %966 = vmatpush1.msra.mxu0 0.0
        %967 = vmatprep.subr.mxu0 0.0
        %968 = vmatpush1.msra.mxu0 0.0
        %969 = vmatprep.subr.mxu0 0.0
        %970 = vmatpush1.msra.mxu0 0.0
        %971 = vmatprep.subr.mxu0 0.0
        %972 = vmatpush1.msra.mxu0 0.0
        %973 = vmatprep.subr.mxu0 0.0
        %974 = vmatpush1.msra.mxu0 0.0
        %975 = vmatprep.subr.mxu0 0.0
        %976 = vmatpush1.msra.mxu0 0.0
        %977 = vmatprep.subr.mxu0 0.0
        %978 = vmatpush1.msra.mxu0 0.0
        %979 = vmatprep.subr.mxu0 0.0
        %980 = vmatpush1.msra.mxu0 %v36
        %981 = vmatprep.subr.mxu0 0.0
        %982 = vmatpush1.msra.mxu0 %v35
        %983 = vmatprep.subr.mxu0 0.0
        %984 = vmatpush1.msra.mxu0 %v34
        %985 = vmatprep.subr.mxu0 0.0
        %986 = vmatpush1.msra.mxu0 %v33
        %987 = vmatprep.subr.mxu0 0.0
        %988 = vmatpush2.msra.mxu0 0.0
        %989 = vmatprep.subr.mxu0 0.0
        %990 = vmatpush2.msra.mxu0 0.0
        %991 = vmatprep.subr.mxu0 0.0
        %992 = vmatpush2.msra.mxu0 0.0
        %993 = vmatprep.subr.mxu0 0.0
        %994 = vmatpush2.msra.mxu0 0.0
        %995 = vmatprep.subr.mxu0 0.0
        %996 = vmatpush2.msra.mxu0 0.0
        %997 = vmatprep.subr.mxu0 0.0
        %998 = vmatpush2.msra.mxu0 0.0
        %999 = vmatprep.subr.mxu0 0.0
        %1000 = vmatpush2.msra.mxu0 0.0
        %1001 = vmatprep.subr.mxu0 0.0
        %1002 = vmatpush2.msra.mxu0 0.0
        %1003 = vmatprep.subr.mxu0 0.0
        %1004 = vmatpush2.msra.mxu0 0.0
        %1005 = vmatprep.subr.mxu0 0.0
        %1006 = vmatpush2.msra.mxu0 0.0
        %1007 = vmatprep.subr.mxu0 0.0
        %1008 = vmatpush2.msra.mxu0 0.0
        %1009 = vmatprep.subr.mxu0 0.0
        %1010 = vmatpush2.msra.mxu0 0.0
        %1011 = vmatprep.subr.mxu0 0.0
        %1012 = vmatpush2.msra.mxu0 0.0
        %1013 = vmatprep.subr.mxu0 0.0
        %1014 = vmatpush2.msra.mxu0 0.0
        %1015 = vmatprep.subr.mxu0 0.0
        %1016 = vmatpush2.msra.mxu0 0.0
        %1017 = vmatprep.subr.mxu0 0.0
        %1018 = vmatpush2.msra.mxu0 0.0
        %1019 = vmatprep.mubr.f32.mxu0 0.0
        %1020 = vmatmul.mubr.f32.gmra.mxu0 %v953
        %v1021 = vpop.f32.mrf.mxu0
        %v1022 = vadd.f32 %v49, %v1021
        %v1023 = vpop.f32.mrf.mxu0
        %1024 = vdwg.mxu0
        %1025 = vrot.lane.b32.xlu0 %v877, 112
        %v1026 = vpop.permute.xlu0 %1025
        %1029 = vrot.lane.b32.xlu0 %v1022, 16
        %v1030 = vpop.permute.xlu0 %1029
        %v1032 = vsel %vm234, %v1026, %v1030
        %v1033 = vmul.f32 %v237, %v1032
        %v1034 = vadd.f32 %v720, %v1033
        %v1036 = vsel %vm79, %v1034, 0
        %1038 = vmatprep.subr.mxu0 0.0
        %1039 = vmatpush1.msra.mxu0 0.0
        %1040 = vmatprep.subr.mxu0 0.0
        %1041 = vmatpush1.msra.mxu0 0.0
        %1042 = vmatprep.subr.mxu0 0.0
        %1043 = vmatpush1.msra.mxu0 0.0
        %1044 = vmatprep.subr.mxu0 0.0
        %1045 = vmatpush1.msra.mxu0 0.0
        %1046 = vmatprep.subr.mxu0 0.0
        %1047 = vmatpush1.msra.mxu0 0.0
        %1048 = vmatprep.subr.mxu0 0.0
        %1049 = vmatpush1.msra.mxu0 0.0
        %1050 = vmatprep.subr.mxu0 0.0
        %1051 = vmatpush1.msra.mxu0 0.0
        %1052 = vmatprep.subr.mxu0 0.0
        %1053 = vmatpush1.msra.mxu0 0.0
        %1054 = vmatprep.subr.mxu0 0.0
        %1055 = vmatpush1.msra.mxu0 0.0
        %1056 = vmatprep.subr.mxu0 0.0
        %1057 = vmatpush1.msra.mxu0 0.0
        %1058 = vmatprep.subr.mxu0 0.0
        %1059 = vmatpush1.msra.mxu0 0.0
        %1060 = vmatprep.subr.mxu0 0.0
        %1061 = vmatpush1.msra.mxu0 0.0
        %1062 = vmatprep.subr.mxu0 0.0
        %1063 = vmatpush1.msra.mxu0 %v32
        %1064 = vmatprep.subr.mxu0 0.0
        %1065 = vmatpush1.msra.mxu0 %v31
        %1066 = vmatprep.subr.mxu0 0.0
        %1067 = vmatpush1.msra.mxu0 %v30
        %1068 = vmatprep.subr.mxu0 0.0
        %1069 = vmatpush1.msra.mxu0 %v29
        %1070 = vmatprep.subr.mxu0 0.0
        %1071 = vmatpush2.msra.mxu0 0.0
        %1072 = vmatprep.subr.mxu0 0.0
        %1073 = vmatpush2.msra.mxu0 0.0
        %1074 = vmatprep.subr.mxu0 0.0
        %1075 = vmatpush2.msra.mxu0 0.0
        %1076 = vmatprep.subr.mxu0 0.0
        %1077 = vmatpush2.msra.mxu0 0.0
        %1078 = vmatprep.subr.mxu0 0.0
        %1079 = vmatpush2.msra.mxu0 0.0
        %1080 = vmatprep.subr.mxu0 0.0
        %1081 = vmatpush2.msra.mxu0 0.0
        %1082 = vmatprep.subr.mxu0 0.0
        %1083 = vmatpush2.msra.mxu0 0.0
        %1084 = vmatprep.subr.mxu0 0.0
        %1085 = vmatpush2.msra.mxu0 0.0
        %1086 = vmatprep.subr.mxu0 0.0
        %1087 = vmatpush2.msra.mxu0 0.0
        %1088 = vmatprep.subr.mxu0 0.0
        %1089 = vmatpush2.msra.mxu0 0.0
        %1090 = vmatprep.subr.mxu0 0.0
        %1091 = vmatpush2.msra.mxu0 0.0
        %1092 = vmatprep.subr.mxu0 0.0
        %1093 = vmatpush2.msra.mxu0 0.0
        %1094 = vmatprep.subr.mxu0 0.0
        %1095 = vmatpush2.msra.mxu0 0.0
        %1096 = vmatprep.subr.mxu0 0.0
        %1097 = vmatpush2.msra.mxu0 0.0
        %1098 = vmatprep.subr.mxu0 0.0
        %1099 = vmatpush2.msra.mxu0 0.0
        %1100 = vmatprep.subr.mxu0 0.0
        %1101 = vmatpush2.msra.mxu0 0.0
        %1102 = vmatprep.mubr.f32.mxu0 0.0
        %1103 = vmatmul.mubr.f32.gmra.mxu0 %v1036
        %v1104 = vpop.f32.mrf.mxu0
        %v1105 = vadd.f32 %v42, %v1104
        %v1106 = vpop.f32.mrf.mxu0
        %1107 = vdwg.mxu0
        %v1108 = vtanh.pop %v1105
        %v1110 = vsel %vm79, %v1108, 0
        %1112 = vmatprep.subr.mxu0 0.0
        %1113 = vmatpush1.msra.mxu0 0.0
        %1114 = vmatprep.subr.mxu0 0.0
        %1115 = vmatpush1.msra.mxu0 0.0
        %1116 = vmatprep.subr.mxu0 0.0
        %1117 = vmatpush1.msra.mxu0 0.0
        %1118 = vmatprep.subr.mxu0 0.0
        %1119 = vmatpush1.msra.mxu0 0.0
        %1120 = vmatprep.subr.mxu0 0.0
        %1121 = vmatpush1.msra.mxu0 0.0
        %1122 = vmatprep.subr.mxu0 0.0
        %1123 = vmatpush1.msra.mxu0 0.0
        %1124 = vmatprep.subr.mxu0 0.0
        %1125 = vmatpush1.msra.mxu0 0.0
        %1126 = vmatprep.subr.mxu0 0.0
        %1127 = vmatpush1.msra.mxu0 0.0
        %1128 = vmatprep.subr.mxu0 0.0
        %1129 = vmatpush1.msra.mxu0 0.0
        %1130 = vmatprep.subr.mxu0 0.0
        %1131 = vmatpush1.msra.mxu0 0.0
        %1132 = vmatprep.subr.mxu0 0.0
        %1133 = vmatpush1.msra.mxu0 0.0
        %1134 = vmatprep.subr.mxu0 0.0
        %1135 = vmatpush1.msra.mxu0 0.0
        %1136 = vmatprep.subr.mxu0 0.0
        %1137 = vmatpush1.msra.mxu0 %v36
        %1138 = vmatprep.subr.mxu0 0.0
        %1139 = vmatpush1.msra.mxu0 %v35
        %1140 = vmatprep.subr.mxu0 0.0
        %1141 = vmatpush1.msra.mxu0 %v34
        %1142 = vmatprep.subr.mxu0 0.0
        %1143 = vmatpush1.msra.mxu0 %v33
        %1144 = vmatprep.subr.mxu0 0.0
        %1145 = vmatpush2.msra.mxu0 0.0
        %1146 = vmatprep.subr.mxu0 0.0
        %1147 = vmatpush2.msra.mxu0 0.0
        %1148 = vmatprep.subr.mxu0 0.0
        %1149 = vmatpush2.msra.mxu0 0.0
        %1150 = vmatprep.subr.mxu0 0.0
        %1151 = vmatpush2.msra.mxu0 0.0
        %1152 = vmatprep.subr.mxu0 0.0
        %1153 = vmatpush2.msra.mxu0 0.0
        %1154 = vmatprep.subr.mxu0 0.0
        %1155 = vmatpush2.msra.mxu0 0.0
        %1156 = vmatprep.subr.mxu0 0.0
        %1157 = vmatpush2.msra.mxu0 0.0
        %1158 = vmatprep.subr.mxu0 0.0
        %1159 = vmatpush2.msra.mxu0 0.0
        %1160 = vmatprep.subr.mxu0 0.0
        %1161 = vmatpush2.msra.mxu0 0.0
        %1162 = vmatprep.subr.mxu0 0.0
        %1163 = vmatpush2.msra.mxu0 0.0
        %1164 = vmatprep.subr.mxu0 0.0
        %1165 = vmatpush2.msra.mxu0 0.0
        %1166 = vmatprep.subr.mxu0 0.0
        %1167 = vmatpush2.msra.mxu0 0.0
        %1168 = vmatprep.subr.mxu0 0.0
        %1169 = vmatpush2.msra.mxu0 0.0
        %1170 = vmatprep.subr.mxu0 0.0
        %1171 = vmatpush2.msra.mxu0 0.0
        %1172 = vmatprep.subr.mxu0 0.0
        %1173 = vmatpush2.msra.mxu0 0.0
        %1174 = vmatprep.subr.mxu0 0.0
        %1175 = vmatpush2.msra.mxu0 0.0
        %1176 = vmatprep.mubr.f32.mxu0 0.0
        %1177 = vmatmul.mubr.f32.gmra.mxu0 %v1110
        %v1178 = vpop.f32.mrf.mxu0
        %v1179 = vadd.f32 %v49, %v1178
        %v1180 = vpop.f32.mrf.mxu0
        %1181 = vdwg.mxu0
        %1182 = vrot.lane.b32.xlu0 %v1034, 112
        %v1183 = vpop.permute.xlu0 %1182
        %1186 = vrot.lane.b32.xlu0 %v1179, 16
        %v1187 = vpop.permute.xlu0 %1186
        %v1189 = vsel %vm234, %v1183, %v1187
        %v1190 = vmul.f32 %v552, %v1189
        %v1191 = vadd.f32 %v720, %v1190
        %v1193 = vsel %vm79, %v1191, 0
        %1195 = vmatprep.subr.mxu0 0.0
        %1196 = vmatpush1.msra.mxu0 0.0
        %1197 = vmatprep.subr.mxu0 0.0
        %1198 = vmatpush1.msra.mxu0 0.0
        %1199 = vmatprep.subr.mxu0 0.0
        %1200 = vmatpush1.msra.mxu0 0.0
        %1201 = vmatprep.subr.mxu0 0.0
        %1202 = vmatpush1.msra.mxu0 0.0
        %1203 = vmatprep.subr.mxu0 0.0
        %1204 = vmatpush1.msra.mxu0 0.0
        %1205 = vmatprep.subr.mxu0 0.0
        %1206 = vmatpush1.msra.mxu0 0.0
        %1207 = vmatprep.subr.mxu0 0.0
        %1208 = vmatpush1.msra.mxu0 0.0
        %1209 = vmatprep.subr.mxu0 0.0
        %1210 = vmatpush1.msra.mxu0 0.0
        %1211 = vmatprep.subr.mxu0 0.0
        %1212 = vmatpush1.msra.mxu0 0.0
        %1213 = vmatprep.subr.mxu0 0.0
        %1214 = vmatpush1.msra.mxu0 0.0
        %1215 = vmatprep.subr.mxu0 0.0
        %1216 = vmatpush1.msra.mxu0 0.0
        %1217 = vmatprep.subr.mxu0 0.0
        %1218 = vmatpush1.msra.mxu0 0.0
        %1219 = vmatprep.subr.mxu0 0.0
        %1220 = vmatpush1.msra.mxu0 %v32
        %1221 = vmatprep.subr.mxu0 0.0
        %1222 = vmatpush1.msra.mxu0 %v31
        %1223 = vmatprep.subr.mxu0 0.0
        %1224 = vmatpush1.msra.mxu0 %v30
        %1225 = vmatprep.subr.mxu0 0.0
        %1226 = vmatpush1.msra.mxu0 %v29
        %1227 = vmatprep.subr.mxu0 0.0
        %1228 = vmatpush2.msra.mxu0 0.0
        %1229 = vmatprep.subr.mxu0 0.0
        %1230 = vmatpush2.msra.mxu0 0.0
        %1231 = vmatprep.subr.mxu0 0.0
        %1232 = vmatpush2.msra.mxu0 0.0
        %1233 = vmatprep.subr.mxu0 0.0
        %1234 = vmatpush2.msra.mxu0 0.0
        %1235 = vmatprep.subr.mxu0 0.0
        %1236 = vmatpush2.msra.mxu0 0.0
        %1237 = vmatprep.subr.mxu0 0.0
        %1238 = vmatpush2.msra.mxu0 0.0
        %1239 = vmatprep.subr.mxu0 0.0
        %1240 = vmatpush2.msra.mxu0 0.0
        %1241 = vmatprep.subr.mxu0 0.0
        %1242 = vmatpush2.msra.mxu0 0.0
        %1243 = vmatprep.subr.mxu0 0.0
        %1244 = vmatpush2.msra.mxu0 0.0
        %1245 = vmatprep.subr.mxu0 0.0
        %1246 = vmatpush2.msra.mxu0 0.0
        %1247 = vmatprep.subr.mxu0 0.0
        %1248 = vmatpush2.msra.mxu0 0.0
        %1249 = vmatprep.subr.mxu0 0.0
        %1250 = vmatpush2.msra.mxu0 0.0
        %1251 = vmatprep.subr.mxu0 0.0
        %1252 = vmatpush2.msra.mxu0 0.0
        %1253 = vmatprep.subr.mxu0 0.0
        %1254 = vmatpush2.msra.mxu0 0.0
        %1255 = vmatprep.subr.mxu0 0.0
        %1256 = vmatpush2.msra.mxu0 0.0
        %1257 = vmatprep.subr.mxu0 0.0
        %1258 = vmatpush2.msra.mxu0 0.0
        %1259 = vmatprep.mubr.f32.mxu0 0.0
        %1260 = vmatmul.mubr.f32.gmra.mxu0 %v1193
        %v1261 = vpop.f32.mrf.mxu0
        %v1262 = vadd.f32 %v42, %v1261
        %v1263 = vpop.f32.mrf.mxu0
        %1264 = vdwg.mxu0
        %v1265 = vtanh.pop %v1262
        %v1267 = vsel %vm79, %v1265, 0
        %1269 = vmatprep.subr.mxu0 0.0
        %1270 = vmatpush1.msra.mxu0 0.0
        %1271 = vmatprep.subr.mxu0 0.0
        %1272 = vmatpush1.msra.mxu0 0.0
        %1273 = vmatprep.subr.mxu0 0.0
        %1274 = vmatpush1.msra.mxu0 0.0
        %1275 = vmatprep.subr.mxu0 0.0
        %1276 = vmatpush1.msra.mxu0 0.0
        %1277 = vmatprep.subr.mxu0 0.0
        %1278 = vmatpush1.msra.mxu0 0.0
        %1279 = vmatprep.subr.mxu0 0.0
        %1280 = vmatpush1.msra.mxu0 0.0
        %1281 = vmatprep.subr.mxu0 0.0
        %1282 = vmatpush1.msra.mxu0 0.0
        %1283 = vmatprep.subr.mxu0 0.0
        %1284 = vmatpush1.msra.mxu0 0.0
        %1285 = vmatprep.subr.mxu0 0.0
        %1286 = vmatpush1.msra.mxu0 0.0
        %1287 = vmatprep.subr.mxu0 0.0
        %1288 = vmatpush1.msra.mxu0 0.0
        %1289 = vmatprep.subr.mxu0 0.0
        %1290 = vmatpush1.msra.mxu0 0.0
        %1291 = vmatprep.subr.mxu0 0.0
        %1292 = vmatpush1.msra.mxu0 0.0
        %1293 = vmatprep.subr.mxu0 0.0
        %1294 = vmatpush1.msra.mxu0 %v36
        %1295 = vmatprep.subr.mxu0 0.0
        %1296 = vmatpush1.msra.mxu0 %v35
        %1297 = vmatprep.subr.mxu0 0.0
        %1298 = vmatpush1.msra.mxu0 %v34
        %1299 = vmatprep.subr.mxu0 0.0
        %1300 = vmatpush1.msra.mxu0 %v33
        %1301 = vmatprep.subr.mxu0 0.0
        %1302 = vmatpush2.msra.mxu0 0.0
        %1303 = vmatprep.subr.mxu0 0.0
        %1304 = vmatpush2.msra.mxu0 0.0
        %1305 = vmatprep.subr.mxu0 0.0
        %1306 = vmatpush2.msra.mxu0 0.0
        %1307 = vmatprep.subr.mxu0 0.0
        %1308 = vmatpush2.msra.mxu0 0.0
        %1309 = vmatprep.subr.mxu0 0.0
        %1310 = vmatpush2.msra.mxu0 0.0
        %1311 = vmatprep.subr.mxu0 0.0
        %1312 = vmatpush2.msra.mxu0 0.0
        %1313 = vmatprep.subr.mxu0 0.0
        %1314 = vmatpush2.msra.mxu0 0.0
        %1315 = vmatprep.subr.mxu0 0.0
        %1316 = vmatpush2.msra.mxu0 0.0
        %1317 = vmatprep.subr.mxu0 0.0
        %1318 = vmatpush2.msra.mxu0 0.0
        %1319 = vmatprep.subr.mxu0 0.0
        %1320 = vmatpush2.msra.mxu0 0.0
        %1321 = vmatprep.subr.mxu0 0.0
        %1322 = vmatpush2.msra.mxu0 0.0
        %1323 = vmatprep.subr.mxu0 0.0
        %1324 = vmatpush2.msra.mxu0 0.0
        %1325 = vmatprep.subr.mxu0 0.0
        %1326 = vmatpush2.msra.mxu0 0.0
        %1327 = vmatprep.subr.mxu0 0.0
        %1328 = vmatpush2.msra.mxu0 0.0
        %1329 = vmatprep.subr.mxu0 0.0
        %1330 = vmatpush2.msra.mxu0 0.0
        %1331 = vmatprep.subr.mxu0 0.0
        %1332 = vmatpush2.msra.mxu0 0.0
        %1333 = vmatprep.mubr.f32.mxu0 0.0
        %1334 = vmatmul.mubr.f32.gmra.mxu0 %v1267
        %v1335 = vpop.f32.mrf.mxu0
        %v1336 = vadd.f32 %v49, %v1335
        %v1337 = vpop.f32.mrf.mxu0
        %1338 = vdwg.mxu0
        %1339 = vrot.lane.b32.xlu0 %v1191, 112
        %v1340 = vpop.permute.xlu0 %1339
        %1343 = vrot.lane.b32.xlu0 %v1336, 16
        %v1344 = vpop.permute.xlu0 %1343
        %v1346 = vsel %vm234, %v1340, %v1344
        %v1347 = vmul.f32 %v1032, 2.0
        %v1348 = vadd.f32 %v875, %v1347
        %v1349 = vmul.f32 %v1189, 2.0
        %v1350 = vadd.f32 %v1348, %v1349
        %v1351 = vadd.f32 %v1350, %v1346
        %v1352 = vmul.f32 %v718, %v1351
        %v1353 = vadd.f32 %v720, %v1352
        %v1355 = vsel %vm79, %v1353, 0
        %1357 = vmatprep.subr.mxu0 0.0
        %1358 = vmatpush1.msra.mxu0 0.0
        %1359 = vmatprep.subr.mxu0 0.0
        %1360 = vmatpush1.msra.mxu0 0.0
        %1361 = vmatprep.subr.mxu0 0.0
        %1362 = vmatpush1.msra.mxu0 0.0
        %1363 = vmatprep.subr.mxu0 0.0
        %1364 = vmatpush1.msra.mxu0 0.0
        %1365 = vmatprep.subr.mxu0 0.0
        %1366 = vmatpush1.msra.mxu0 0.0
        %1367 = vmatprep.subr.mxu0 0.0
        %1368 = vmatpush1.msra.mxu0 0.0
        %1369 = vmatprep.subr.mxu0 0.0
        %1370 = vmatpush1.msra.mxu0 0.0
        %1371 = vmatprep.subr.mxu0 0.0
        %1372 = vmatpush1.msra.mxu0 0.0
        %1373 = vmatprep.subr.mxu0 0.0
        %1374 = vmatpush1.msra.mxu0 0.0
        %1375 = vmatprep.subr.mxu0 0.0
        %1376 = vmatpush1.msra.mxu0 0.0
        %1377 = vmatprep.subr.mxu0 0.0
        %1378 = vmatpush1.msra.mxu0 0.0
        %1379 = vmatprep.subr.mxu0 0.0
        %1380 = vmatpush1.msra.mxu0 0.0
        %1381 = vmatprep.subr.mxu0 0.0
        %1382 = vmatpush1.msra.mxu0 %v32
        %1383 = vmatprep.subr.mxu0 0.0
        %1384 = vmatpush1.msra.mxu0 %v31
        %1385 = vmatprep.subr.mxu0 0.0
        %1386 = vmatpush1.msra.mxu0 %v30
        %1387 = vmatprep.subr.mxu0 0.0
        %1388 = vmatpush1.msra.mxu0 %v29
        %1389 = vmatprep.subr.mxu0 0.0
        %1390 = vmatpush2.msra.mxu0 0.0
        %1391 = vmatprep.subr.mxu0 0.0
        %1392 = vmatpush2.msra.mxu0 0.0
        %1393 = vmatprep.subr.mxu0 0.0
        %1394 = vmatpush2.msra.mxu0 0.0
        %1395 = vmatprep.subr.mxu0 0.0
        %1396 = vmatpush2.msra.mxu0 0.0
        %1397 = vmatprep.subr.mxu0 0.0
        %1398 = vmatpush2.msra.mxu0 0.0
        %1399 = vmatprep.subr.mxu0 0.0
        %1400 = vmatpush2.msra.mxu0 0.0
        %1401 = vmatprep.subr.mxu0 0.0
        %1402 = vmatpush2.msra.mxu0 0.0
        %1403 = vmatprep.subr.mxu0 0.0
        %1404 = vmatpush2.msra.mxu0 0.0
        %1405 = vmatprep.subr.mxu0 0.0
        %1406 = vmatpush2.msra.mxu0 0.0
        %1407 = vmatprep.subr.mxu0 0.0
        %1408 = vmatpush2.msra.mxu0 0.0
        %1409 = vmatprep.subr.mxu0 0.0
        %1410 = vmatpush2.msra.mxu0 0.0
        %1411 = vmatprep.subr.mxu0 0.0
        %1412 = vmatpush2.msra.mxu0 0.0
        %1413 = vmatprep.subr.mxu0 0.0
        %1414 = vmatpush2.msra.mxu0 0.0
        %1415 = vmatprep.subr.mxu0 0.0
        %1416 = vmatpush2.msra.mxu0 0.0
        %1417 = vmatprep.subr.mxu0 0.0
        %1418 = vmatpush2.msra.mxu0 0.0
        %1419 = vmatprep.subr.mxu0 0.0
        %1420 = vmatpush2.msra.mxu0 0.0
        %1421 = vmatprep.mubr.f32.mxu0 0.0
        %1422 = vmatmul.mubr.f32.gmra.mxu0 %v1355
        %v1423 = vpop.f32.mrf.mxu0
        %v1424 = vadd.f32 %v42, %v1423
        %v1425 = vpop.f32.mrf.mxu0
        %1426 = vdwg.mxu0
        %v1427 = vtanh.pop %v1424
        %v1429 = vsel %vm79, %v1427, 0
        %1431 = vmatprep.subr.mxu0 0.0
        %1432 = vmatpush1.msra.mxu0 0.0
        %1433 = vmatprep.subr.mxu0 0.0
        %1434 = vmatpush1.msra.mxu0 0.0
        %1435 = vmatprep.subr.mxu0 0.0
        %1436 = vmatpush1.msra.mxu0 0.0
        %1437 = vmatprep.subr.mxu0 0.0
        %1438 = vmatpush1.msra.mxu0 0.0
        %1439 = vmatprep.subr.mxu0 0.0
        %1440 = vmatpush1.msra.mxu0 0.0
        %1441 = vmatprep.subr.mxu0 0.0
        %1442 = vmatpush1.msra.mxu0 0.0
        %1443 = vmatprep.subr.mxu0 0.0
        %1444 = vmatpush1.msra.mxu0 0.0
        %1445 = vmatprep.subr.mxu0 0.0
        %1446 = vmatpush1.msra.mxu0 0.0
        %1447 = vmatprep.subr.mxu0 0.0
        %1448 = vmatpush1.msra.mxu0 0.0
        %1449 = vmatprep.subr.mxu0 0.0
        %1450 = vmatpush1.msra.mxu0 0.0
        %1451 = vmatprep.subr.mxu0 0.0
        %1452 = vmatpush1.msra.mxu0 0.0
        %1453 = vmatprep.subr.mxu0 0.0
        %1454 = vmatpush1.msra.mxu0 0.0
        %1455 = vmatprep.subr.mxu0 0.0
        %1456 = vmatpush1.msra.mxu0 %v36
        %1457 = vmatprep.subr.mxu0 0.0
        %1458 = vmatpush1.msra.mxu0 %v35
        %1459 = vmatprep.subr.mxu0 0.0
        %1460 = vmatpush1.msra.mxu0 %v34
        %1461 = vmatprep.subr.mxu0 0.0
        %1462 = vmatpush1.msra.mxu0 %v33
        %1463 = vmatprep.subr.mxu0 0.0
        %1464 = vmatpush2.msra.mxu0 0.0
        %1465 = vmatprep.subr.mxu0 0.0
        %1466 = vmatpush2.msra.mxu0 0.0
        %1467 = vmatprep.subr.mxu0 0.0
        %1468 = vmatpush2.msra.mxu0 0.0
        %1469 = vmatprep.subr.mxu0 0.0
        %1470 = vmatpush2.msra.mxu0 0.0
        %1471 = vmatprep.subr.mxu0 0.0
        %1472 = vmatpush2.msra.mxu0 0.0
        %1473 = vmatprep.subr.mxu0 0.0
        %1474 = vmatpush2.msra.mxu0 0.0
        %1475 = vmatprep.subr.mxu0 0.0
        %1476 = vmatpush2.msra.mxu0 0.0
        %1477 = vmatprep.subr.mxu0 0.0
        %1478 = vmatpush2.msra.mxu0 0.0
        %1479 = vmatprep.subr.mxu0 0.0
        %1480 = vmatpush2.msra.mxu0 0.0
        %1481 = vmatprep.subr.mxu0 0.0
        %1482 = vmatpush2.msra.mxu0 0.0
        %1483 = vmatprep.subr.mxu0 0.0
        %1484 = vmatpush2.msra.mxu0 0.0
        %1485 = vmatprep.subr.mxu0 0.0
        %1486 = vmatpush2.msra.mxu0 0.0
        %1487 = vmatprep.subr.mxu0 0.0
        %1488 = vmatpush2.msra.mxu0 0.0
        %1489 = vmatprep.subr.mxu0 0.0
        %1490 = vmatpush2.msra.mxu0 0.0
        %1491 = vmatprep.subr.mxu0 0.0
        %1492 = vmatpush2.msra.mxu0 0.0
        %1493 = vmatprep.subr.mxu0 0.0
        %1494 = vmatpush2.msra.mxu0 0.0
        %1495 = vmatprep.mubr.f32.mxu0 0.0
        %1496 = vmatmul.mubr.f32.gmra.mxu0 %v1429
        %v1497 = vpop.f32.mrf.mxu0
        %v1498 = vadd.f32 %v49, %v1497
        %v1499 = vpop.f32.mrf.mxu0
        %1500 = vdwg.mxu0
        %1501 = vrot.lane.b32.xlu0 %v1353, 112
        %v1502 = vpop.permute.xlu0 %1501
        %1505 = vrot.lane.b32.xlu0 %v1498, 16
        %v1506 = vpop.permute.xlu0 %1505
        %v1508 = vsel %vm234, %v1502, %v1506
        %v1509 = vmul.f32 %v237, %v1508
        %v1510 = vadd.f32 %v1353, %v1509
        %v1512 = vsel %vm79, %v1510, 0
        %1514 = vmatprep.subr.mxu0 0.0
        %1515 = vmatpush1.msra.mxu0 0.0
        %1516 = vmatprep.subr.mxu0 0.0
        %1517 = vmatpush1.msra.mxu0 0.0
        %1518 = vmatprep.subr.mxu0 0.0
        %1519 = vmatpush1.msra.mxu0 0.0
        %1520 = vmatprep.subr.mxu0 0.0
        %1521 = vmatpush1.msra.mxu0 0.0
        %1522 = vmatprep.subr.mxu0 0.0
        %1523 = vmatpush1.msra.mxu0 0.0
        %1524 = vmatprep.subr.mxu0 0.0
        %1525 = vmatpush1.msra.mxu0 0.0
        %1526 = vmatprep.subr.mxu0 0.0
        %1527 = vmatpush1.msra.mxu0 0.0
        %1528 = vmatprep.subr.mxu0 0.0
        %1529 = vmatpush1.msra.mxu0 0.0
        %1530 = vmatprep.subr.mxu0 0.0
        %1531 = vmatpush1.msra.mxu0 0.0
        %1532 = vmatprep.subr.mxu0 0.0
        %1533 = vmatpush1.msra.mxu0 0.0
        %1534 = vmatprep.subr.mxu0 0.0
        %1535 = vmatpush1.msra.mxu0 0.0
        %1536 = vmatprep.subr.mxu0 0.0
        %1537 = vmatpush1.msra.mxu0 0.0
        %1538 = vmatprep.subr.mxu0 0.0
        %1539 = vmatpush1.msra.mxu0 %v32
        %1540 = vmatprep.subr.mxu0 0.0
        %1541 = vmatpush1.msra.mxu0 %v31
        %1542 = vmatprep.subr.mxu0 0.0
        %1543 = vmatpush1.msra.mxu0 %v30
        %1544 = vmatprep.subr.mxu0 0.0
        %1545 = vmatpush1.msra.mxu0 %v29
        %1546 = vmatprep.subr.mxu0 0.0
        %1547 = vmatpush2.msra.mxu0 0.0
        %1548 = vmatprep.subr.mxu0 0.0
        %1549 = vmatpush2.msra.mxu0 0.0
        %1550 = vmatprep.subr.mxu0 0.0
        %1551 = vmatpush2.msra.mxu0 0.0
        %1552 = vmatprep.subr.mxu0 0.0
        %1553 = vmatpush2.msra.mxu0 0.0
        %1554 = vmatprep.subr.mxu0 0.0
        %1555 = vmatpush2.msra.mxu0 0.0
        %1556 = vmatprep.subr.mxu0 0.0
        %1557 = vmatpush2.msra.mxu0 0.0
        %1558 = vmatprep.subr.mxu0 0.0
        %1559 = vmatpush2.msra.mxu0 0.0
        %1560 = vmatprep.subr.mxu0 0.0
        %1561 = vmatpush2.msra.mxu0 0.0
        %1562 = vmatprep.subr.mxu0 0.0
        %1563 = vmatpush2.msra.mxu0 0.0
        %1564 = vmatprep.subr.mxu0 0.0
        %1565 = vmatpush2.msra.mxu0 0.0
        %1566 = vmatprep.subr.mxu0 0.0
        %1567 = vmatpush2.msra.mxu0 0.0
        %1568 = vmatprep.subr.mxu0 0.0
        %1569 = vmatpush2.msra.mxu0 0.0
        %1570 = vmatprep.subr.mxu0 0.0
        %1571 = vmatpush2.msra.mxu0 0.0
        %1572 = vmatprep.subr.mxu0 0.0
        %1573 = vmatpush2.msra.mxu0 0.0
        %1574 = vmatprep.subr.mxu0 0.0
        %1575 = vmatpush2.msra.mxu0 0.0
        %1576 = vmatprep.subr.mxu0 0.0
        %1577 = vmatpush2.msra.mxu0 0.0
        %1578 = vmatprep.mubr.f32.mxu0 0.0
        %1579 = vmatmul.mubr.f32.gmra.mxu0 %v1512
        %v1580 = vpop.f32.mrf.mxu0
        %v1581 = vadd.f32 %v42, %v1580
        %v1582 = vpop.f32.mrf.mxu0
        %1583 = vdwg.mxu0
        %v1584 = vtanh.pop %v1581
        %v1586 = vsel %vm79, %v1584, 0
        %1588 = vmatprep.subr.mxu0 0.0
        %1589 = vmatpush1.msra.mxu0 0.0
        %1590 = vmatprep.subr.mxu0 0.0
        %1591 = vmatpush1.msra.mxu0 0.0
        %1592 = vmatprep.subr.mxu0 0.0
        %1593 = vmatpush1.msra.mxu0 0.0
        %1594 = vmatprep.subr.mxu0 0.0
        %1595 = vmatpush1.msra.mxu0 0.0
        %1596 = vmatprep.subr.mxu0 0.0
        %1597 = vmatpush1.msra.mxu0 0.0
        %1598 = vmatprep.subr.mxu0 0.0
        %1599 = vmatpush1.msra.mxu0 0.0
        %1600 = vmatprep.subr.mxu0 0.0
        %1601 = vmatpush1.msra.mxu0 0.0
        %1602 = vmatprep.subr.mxu0 0.0
        %1603 = vmatpush1.msra.mxu0 0.0
        %1604 = vmatprep.subr.mxu0 0.0
        %1605 = vmatpush1.msra.mxu0 0.0
        %1606 = vmatprep.subr.mxu0 0.0
        %1607 = vmatpush1.msra.mxu0 0.0
        %1608 = vmatprep.subr.mxu0 0.0
        %1609 = vmatpush1.msra.mxu0 0.0
        %1610 = vmatprep.subr.mxu0 0.0
        %1611 = vmatpush1.msra.mxu0 0.0
        %1612 = vmatprep.subr.mxu0 0.0
        %1613 = vmatpush1.msra.mxu0 %v36
        %1614 = vmatprep.subr.mxu0 0.0
        %1615 = vmatpush1.msra.mxu0 %v35
        %1616 = vmatprep.subr.mxu0 0.0
        %1617 = vmatpush1.msra.mxu0 %v34
        %1618 = vmatprep.subr.mxu0 0.0
        %1619 = vmatpush1.msra.mxu0 %v33
        %1620 = vmatprep.subr.mxu0 0.0
        %1621 = vmatpush2.msra.mxu0 0.0
        %1622 = vmatprep.subr.mxu0 0.0
        %1623 = vmatpush2.msra.mxu0 0.0
        %1624 = vmatprep.subr.mxu0 0.0
        %1625 = vmatpush2.msra.mxu0 0.0
        %1626 = vmatprep.subr.mxu0 0.0
        %1627 = vmatpush2.msra.mxu0 0.0
        %1628 = vmatprep.subr.mxu0 0.0
        %1629 = vmatpush2.msra.mxu0 0.0
        %1630 = vmatprep.subr.mxu0 0.0
        %1631 = vmatpush2.msra.mxu0 0.0
        %1632 = vmatprep.subr.mxu0 0.0
        %1633 = vmatpush2.msra.mxu0 0.0
        %1634 = vmatprep.subr.mxu0 0.0
        %1635 = vmatpush2.msra.mxu0 0.0
        %1636 = vmatprep.subr.mxu0 0.0
        %1637 = vmatpush2.msra.mxu0 0.0
        %1638 = vmatprep.subr.mxu0 0.0
        %1639 = vmatpush2.msra.mxu0 0.0
        %1640 = vmatprep.subr.mxu0 0.0
        %1641 = vmatpush2.msra.mxu0 0.0
        %1642 = vmatprep.subr.mxu0 0.0
        %1643 = vmatpush2.msra.mxu0 0.0
        %1644 = vmatprep.subr.mxu0 0.0
        %1645 = vmatpush2.msra.mxu0 0.0
        %1646 = vmatprep.subr.mxu0 0.0
        %1647 = vmatpush2.msra.mxu0 0.0
        %1648 = vmatprep.subr.mxu0 0.0
        %1649 = vmatpush2.msra.mxu0 0.0
        %1650 = vmatprep.subr.mxu0 0.0
        %1651 = vmatpush2.msra.mxu0 0.0
        %1652 = vmatprep.mubr.f32.mxu0 0.0
        %1653 = vmatmul.mubr.f32.gmra.mxu0 %v1586
        %v1654 = vpop.f32.mrf.mxu0
        %v1655 = vadd.f32 %v49, %v1654
        %v1656 = vpop.f32.mrf.mxu0
        %1657 = vdwg.mxu0
        %1658 = vrot.lane.b32.xlu0 %v1510, 112
        %v1659 = vpop.permute.xlu0 %1658
        %1662 = vrot.lane.b32.xlu0 %v1655, 16
        %v1663 = vpop.permute.xlu0 %1662
        %v1665 = vsel %vm234, %v1659, %v1663
        %v1666 = vmul.f32 %v237, %v1665
        %v1667 = vadd.f32 %v1353, %v1666
        %v1669 = vsel %vm79, %v1667, 0
        %1671 = vmatprep.subr.mxu0 0.0
        %1672 = vmatpush1.msra.mxu0 0.0
        %1673 = vmatprep.subr.mxu0 0.0
        %1674 = vmatpush1.msra.mxu0 0.0
        %1675 = vmatprep.subr.mxu0 0.0
        %1676 = vmatpush1.msra.mxu0 0.0
        %1677 = vmatprep.subr.mxu0 0.0
        %1678 = vmatpush1.msra.mxu0 0.0
        %1679 = vmatprep.subr.mxu0 0.0
        %1680 = vmatpush1.msra.mxu0 0.0
        %1681 = vmatprep.subr.mxu0 0.0
        %1682 = vmatpush1.msra.mxu0 0.0
        %1683 = vmatprep.subr.mxu0 0.0
        %1684 = vmatpush1.msra.mxu0 0.0
        %1685 = vmatprep.subr.mxu0 0.0
        %1686 = vmatpush1.msra.mxu0 0.0
        %1687 = vmatprep.subr.mxu0 0.0
        %1688 = vmatpush1.msra.mxu0 0.0
        %1689 = vmatprep.subr.mxu0 0.0
        %1690 = vmatpush1.msra.mxu0 0.0
        %1691 = vmatprep.subr.mxu0 0.0
        %1692 = vmatpush1.msra.mxu0 0.0
        %1693 = vmatprep.subr.mxu0 0.0
        %1694 = vmatpush1.msra.mxu0 0.0
        %1695 = vmatprep.subr.mxu0 0.0
        %1696 = vmatpush1.msra.mxu0 %v32
        %1697 = vmatprep.subr.mxu0 0.0
        %1698 = vmatpush1.msra.mxu0 %v31
        %1699 = vmatprep.subr.mxu0 0.0
        %1700 = vmatpush1.msra.mxu0 %v30
        %1701 = vmatprep.subr.mxu0 0.0
        %1702 = vmatpush1.msra.mxu0 %v29
        %1703 = vmatprep.subr.mxu0 0.0
        %1704 = vmatpush2.msra.mxu0 0.0
        %1705 = vmatprep.subr.mxu0 0.0
        %1706 = vmatpush2.msra.mxu0 0.0
        %1707 = vmatprep.subr.mxu0 0.0
        %1708 = vmatpush2.msra.mxu0 0.0
        %1709 = vmatprep.subr.mxu0 0.0
        %1710 = vmatpush2.msra.mxu0 0.0
        %1711 = vmatprep.subr.mxu0 0.0
        %1712 = vmatpush2.msra.mxu0 0.0
        %1713 = vmatprep.subr.mxu0 0.0
        %1714 = vmatpush2.msra.mxu0 0.0
        %1715 = vmatprep.subr.mxu0 0.0
        %1716 = vmatpush2.msra.mxu0 0.0
        %1717 = vmatprep.subr.mxu0 0.0
        %1718 = vmatpush2.msra.mxu0 0.0
        %1719 = vmatprep.subr.mxu0 0.0
        %1720 = vmatpush2.msra.mxu0 0.0
        %1721 = vmatprep.subr.mxu0 0.0
        %1722 = vmatpush2.msra.mxu0 0.0
        %1723 = vmatprep.subr.mxu0 0.0
        %1724 = vmatpush2.msra.mxu0 0.0
        %1725 = vmatprep.subr.mxu0 0.0
        %1726 = vmatpush2.msra.mxu0 0.0
        %1727 = vmatprep.subr.mxu0 0.0
        %1728 = vmatpush2.msra.mxu0 0.0
        %1729 = vmatprep.subr.mxu0 0.0
        %1730 = vmatpush2.msra.mxu0 0.0
        %1731 = vmatprep.subr.mxu0 0.0
        %1732 = vmatpush2.msra.mxu0 0.0
        %1733 = vmatprep.subr.mxu0 0.0
        %1734 = vmatpush2.msra.mxu0 0.0
        %1735 = vmatprep.mubr.f32.mxu0 0.0
        %1736 = vmatmul.mubr.f32.gmra.mxu0 %v1669
        %v1737 = vpop.f32.mrf.mxu0
        %v1738 = vadd.f32 %v42, %v1737
        %v1739 = vpop.f32.mrf.mxu0
        %1740 = vdwg.mxu0
        %v1741 = vtanh.pop %v1738
        %v1743 = vsel %vm79, %v1741, 0
        %1745 = vmatprep.subr.mxu0 0.0
        %1746 = vmatpush1.msra.mxu0 0.0
        %1747 = vmatprep.subr.mxu0 0.0
        %1748 = vmatpush1.msra.mxu0 0.0
        %1749 = vmatprep.subr.mxu0 0.0
        %1750 = vmatpush1.msra.mxu0 0.0
        %1751 = vmatprep.subr.mxu0 0.0
        %1752 = vmatpush1.msra.mxu0 0.0
        %1753 = vmatprep.subr.mxu0 0.0
        %1754 = vmatpush1.msra.mxu0 0.0
        %1755 = vmatprep.subr.mxu0 0.0
        %1756 = vmatpush1.msra.mxu0 0.0
        %1757 = vmatprep.subr.mxu0 0.0
        %1758 = vmatpush1.msra.mxu0 0.0
        %1759 = vmatprep.subr.mxu0 0.0
        %1760 = vmatpush1.msra.mxu0 0.0
        %1761 = vmatprep.subr.mxu0 0.0
        %1762 = vmatpush1.msra.mxu0 0.0
        %1763 = vmatprep.subr.mxu0 0.0
        %1764 = vmatpush1.msra.mxu0 0.0
        %1765 = vmatprep.subr.mxu0 0.0
        %1766 = vmatpush1.msra.mxu0 0.0
        %1767 = vmatprep.subr.mxu0 0.0
        %1768 = vmatpush1.msra.mxu0 0.0
        %1769 = vmatprep.subr.mxu0 0.0
        %1770 = vmatpush1.msra.mxu0 %v36
        %1771 = vmatprep.subr.mxu0 0.0
        %1772 = vmatpush1.msra.mxu0 %v35
        %1773 = vmatprep.subr.mxu0 0.0
        %1774 = vmatpush1.msra.mxu0 %v34
        %1775 = vmatprep.subr.mxu0 0.0
        %1776 = vmatpush1.msra.mxu0 %v33
        %1777 = vmatprep.subr.mxu0 0.0
        %1778 = vmatpush2.msra.mxu0 0.0
        %1779 = vmatprep.subr.mxu0 0.0
        %1780 = vmatpush2.msra.mxu0 0.0
        %1781 = vmatprep.subr.mxu0 0.0
        %1782 = vmatpush2.msra.mxu0 0.0
        %1783 = vmatprep.subr.mxu0 0.0
        %1784 = vmatpush2.msra.mxu0 0.0
        %1785 = vmatprep.subr.mxu0 0.0
        %1786 = vmatpush2.msra.mxu0 0.0
        %1787 = vmatprep.subr.mxu0 0.0
        %1788 = vmatpush2.msra.mxu0 0.0
        %1789 = vmatprep.subr.mxu0 0.0
        %1790 = vmatpush2.msra.mxu0 0.0
        %1791 = vmatprep.subr.mxu0 0.0
        %1792 = vmatpush2.msra.mxu0 0.0
        %1793 = vmatprep.subr.mxu0 0.0
        %1794 = vmatpush2.msra.mxu0 0.0
        %1795 = vmatprep.subr.mxu0 0.0
        %1796 = vmatpush2.msra.mxu0 0.0
        %1797 = vmatprep.subr.mxu0 0.0
        %1798 = vmatpush2.msra.mxu0 0.0
        %1799 = vmatprep.subr.mxu0 0.0
        %1800 = vmatpush2.msra.mxu0 0.0
        %1801 = vmatprep.subr.mxu0 0.0
        %1802 = vmatpush2.msra.mxu0 0.0
        %1803 = vmatprep.subr.mxu0 0.0
        %1804 = vmatpush2.msra.mxu0 0.0
        %1805 = vmatprep.subr.mxu0 0.0
        %1806 = vmatpush2.msra.mxu0 0.0
        %1807 = vmatprep.subr.mxu0 0.0
        %1808 = vmatpush2.msra.mxu0 0.0
        %1809 = vmatprep.mubr.f32.mxu0 0.0
        %1810 = vmatmul.mubr.f32.gmra.mxu0 %v1743
        %v1811 = vpop.f32.mrf.mxu0
        %v1812 = vadd.f32 %v49, %v1811
        %v1813 = vpop.f32.mrf.mxu0
        %1814 = vdwg.mxu0
        %1815 = vrot.lane.b32.xlu0 %v1667, 112
        %v1816 = vpop.permute.xlu0 %1815
        %1819 = vrot.lane.b32.xlu0 %v1812, 16
        %v1820 = vpop.permute.xlu0 %1819
        %v1822 = vsel %vm234, %v1816, %v1820
        %v1823 = vmul.f32 %v552, %v1822
        %v1824 = vadd.f32 %v1353, %v1823
        %v1826 = vsel %vm79, %v1824, 0
        %1828 = vmatprep.subr.mxu0 0.0
        %1829 = vmatpush1.msra.mxu0 0.0
        %1830 = vmatprep.subr.mxu0 0.0
        %1831 = vmatpush1.msra.mxu0 0.0
        %1832 = vmatprep.subr.mxu0 0.0
        %1833 = vmatpush1.msra.mxu0 0.0
        %1834 = vmatprep.subr.mxu0 0.0
        %1835 = vmatpush1.msra.mxu0 0.0
        %1836 = vmatprep.subr.mxu0 0.0
        %1837 = vmatpush1.msra.mxu0 0.0
        %1838 = vmatprep.subr.mxu0 0.0
        %1839 = vmatpush1.msra.mxu0 0.0
        %1840 = vmatprep.subr.mxu0 0.0
        %1841 = vmatpush1.msra.mxu0 0.0
        %1842 = vmatprep.subr.mxu0 0.0
        %1843 = vmatpush1.msra.mxu0 0.0
        %1844 = vmatprep.subr.mxu0 0.0
        %1845 = vmatpush1.msra.mxu0 0.0
        %1846 = vmatprep.subr.mxu0 0.0
        %1847 = vmatpush1.msra.mxu0 0.0
        %1848 = vmatprep.subr.mxu0 0.0
        %1849 = vmatpush1.msra.mxu0 0.0
        %1850 = vmatprep.subr.mxu0 0.0
        %1851 = vmatpush1.msra.mxu0 0.0
        %1852 = vmatprep.subr.mxu0 0.0
        %1853 = vmatpush1.msra.mxu0 %v32
        %1854 = vmatprep.subr.mxu0 0.0
        %1855 = vmatpush1.msra.mxu0 %v31
        %1856 = vmatprep.subr.mxu0 0.0
        %1857 = vmatpush1.msra.mxu0 %v30
        %1858 = vmatprep.subr.mxu0 0.0
        %1859 = vmatpush1.msra.mxu0 %v29
        %1860 = vmatprep.subr.mxu0 0.0
        %1861 = vmatpush2.msra.mxu0 0.0
        %1862 = vmatprep.subr.mxu0 0.0
        %1863 = vmatpush2.msra.mxu0 0.0
        %1864 = vmatprep.subr.mxu0 0.0
        %1865 = vmatpush2.msra.mxu0 0.0
        %1866 = vmatprep.subr.mxu0 0.0
        %1867 = vmatpush2.msra.mxu0 0.0
        %1868 = vmatprep.subr.mxu0 0.0
        %1869 = vmatpush2.msra.mxu0 0.0
        %1870 = vmatprep.subr.mxu0 0.0
        %1871 = vmatpush2.msra.mxu0 0.0
        %1872 = vmatprep.subr.mxu0 0.0
        %1873 = vmatpush2.msra.mxu0 0.0
        %1874 = vmatprep.subr.mxu0 0.0
        %1875 = vmatpush2.msra.mxu0 0.0
        %1876 = vmatprep.subr.mxu0 0.0
        %1877 = vmatpush2.msra.mxu0 0.0
        %1878 = vmatprep.subr.mxu0 0.0
        %1879 = vmatpush2.msra.mxu0 0.0
        %1880 = vmatprep.subr.mxu0 0.0
        %1881 = vmatpush2.msra.mxu0 0.0
        %1882 = vmatprep.subr.mxu0 0.0
        %1883 = vmatpush2.msra.mxu0 0.0
        %1884 = vmatprep.subr.mxu0 0.0
        %1885 = vmatpush2.msra.mxu0 0.0
        %1886 = vmatprep.subr.mxu0 0.0
        %1887 = vmatpush2.msra.mxu0 0.0
        %1888 = vmatprep.subr.mxu0 0.0
        %1889 = vmatpush2.msra.mxu0 0.0
        %1890 = vmatprep.subr.mxu0 0.0
        %1891 = vmatpush2.msra.mxu0 0.0
        %1892 = vmatprep.mubr.f32.mxu0 0.0
        %1893 = vmatmul.mubr.f32.gmra.mxu0 %v1826
        %v1894 = vpop.f32.mrf.mxu0
        %v1895 = vadd.f32 %v42, %v1894
        %v1896 = vpop.f32.mrf.mxu0
        %1897 = vdwg.mxu0
        %v1898 = vtanh.pop %v1895
        %v1900 = vsel %vm79, %v1898, 0
        %1902 = vmatprep.subr.mxu0 0.0
        %1903 = vmatpush1.msra.mxu0 0.0
        %1904 = vmatprep.subr.mxu0 0.0
        %1905 = vmatpush1.msra.mxu0 0.0
        %1906 = vmatprep.subr.mxu0 0.0
        %1907 = vmatpush1.msra.mxu0 0.0
        %1908 = vmatprep.subr.mxu0 0.0
        %1909 = vmatpush1.msra.mxu0 0.0
        %1910 = vmatprep.subr.mxu0 0.0
        %1911 = vmatpush1.msra.mxu0 0.0
        %1912 = vmatprep.subr.mxu0 0.0
        %1913 = vmatpush1.msra.mxu0 0.0
        %1914 = vmatprep.subr.mxu0 0.0
        %1915 = vmatpush1.msra.mxu0 0.0
        %1916 = vmatprep.subr.mxu0 0.0
        %1917 = vmatpush1.msra.mxu0 0.0
        %1918 = vmatprep.subr.mxu0 0.0
        %1919 = vmatpush1.msra.mxu0 0.0
        %1920 = vmatprep.subr.mxu0 0.0
        %1921 = vmatpush1.msra.mxu0 0.0
        %1922 = vmatprep.subr.mxu0 0.0
        %1923 = vmatpush1.msra.mxu0 0.0
        %1924 = vmatprep.subr.mxu0 0.0
        %1925 = vmatpush1.msra.mxu0 0.0
        %1926 = vmatprep.subr.mxu0 0.0
        %1927 = vmatpush1.msra.mxu0 %v36
        %1928 = vmatprep.subr.mxu0 0.0
        %1929 = vmatpush1.msra.mxu0 %v35
        %1930 = vmatprep.subr.mxu0 0.0
        %1931 = vmatpush1.msra.mxu0 %v34
        %1932 = vmatprep.subr.mxu0 0.0
        %1933 = vmatpush1.msra.mxu0 %v33
        %1934 = vmatprep.subr.mxu0 0.0
        %1935 = vmatpush2.msra.mxu0 0.0
        %1936 = vmatprep.subr.mxu0 0.0
        %1937 = vmatpush2.msra.mxu0 0.0
        %1938 = vmatprep.subr.mxu0 0.0
        %1939 = vmatpush2.msra.mxu0 0.0
        %1940 = vmatprep.subr.mxu0 0.0
        %1941 = vmatpush2.msra.mxu0 0.0
        %1942 = vmatprep.subr.mxu0 0.0
        %1943 = vmatpush2.msra.mxu0 0.0
        %1944 = vmatprep.subr.mxu0 0.0
        %1945 = vmatpush2.msra.mxu0 0.0
        %1946 = vmatprep.subr.mxu0 0.0
        %1947 = vmatpush2.msra.mxu0 0.0
        %1948 = vmatprep.subr.mxu0 0.0
        %1949 = vmatpush2.msra.mxu0 0.0
        %1950 = vmatprep.subr.mxu0 0.0
        %1951 = vmatpush2.msra.mxu0 0.0
        %1952 = vmatprep.subr.mxu0 0.0
        %1953 = vmatpush2.msra.mxu0 0.0
        %1954 = vmatprep.subr.mxu0 0.0
        %1955 = vmatpush2.msra.mxu0 0.0
        %1956 = vmatprep.subr.mxu0 0.0
        %1957 = vmatpush2.msra.mxu0 0.0
        %1958 = vmatprep.subr.mxu0 0.0
        %1959 = vmatpush2.msra.mxu0 0.0
        %1960 = vmatprep.subr.mxu0 0.0
        %1961 = vmatpush2.msra.mxu0 0.0
        %1962 = vmatprep.subr.mxu0 0.0
        %1963 = vmatpush2.msra.mxu0 0.0
        %1964 = vmatprep.subr.mxu0 0.0
        %1965 = vmatpush2.msra.mxu0 0.0
        %1966 = vmatprep.mubr.f32.mxu0 0.0
        %1967 = vmatmul.mubr.f32.gmra.mxu0 %v1900
        %v1968 = vpop.f32.mrf.mxu0
        %v1969 = vadd.f32 %v49, %v1968
        %v1970 = vpop.f32.mrf.mxu0
        %1971 = vdwg.mxu0
        %1972 = vrot.lane.b32.xlu0 %v1824, 112
        %v1973 = vpop.permute.xlu0 %1972
        %1976 = vrot.lane.b32.xlu0 %v1969, 16
        %v1977 = vpop.permute.xlu0 %1976
        %v1979 = vsel %vm234, %v1973, %v1977
        %v1980 = vmul.f32 %v1665, 2.0
        %v1981 = vadd.f32 %v1508, %v1980
        %v1982 = vmul.f32 %v1822, 2.0
        %v1983 = vadd.f32 %v1981, %v1982
        %v1984 = vadd.f32 %v1983, %v1979
        %v1985 = vmul.f32 %v718, %v1984
        %v1986 = vadd.f32 %v1353, %v1985
        %v1988 = vsel %vm79, %v1986, 0
        %1990 = vmatprep.subr.mxu0 0.0
        %1991 = vmatpush1.msra.mxu0 0.0
        %1992 = vmatprep.subr.mxu0 0.0
        %1993 = vmatpush1.msra.mxu0 0.0
        %1994 = vmatprep.subr.mxu0 0.0
        %1995 = vmatpush1.msra.mxu0 0.0
        %1996 = vmatprep.subr.mxu0 0.0
        %1997 = vmatpush1.msra.mxu0 0.0
        %1998 = vmatprep.subr.mxu0 0.0
        %1999 = vmatpush1.msra.mxu0 0.0
        %2000 = vmatprep.subr.mxu0 0.0
        %2001 = vmatpush1.msra.mxu0 0.0
        %2002 = vmatprep.subr.mxu0 0.0
        %2003 = vmatpush1.msra.mxu0 0.0
        %2004 = vmatprep.subr.mxu0 0.0
        %2005 = vmatpush1.msra.mxu0 0.0
        %2006 = vmatprep.subr.mxu0 0.0
        %2007 = vmatpush1.msra.mxu0 0.0
        %2008 = vmatprep.subr.mxu0 0.0
        %2009 = vmatpush1.msra.mxu0 0.0
        %2010 = vmatprep.subr.mxu0 0.0
        %2011 = vmatpush1.msra.mxu0 0.0
        %2012 = vmatprep.subr.mxu0 0.0
        %2013 = vmatpush1.msra.mxu0 0.0
        %2014 = vmatprep.subr.mxu0 0.0
        %2015 = vmatpush1.msra.mxu0 %v32
        %2016 = vmatprep.subr.mxu0 0.0
        %2017 = vmatpush1.msra.mxu0 %v31
        %2018 = vmatprep.subr.mxu0 0.0
        %2019 = vmatpush1.msra.mxu0 %v30
        %2020 = vmatprep.subr.mxu0 0.0
        %2021 = vmatpush1.msra.mxu0 %v29
        %2022 = vmatprep.subr.mxu0 0.0
        %2023 = vmatpush2.msra.mxu0 0.0
        %2024 = vmatprep.subr.mxu0 0.0
        %2025 = vmatpush2.msra.mxu0 0.0
        %2026 = vmatprep.subr.mxu0 0.0
        %2027 = vmatpush2.msra.mxu0 0.0
        %2028 = vmatprep.subr.mxu0 0.0
        %2029 = vmatpush2.msra.mxu0 0.0
        %2030 = vmatprep.subr.mxu0 0.0
        %2031 = vmatpush2.msra.mxu0 0.0
        %2032 = vmatprep.subr.mxu0 0.0
        %2033 = vmatpush2.msra.mxu0 0.0
        %2034 = vmatprep.subr.mxu0 0.0
        %2035 = vmatpush2.msra.mxu0 0.0
        %2036 = vmatprep.subr.mxu0 0.0
        %2037 = vmatpush2.msra.mxu0 0.0
        %2038 = vmatprep.subr.mxu0 0.0
        %2039 = vmatpush2.msra.mxu0 0.0
        %2040 = vmatprep.subr.mxu0 0.0
        %2041 = vmatpush2.msra.mxu0 0.0
        %2042 = vmatprep.subr.mxu0 0.0
        %2043 = vmatpush2.msra.mxu0 0.0
        %2044 = vmatprep.subr.mxu0 0.0
        %2045 = vmatpush2.msra.mxu0 0.0
        %2046 = vmatprep.subr.mxu0 0.0
        %2047 = vmatpush2.msra.mxu0 0.0
        %2048 = vmatprep.subr.mxu0 0.0
        %2049 = vmatpush2.msra.mxu0 0.0
        %2050 = vmatprep.subr.mxu0 0.0
        %2051 = vmatpush2.msra.mxu0 0.0
        %2052 = vmatprep.subr.mxu0 0.0
        %2053 = vmatpush2.msra.mxu0 0.0
        %2054 = vmatprep.mubr.f32.mxu0 0.0
        %2055 = vmatmul.mubr.f32.gmra.mxu0 %v1988
        %v2056 = vpop.f32.mrf.mxu0
        %v2057 = vadd.f32 %v42, %v2056
        %v2058 = vpop.f32.mrf.mxu0
        %2059 = vdwg.mxu0
        %v2060 = vtanh.pop %v2057
        %v2062 = vsel %vm79, %v2060, 0
        %2064 = vmatprep.subr.mxu0 0.0
        %2065 = vmatpush1.msra.mxu0 0.0
        %2066 = vmatprep.subr.mxu0 0.0
        %2067 = vmatpush1.msra.mxu0 0.0
        %2068 = vmatprep.subr.mxu0 0.0
        %2069 = vmatpush1.msra.mxu0 0.0
        %2070 = vmatprep.subr.mxu0 0.0
        %2071 = vmatpush1.msra.mxu0 0.0
        %2072 = vmatprep.subr.mxu0 0.0
        %2073 = vmatpush1.msra.mxu0 0.0
        %2074 = vmatprep.subr.mxu0 0.0
        %2075 = vmatpush1.msra.mxu0 0.0
        %2076 = vmatprep.subr.mxu0 0.0
        %2077 = vmatpush1.msra.mxu0 0.0
        %2078 = vmatprep.subr.mxu0 0.0
        %2079 = vmatpush1.msra.mxu0 0.0
        %2080 = vmatprep.subr.mxu0 0.0
        %2081 = vmatpush1.msra.mxu0 0.0
        %2082 = vmatprep.subr.mxu0 0.0
        %2083 = vmatpush1.msra.mxu0 0.0
        %2084 = vmatprep.subr.mxu0 0.0
        %2085 = vmatpush1.msra.mxu0 0.0
        %2086 = vmatprep.subr.mxu0 0.0
        %2087 = vmatpush1.msra.mxu0 0.0
        %2088 = vmatprep.subr.mxu0 0.0
        %2089 = vmatpush1.msra.mxu0 %v36
        %2090 = vmatprep.subr.mxu0 0.0
        %2091 = vmatpush1.msra.mxu0 %v35
        %2092 = vmatprep.subr.mxu0 0.0
        %2093 = vmatpush1.msra.mxu0 %v34
        %2094 = vmatprep.subr.mxu0 0.0
        %2095 = vmatpush1.msra.mxu0 %v33
        %2096 = vmatprep.subr.mxu0 0.0
        %2097 = vmatpush2.msra.mxu0 0.0
        %2098 = vmatprep.subr.mxu0 0.0
        %2099 = vmatpush2.msra.mxu0 0.0
        %2100 = vmatprep.subr.mxu0 0.0
        %2101 = vmatpush2.msra.mxu0 0.0
        %2102 = vmatprep.subr.mxu0 0.0
        %2103 = vmatpush2.msra.mxu0 0.0
        %2104 = vmatprep.subr.mxu0 0.0
        %2105 = vmatpush2.msra.mxu0 0.0
        %2106 = vmatprep.subr.mxu0 0.0
        %2107 = vmatpush2.msra.mxu0 0.0
        %2108 = vmatprep.subr.mxu0 0.0
        %2109 = vmatpush2.msra.mxu0 0.0
        %2110 = vmatprep.subr.mxu0 0.0
        %2111 = vmatpush2.msra.mxu0 0.0
        %2112 = vmatprep.subr.mxu0 0.0
        %2113 = vmatpush2.msra.mxu0 0.0
        %2114 = vmatprep.subr.mxu0 0.0
        %2115 = vmatpush2.msra.mxu0 0.0
        %2116 = vmatprep.subr.mxu0 0.0
        %2117 = vmatpush2.msra.mxu0 0.0
        %2118 = vmatprep.subr.mxu0 0.0
        %2119 = vmatpush2.msra.mxu0 0.0
        %2120 = vmatprep.subr.mxu0 0.0
        %2121 = vmatpush2.msra.mxu0 0.0
        %2122 = vmatprep.subr.mxu0 0.0
        %2123 = vmatpush2.msra.mxu0 0.0
        %2124 = vmatprep.subr.mxu0 0.0
        %2125 = vmatpush2.msra.mxu0 0.0
        %2126 = vmatprep.subr.mxu0 0.0
        %2127 = vmatpush2.msra.mxu0 0.0
        %2128 = vmatprep.mubr.f32.mxu0 0.0
        %2129 = vmatmul.mubr.f32.gmra.mxu0 %v2062
        %v2130 = vpop.f32.mrf.mxu0
        %v2131 = vadd.f32 %v49, %v2130
        %v2132 = vpop.f32.mrf.mxu0
        %2133 = vdwg.mxu0
        %2134 = vrot.lane.b32.xlu0 %v1986, 112
        %v2135 = vpop.permute.xlu0 %2134
        %2138 = vrot.lane.b32.xlu0 %v2131, 16
        %v2139 = vpop.permute.xlu0 %2138
        %v2141 = vsel %vm234, %v2135, %v2139
        %v2142 = vmul.f32 %v237, %v2141
        %v2143 = vadd.f32 %v1986, %v2142
        %v2145 = vsel %vm79, %v2143, 0
        %2147 = vmatprep.subr.mxu0 0.0
        %2148 = vmatpush1.msra.mxu0 0.0
        %2149 = vmatprep.subr.mxu0 0.0
        %2150 = vmatpush1.msra.mxu0 0.0
        %2151 = vmatprep.subr.mxu0 0.0
        %2152 = vmatpush1.msra.mxu0 0.0
        %2153 = vmatprep.subr.mxu0 0.0
        %2154 = vmatpush1.msra.mxu0 0.0
        %2155 = vmatprep.subr.mxu0 0.0
        %2156 = vmatpush1.msra.mxu0 0.0
        %2157 = vmatprep.subr.mxu0 0.0
        %2158 = vmatpush1.msra.mxu0 0.0
        %2159 = vmatprep.subr.mxu0 0.0
        %2160 = vmatpush1.msra.mxu0 0.0
        %2161 = vmatprep.subr.mxu0 0.0
        %2162 = vmatpush1.msra.mxu0 0.0
        %2163 = vmatprep.subr.mxu0 0.0
        %2164 = vmatpush1.msra.mxu0 0.0
        %2165 = vmatprep.subr.mxu0 0.0
        %2166 = vmatpush1.msra.mxu0 0.0
        %2167 = vmatprep.subr.mxu0 0.0
        %2168 = vmatpush1.msra.mxu0 0.0
        %2169 = vmatprep.subr.mxu0 0.0
        %2170 = vmatpush1.msra.mxu0 0.0
        %2171 = vmatprep.subr.mxu0 0.0
        %2172 = vmatpush1.msra.mxu0 %v32
        %2173 = vmatprep.subr.mxu0 0.0
        %2174 = vmatpush1.msra.mxu0 %v31
        %2175 = vmatprep.subr.mxu0 0.0
        %2176 = vmatpush1.msra.mxu0 %v30
        %2177 = vmatprep.subr.mxu0 0.0
        %2178 = vmatpush1.msra.mxu0 %v29
        %2179 = vmatprep.subr.mxu0 0.0
        %2180 = vmatpush2.msra.mxu0 0.0
        %2181 = vmatprep.subr.mxu0 0.0
        %2182 = vmatpush2.msra.mxu0 0.0
        %2183 = vmatprep.subr.mxu0 0.0
        %2184 = vmatpush2.msra.mxu0 0.0
        %2185 = vmatprep.subr.mxu0 0.0
        %2186 = vmatpush2.msra.mxu0 0.0
        %2187 = vmatprep.subr.mxu0 0.0
        %2188 = vmatpush2.msra.mxu0 0.0
        %2189 = vmatprep.subr.mxu0 0.0
        %2190 = vmatpush2.msra.mxu0 0.0
        %2191 = vmatprep.subr.mxu0 0.0
        %2192 = vmatpush2.msra.mxu0 0.0
        %2193 = vmatprep.subr.mxu0 0.0
        %2194 = vmatpush2.msra.mxu0 0.0
        %2195 = vmatprep.subr.mxu0 0.0
        %2196 = vmatpush2.msra.mxu0 0.0
        %2197 = vmatprep.subr.mxu0 0.0
        %2198 = vmatpush2.msra.mxu0 0.0
        %2199 = vmatprep.subr.mxu0 0.0
        %2200 = vmatpush2.msra.mxu0 0.0
        %2201 = vmatprep.subr.mxu0 0.0
        %2202 = vmatpush2.msra.mxu0 0.0
        %2203 = vmatprep.subr.mxu0 0.0
        %2204 = vmatpush2.msra.mxu0 0.0
        %2205 = vmatprep.subr.mxu0 0.0
        %2206 = vmatpush2.msra.mxu0 0.0
        %2207 = vmatprep.subr.mxu0 0.0
        %2208 = vmatpush2.msra.mxu0 0.0
        %2209 = vmatprep.subr.mxu0 0.0
        %2210 = vmatpush2.msra.mxu0 0.0
        %2211 = vmatprep.mubr.f32.mxu0 0.0
        %2212 = vmatmul.mubr.f32.gmra.mxu0 %v2145
        %v2213 = vpop.f32.mrf.mxu0
        %v2214 = vadd.f32 %v42, %v2213
        %v2215 = vpop.f32.mrf.mxu0
        %2216 = vdwg.mxu0
        %v2217 = vtanh.pop %v2214
        %v2219 = vsel %vm79, %v2217, 0
        %2221 = vmatprep.subr.mxu0 0.0
        %2222 = vmatpush1.msra.mxu0 0.0
        %2223 = vmatprep.subr.mxu0 0.0
        %2224 = vmatpush1.msra.mxu0 0.0
        %2225 = vmatprep.subr.mxu0 0.0
        %2226 = vmatpush1.msra.mxu0 0.0
        %2227 = vmatprep.subr.mxu0 0.0
        %2228 = vmatpush1.msra.mxu0 0.0
        %2229 = vmatprep.subr.mxu0 0.0
        %2230 = vmatpush1.msra.mxu0 0.0
        %2231 = vmatprep.subr.mxu0 0.0
        %2232 = vmatpush1.msra.mxu0 0.0
        %2233 = vmatprep.subr.mxu0 0.0
        %2234 = vmatpush1.msra.mxu0 0.0
        %2235 = vmatprep.subr.mxu0 0.0
        %2236 = vmatpush1.msra.mxu0 0.0
        %2237 = vmatprep.subr.mxu0 0.0
        %2238 = vmatpush1.msra.mxu0 0.0
        %2239 = vmatprep.subr.mxu0 0.0
        %2240 = vmatpush1.msra.mxu0 0.0
        %2241 = vmatprep.subr.mxu0 0.0
        %2242 = vmatpush1.msra.mxu0 0.0
        %2243 = vmatprep.subr.mxu0 0.0
        %2244 = vmatpush1.msra.mxu0 0.0
        %2245 = vmatprep.subr.mxu0 0.0
        %2246 = vmatpush1.msra.mxu0 %v36
        %2247 = vmatprep.subr.mxu0 0.0
        %2248 = vmatpush1.msra.mxu0 %v35
        %2249 = vmatprep.subr.mxu0 0.0
        %2250 = vmatpush1.msra.mxu0 %v34
        %2251 = vmatprep.subr.mxu0 0.0
        %2252 = vmatpush1.msra.mxu0 %v33
        %2253 = vmatprep.subr.mxu0 0.0
        %2254 = vmatpush2.msra.mxu0 0.0
        %2255 = vmatprep.subr.mxu0 0.0
        %2256 = vmatpush2.msra.mxu0 0.0
        %2257 = vmatprep.subr.mxu0 0.0
        %2258 = vmatpush2.msra.mxu0 0.0
        %2259 = vmatprep.subr.mxu0 0.0
        %2260 = vmatpush2.msra.mxu0 0.0
        %2261 = vmatprep.subr.mxu0 0.0
        %2262 = vmatpush2.msra.mxu0 0.0
        %2263 = vmatprep.subr.mxu0 0.0
        %2264 = vmatpush2.msra.mxu0 0.0
        %2265 = vmatprep.subr.mxu0 0.0
        %2266 = vmatpush2.msra.mxu0 0.0
        %2267 = vmatprep.subr.mxu0 0.0
        %2268 = vmatpush2.msra.mxu0 0.0
        %2269 = vmatprep.subr.mxu0 0.0
        %2270 = vmatpush2.msra.mxu0 0.0
        %2271 = vmatprep.subr.mxu0 0.0
        %2272 = vmatpush2.msra.mxu0 0.0
        %2273 = vmatprep.subr.mxu0 0.0
        %2274 = vmatpush2.msra.mxu0 0.0
        %2275 = vmatprep.subr.mxu0 0.0
        %2276 = vmatpush2.msra.mxu0 0.0
        %2277 = vmatprep.subr.mxu0 0.0
        %2278 = vmatpush2.msra.mxu0 0.0
        %2279 = vmatprep.subr.mxu0 0.0
        %2280 = vmatpush2.msra.mxu0 0.0
        %2281 = vmatprep.subr.mxu0 0.0
        %2282 = vmatpush2.msra.mxu0 0.0
        %2283 = vmatprep.subr.mxu0 0.0
        %2284 = vmatpush2.msra.mxu0 0.0
        %2285 = vmatprep.mubr.f32.mxu0 0.0
        %2286 = vmatmul.mubr.f32.gmra.mxu0 %v2219
        %v2287 = vpop.f32.mrf.mxu0
        %v2288 = vadd.f32 %v49, %v2287
        %v2289 = vpop.f32.mrf.mxu0
        %2290 = vdwg.mxu0
        %2291 = vrot.lane.b32.xlu0 %v2143, 112
        %v2292 = vpop.permute.xlu0 %2291
        %2295 = vrot.lane.b32.xlu0 %v2288, 16
        %v2296 = vpop.permute.xlu0 %2295
        %v2298 = vsel %vm234, %v2292, %v2296
        %v2299 = vmul.f32 %v237, %v2298
        %v2300 = vadd.f32 %v1986, %v2299
        %v2302 = vsel %vm79, %v2300, 0
        %2304 = vmatprep.subr.mxu0 0.0
        %2305 = vmatpush1.msra.mxu0 0.0
        %2306 = vmatprep.subr.mxu0 0.0
        %2307 = vmatpush1.msra.mxu0 0.0
        %2308 = vmatprep.subr.mxu0 0.0
        %2309 = vmatpush1.msra.mxu0 0.0
        %2310 = vmatprep.subr.mxu0 0.0
        %2311 = vmatpush1.msra.mxu0 0.0
        %2312 = vmatprep.subr.mxu0 0.0
        %2313 = vmatpush1.msra.mxu0 0.0
        %2314 = vmatprep.subr.mxu0 0.0
        %2315 = vmatpush1.msra.mxu0 0.0
        %2316 = vmatprep.subr.mxu0 0.0
        %2317 = vmatpush1.msra.mxu0 0.0
        %2318 = vmatprep.subr.mxu0 0.0
        %2319 = vmatpush1.msra.mxu0 0.0
        %2320 = vmatprep.subr.mxu0 0.0
        %2321 = vmatpush1.msra.mxu0 0.0
        %2322 = vmatprep.subr.mxu0 0.0
        %2323 = vmatpush1.msra.mxu0 0.0
        %2324 = vmatprep.subr.mxu0 0.0
        %2325 = vmatpush1.msra.mxu0 0.0
        %2326 = vmatprep.subr.mxu0 0.0
        %2327 = vmatpush1.msra.mxu0 0.0
        %2328 = vmatprep.subr.mxu0 0.0
        %2329 = vmatpush1.msra.mxu0 %v32
        %2330 = vmatprep.subr.mxu0 0.0
        %2331 = vmatpush1.msra.mxu0 %v31
        %2332 = vmatprep.subr.mxu0 0.0
        %2333 = vmatpush1.msra.mxu0 %v30
        %2334 = vmatprep.subr.mxu0 0.0
        %2335 = vmatpush1.msra.mxu0 %v29
        %2336 = vmatprep.subr.mxu0 0.0
        %2337 = vmatpush2.msra.mxu0 0.0
        %2338 = vmatprep.subr.mxu0 0.0
        %2339 = vmatpush2.msra.mxu0 0.0
        %2340 = vmatprep.subr.mxu0 0.0
        %2341 = vmatpush2.msra.mxu0 0.0
        %2342 = vmatprep.subr.mxu0 0.0
        %2343 = vmatpush2.msra.mxu0 0.0
        %2344 = vmatprep.subr.mxu0 0.0
        %2345 = vmatpush2.msra.mxu0 0.0
        %2346 = vmatprep.subr.mxu0 0.0
        %2347 = vmatpush2.msra.mxu0 0.0
        %2348 = vmatprep.subr.mxu0 0.0
        %2349 = vmatpush2.msra.mxu0 0.0
        %2350 = vmatprep.subr.mxu0 0.0
        %2351 = vmatpush2.msra.mxu0 0.0
        %2352 = vmatprep.subr.mxu0 0.0
        %2353 = vmatpush2.msra.mxu0 0.0
        %2354 = vmatprep.subr.mxu0 0.0
        %2355 = vmatpush2.msra.mxu0 0.0
        %2356 = vmatprep.subr.mxu0 0.0
        %2357 = vmatpush2.msra.mxu0 0.0
        %2358 = vmatprep.subr.mxu0 0.0
        %2359 = vmatpush2.msra.mxu0 0.0
        %2360 = vmatprep.subr.mxu0 0.0
        %2361 = vmatpush2.msra.mxu0 0.0
        %2362 = vmatprep.subr.mxu0 0.0
        %2363 = vmatpush2.msra.mxu0 0.0
        %2364 = vmatprep.subr.mxu0 0.0
        %2365 = vmatpush2.msra.mxu0 0.0
        %2366 = vmatprep.subr.mxu0 0.0
        %2367 = vmatpush2.msra.mxu0 0.0
        %2368 = vmatprep.mubr.f32.mxu0 0.0
        %2369 = vmatmul.mubr.f32.gmra.mxu0 %v2302
        %v2370 = vpop.f32.mrf.mxu0
        %v2371 = vadd.f32 %v42, %v2370
        %v2372 = vpop.f32.mrf.mxu0
        %2373 = vdwg.mxu0
        %v2374 = vtanh.pop %v2371
        %v2376 = vsel %vm79, %v2374, 0
        %2378 = vmatprep.subr.mxu0 0.0
        %2379 = vmatpush1.msra.mxu0 0.0
        %2380 = vmatprep.subr.mxu0 0.0
        %2381 = vmatpush1.msra.mxu0 0.0
        %2382 = vmatprep.subr.mxu0 0.0
        %2383 = vmatpush1.msra.mxu0 0.0
        %2384 = vmatprep.subr.mxu0 0.0
        %2385 = vmatpush1.msra.mxu0 0.0
        %2386 = vmatprep.subr.mxu0 0.0
        %2387 = vmatpush1.msra.mxu0 0.0
        %2388 = vmatprep.subr.mxu0 0.0
        %2389 = vmatpush1.msra.mxu0 0.0
        %2390 = vmatprep.subr.mxu0 0.0
        %2391 = vmatpush1.msra.mxu0 0.0
        %2392 = vmatprep.subr.mxu0 0.0
        %2393 = vmatpush1.msra.mxu0 0.0
        %2394 = vmatprep.subr.mxu0 0.0
        %2395 = vmatpush1.msra.mxu0 0.0
        %2396 = vmatprep.subr.mxu0 0.0
        %2397 = vmatpush1.msra.mxu0 0.0
        %2398 = vmatprep.subr.mxu0 0.0
        %2399 = vmatpush1.msra.mxu0 0.0
        %2400 = vmatprep.subr.mxu0 0.0
        %2401 = vmatpush1.msra.mxu0 0.0
        %2402 = vmatprep.subr.mxu0 0.0
        %2403 = vmatpush1.msra.mxu0 %v36
        %2404 = vmatprep.subr.mxu0 0.0
        %2405 = vmatpush1.msra.mxu0 %v35
        %2406 = vmatprep.subr.mxu0 0.0
        %2407 = vmatpush1.msra.mxu0 %v34
        %2408 = vmatprep.subr.mxu0 0.0
        %2409 = vmatpush1.msra.mxu0 %v33
        %2410 = vmatprep.subr.mxu0 0.0
        %2411 = vmatpush2.msra.mxu0 0.0
        %2412 = vmatprep.subr.mxu0 0.0
        %2413 = vmatpush2.msra.mxu0 0.0
        %2414 = vmatprep.subr.mxu0 0.0
        %2415 = vmatpush2.msra.mxu0 0.0
        %2416 = vmatprep.subr.mxu0 0.0
        %2417 = vmatpush2.msra.mxu0 0.0
        %2418 = vmatprep.subr.mxu0 0.0
        %2419 = vmatpush2.msra.mxu0 0.0
        %2420 = vmatprep.subr.mxu0 0.0
        %2421 = vmatpush2.msra.mxu0 0.0
        %2422 = vmatprep.subr.mxu0 0.0
        %2423 = vmatpush2.msra.mxu0 0.0
        %2424 = vmatprep.subr.mxu0 0.0
        %2425 = vmatpush2.msra.mxu0 0.0
        %2426 = vmatprep.subr.mxu0 0.0
        %2427 = vmatpush2.msra.mxu0 0.0
        %2428 = vmatprep.subr.mxu0 0.0
        %2429 = vmatpush2.msra.mxu0 0.0
        %2430 = vmatprep.subr.mxu0 0.0
        %2431 = vmatpush2.msra.mxu0 0.0
        %2432 = vmatprep.subr.mxu0 0.0
        %2433 = vmatpush2.msra.mxu0 0.0
        %2434 = vmatprep.subr.mxu0 0.0
        %2435 = vmatpush2.msra.mxu0 0.0
        %2436 = vmatprep.subr.mxu0 0.0
        %2437 = vmatpush2.msra.mxu0 0.0
        %2438 = vmatprep.subr.mxu0 0.0
        %2439 = vmatpush2.msra.mxu0 0.0
        %2440 = vmatprep.subr.mxu0 0.0
        %2441 = vmatpush2.msra.mxu0 0.0
        %2442 = vmatprep.mubr.f32.mxu0 0.0
        %2443 = vmatmul.mubr.f32.gmra.mxu0 %v2376
        %v2444 = vpop.f32.mrf.mxu0
        %v2445 = vadd.f32 %v49, %v2444
        %v2446 = vpop.f32.mrf.mxu0
        %2447 = vdwg.mxu0
        %2448 = vrot.lane.b32.xlu0 %v2300, 112
        %v2449 = vpop.permute.xlu0 %2448
        %2452 = vrot.lane.b32.xlu0 %v2445, 16
        %v2453 = vpop.permute.xlu0 %2452
        %v2455 = vsel %vm234, %v2449, %v2453
        %v2456 = vmul.f32 %v552, %v2455
        %v2457 = vadd.f32 %v1986, %v2456
        %v2459 = vsel %vm79, %v2457, 0
        %2461 = vmatprep.subr.mxu0 0.0
        %2462 = vmatpush1.msra.mxu0 0.0
        %2463 = vmatprep.subr.mxu0 0.0
        %2464 = vmatpush1.msra.mxu0 0.0
        %2465 = vmatprep.subr.mxu0 0.0
        %2466 = vmatpush1.msra.mxu0 0.0
        %2467 = vmatprep.subr.mxu0 0.0
        %2468 = vmatpush1.msra.mxu0 0.0
        %2469 = vmatprep.subr.mxu0 0.0
        %2470 = vmatpush1.msra.mxu0 0.0
        %2471 = vmatprep.subr.mxu0 0.0
        %2472 = vmatpush1.msra.mxu0 0.0
        %2473 = vmatprep.subr.mxu0 0.0
        %2474 = vmatpush1.msra.mxu0 0.0
        %2475 = vmatprep.subr.mxu0 0.0
        %2476 = vmatpush1.msra.mxu0 0.0
        %2477 = vmatprep.subr.mxu0 0.0
        %2478 = vmatpush1.msra.mxu0 0.0
        %2479 = vmatprep.subr.mxu0 0.0
        %2480 = vmatpush1.msra.mxu0 0.0
        %2481 = vmatprep.subr.mxu0 0.0
        %2482 = vmatpush1.msra.mxu0 0.0
        %2483 = vmatprep.subr.mxu0 0.0
        %2484 = vmatpush1.msra.mxu0 0.0
        %2485 = vmatprep.subr.mxu0 0.0
        %2486 = vmatpush1.msra.mxu0 %v32
        %2487 = vmatprep.subr.mxu0 0.0
        %2488 = vmatpush1.msra.mxu0 %v31
        %2489 = vmatprep.subr.mxu0 0.0
        %2490 = vmatpush1.msra.mxu0 %v30
        %2491 = vmatprep.subr.mxu0 0.0
        %2492 = vmatpush1.msra.mxu0 %v29
        %2493 = vmatprep.subr.mxu0 0.0
        %2494 = vmatpush2.msra.mxu0 0.0
        %2495 = vmatprep.subr.mxu0 0.0
        %2496 = vmatpush2.msra.mxu0 0.0
        %2497 = vmatprep.subr.mxu0 0.0
        %2498 = vmatpush2.msra.mxu0 0.0
        %2499 = vmatprep.subr.mxu0 0.0
        %2500 = vmatpush2.msra.mxu0 0.0
        %2501 = vmatprep.subr.mxu0 0.0
        %2502 = vmatpush2.msra.mxu0 0.0
        %2503 = vmatprep.subr.mxu0 0.0
        %2504 = vmatpush2.msra.mxu0 0.0
        %2505 = vmatprep.subr.mxu0 0.0
        %2506 = vmatpush2.msra.mxu0 0.0
        %2507 = vmatprep.subr.mxu0 0.0
        %2508 = vmatpush2.msra.mxu0 0.0
        %2509 = vmatprep.subr.mxu0 0.0
        %2510 = vmatpush2.msra.mxu0 0.0
        %2511 = vmatprep.subr.mxu0 0.0
        %2512 = vmatpush2.msra.mxu0 0.0
        %2513 = vmatprep.subr.mxu0 0.0
        %2514 = vmatpush2.msra.mxu0 0.0
        %2515 = vmatprep.subr.mxu0 0.0
        %2516 = vmatpush2.msra.mxu0 0.0
        %2517 = vmatprep.subr.mxu0 0.0
        %2518 = vmatpush2.msra.mxu0 0.0
        %2519 = vmatprep.subr.mxu0 0.0
        %2520 = vmatpush2.msra.mxu0 0.0
        %2521 = vmatprep.subr.mxu0 0.0
        %2522 = vmatpush2.msra.mxu0 0.0
        %2523 = vmatprep.subr.mxu0 0.0
        %2524 = vmatpush2.msra.mxu0 0.0
        %2525 = vmatprep.mubr.f32.mxu0 0.0
        %2526 = vmatmul.mubr.f32.gmra.mxu0 %v2459
        %v2527 = vpop.f32.mrf.mxu0
        %v2528 = vadd.f32 %v42, %v2527
        %v2529 = vpop.f32.mrf.mxu0
        %2530 = vdwg.mxu0
        %v2531 = vtanh.pop %v2528
        %v2533 = vsel %vm79, %v2531, 0
        %2535 = vmatprep.subr.mxu0 0.0
        %2536 = vmatpush1.msra.mxu0 0.0
        %2537 = vmatprep.subr.mxu0 0.0
        %2538 = vmatpush1.msra.mxu0 0.0
        %2539 = vmatprep.subr.mxu0 0.0
        %2540 = vmatpush1.msra.mxu0 0.0
        %2541 = vmatprep.subr.mxu0 0.0
        %2542 = vmatpush1.msra.mxu0 0.0
        %2543 = vmatprep.subr.mxu0 0.0
        %2544 = vmatpush1.msra.mxu0 0.0
        %2545 = vmatprep.subr.mxu0 0.0
        %2546 = vmatpush1.msra.mxu0 0.0
        %2547 = vmatprep.subr.mxu0 0.0
        %2548 = vmatpush1.msra.mxu0 0.0
        %2549 = vmatprep.subr.mxu0 0.0
        %2550 = vmatpush1.msra.mxu0 0.0
        %2551 = vmatprep.subr.mxu0 0.0
        %2552 = vmatpush1.msra.mxu0 0.0
        %2553 = vmatprep.subr.mxu0 0.0
        %2554 = vmatpush1.msra.mxu0 0.0
        %2555 = vmatprep.subr.mxu0 0.0
        %2556 = vmatpush1.msra.mxu0 0.0
        %2557 = vmatprep.subr.mxu0 0.0
        %2558 = vmatpush1.msra.mxu0 0.0
        %2559 = vmatprep.subr.mxu0 0.0
        %2560 = vmatpush1.msra.mxu0 %v36
        %2561 = vmatprep.subr.mxu0 0.0
        %2562 = vmatpush1.msra.mxu0 %v35
        %2563 = vmatprep.subr.mxu0 0.0
        %2564 = vmatpush1.msra.mxu0 %v34
        %2565 = vmatprep.subr.mxu0 0.0
        %2566 = vmatpush1.msra.mxu0 %v33
        %2567 = vmatprep.subr.mxu0 0.0
        %2568 = vmatpush2.msra.mxu0 0.0
        %2569 = vmatprep.subr.mxu0 0.0
        %2570 = vmatpush2.msra.mxu0 0.0
        %2571 = vmatprep.subr.mxu0 0.0
        %2572 = vmatpush2.msra.mxu0 0.0
        %2573 = vmatprep.subr.mxu0 0.0
        %2574 = vmatpush2.msra.mxu0 0.0
        %2575 = vmatprep.subr.mxu0 0.0
        %2576 = vmatpush2.msra.mxu0 0.0
        %2577 = vmatprep.subr.mxu0 0.0
        %2578 = vmatpush2.msra.mxu0 0.0
        %2579 = vmatprep.subr.mxu0 0.0
        %2580 = vmatpush2.msra.mxu0 0.0
        %2581 = vmatprep.subr.mxu0 0.0
        %2582 = vmatpush2.msra.mxu0 0.0
        %2583 = vmatprep.subr.mxu0 0.0
        %2584 = vmatpush2.msra.mxu0 0.0
        %2585 = vmatprep.subr.mxu0 0.0
        %2586 = vmatpush2.msra.mxu0 0.0
        %2587 = vmatprep.subr.mxu0 0.0
        %2588 = vmatpush2.msra.mxu0 0.0
        %2589 = vmatprep.subr.mxu0 0.0
        %2590 = vmatpush2.msra.mxu0 0.0
        %2591 = vmatprep.subr.mxu0 0.0
        %2592 = vmatpush2.msra.mxu0 0.0
        %2593 = vmatprep.subr.mxu0 0.0
        %2594 = vmatpush2.msra.mxu0 0.0
        %2595 = vmatprep.subr.mxu0 0.0
        %2596 = vmatpush2.msra.mxu0 0.0
        %2597 = vmatprep.subr.mxu0 0.0
        %2598 = vmatpush2.msra.mxu0 0.0
        %2599 = vmatprep.mubr.f32.mxu0 0.0
        %2600 = vmatmul.mubr.f32.gmra.mxu0 %v2533
        %v2601 = vpop.f32.mrf.mxu0
        %v2602 = vadd.f32 %v49, %v2601
        %v2603 = vpop.f32.mrf.mxu0
        %2604 = vdwg.mxu0
        %2605 = vrot.lane.b32.xlu0 %v2457, 112
        %v2606 = vpop.permute.xlu0 %2605
        %2609 = vrot.lane.b32.xlu0 %v2602, 16
        %v2610 = vpop.permute.xlu0 %2609
        %v2612 = vsel %vm234, %v2606, %v2610
        %v2613 = vmul.f32 %v2298, 2.0
        %v2614 = vadd.f32 %v2141, %v2613
        %v2615 = vmul.f32 %v2455, 2.0
        %v2616 = vadd.f32 %v2614, %v2615
        %v2617 = vadd.f32 %v2616, %v2612
        %v2618 = vmul.f32 %v718, %v2617
        %v2619 = vadd.f32 %v1986, %v2618
        %2620 = vst.msk [vmem:[#allocation2] sm:$0xff] %vm79, %v2619
      $region36: #{tpu_custom_call.1} parent=29 // pred_fallthru
        _
      %v2621 = vld [vmem:[#allocation2] sm:$0xff]
      %s2622 = smul.u32 %s59, 8
      %s2623 = scalar_lea.vmem [#allocation3], %s2622
      %vm2624 = vcmask 261120
      %2625 = vst.msk [vmem:[%s2623] sm:$0xff] %vm2624, %v2621
    $region30: #{tpu_custom_call.1} parent=1 // loop_footer
      %s63 = sadd.s32 1, %s59
    $region31: #{tpu_custom_call.1} parent=1 // loop_footer_branch
      %58 = sbr.rel target = $region27
    $region32: #{tpu_custom_call.1} parent=1 // loop_exit
      _
    %v2626 = vld [vmem:[#allocation3] sm:$0xff]
    %v2627 = vld [vmem:[#allocation3 + $0x8] sm:$0xff]
    %v2628 = vld [vmem:[#allocation3 + $0x10] sm:$0xff]
    %v2629 = vld [vmem:[#allocation3 + $0x18] sm:$0xff]
    %v2630 = vld [vmem:[#allocation3 + $0x20] sm:$0xff]
    %v2631 = vld [vmem:[#allocation3 + $0x28] sm:$0xff]
    %v2632 = vld [vmem:[#allocation3 + $0x30] sm:$0xff]
    %v2633 = vld [vmem:[#allocation3 + $0x38] sm:$0xff]
    %v2634 = vcombine.low %v2626, %v2628
    %v2635 = vcombine.high %v2626, %v2628
    %v2637 = vunpack.c.l.s4 1983009808
    %v2638 = vunpack.c.0.s8 %v2637
    %v2639 = vlaneseq
    %v2640 = vshrl.u32 %v2639, 7
    %v2641 = vsub.s32 %v2638, %v2640
    %v2642 = vrot.slane %v2634, %v2641
    %v2644 = vunpack.c.l.s4 1983009808
    %v2645 = vunpack.c.0.s8 %v2644
    %v2646 = vlaneseq
    %v2647 = vshrl.u32 %v2646, 7
    %v2648 = vsub.s32 %v2645, %v2647
    %v2649 = vrot.slane %v2635, %v2648
    %v2650 = vcombine.low %v2627, %v2629
    %v2651 = vcombine.high %v2627, %v2629
    %v2653 = vunpack.c.l.s4 1983009808
    %v2654 = vunpack.c.0.s8 %v2653
    %v2655 = vlaneseq
    %v2656 = vshrl.u32 %v2655, 7
    %v2657 = vsub.s32 %v2654, %v2656
    %v2658 = vrot.slane %v2650, %v2657
    %v2660 = vunpack.c.l.s4 1983009808
    %v2661 = vunpack.c.0.s8 %v2660
    %v2662 = vlaneseq
    %v2663 = vshrl.u32 %v2662, 7
    %v2664 = vsub.s32 %v2661, %v2663
    %v2665 = vrot.slane %v2651, %v2664
    %v2666 = vcombine.low %v2630, %v2632
    %v2667 = vcombine.high %v2630, %v2632
    %v2669 = vunpack.c.l.s4 1983009808
    %v2670 = vunpack.c.0.s8 %v2669
    %v2671 = vlaneseq
    %v2672 = vshrl.u32 %v2671, 7
    %v2673 = vsub.s32 %v2670, %v2672
    %v2674 = vrot.slane %v2666, %v2673
    %v2676 = vunpack.c.l.s4 1983009808
    %v2677 = vunpack.c.0.s8 %v2676
    %v2678 = vlaneseq
    %v2679 = vshrl.u32 %v2678, 7
    %v2680 = vsub.s32 %v2677, %v2679
    %v2681 = vrot.slane %v2667, %v2680
    %v2682 = vcombine.low %v2631, %v2633
    %v2683 = vcombine.high %v2631, %v2633
    %v2685 = vunpack.c.l.s4 1983009808
    %v2686 = vunpack.c.0.s8 %v2685
    %v2687 = vlaneseq
    %v2688 = vshrl.u32 %v2687, 7
    %v2689 = vsub.s32 %v2686, %v2688
    %v2690 = vrot.slane %v2682, %v2689
    %v2692 = vunpack.c.l.s4 1983009808
    %v2693 = vunpack.c.0.s8 %v2692
    %v2694 = vlaneseq
    %v2695 = vshrl.u32 %v2694, 7
    %v2696 = vsub.s32 %v2693, %v2695
    %v2697 = vrot.slane %v2683, %v2696
    %v2698 = vcombine.low %v2642, %v2658
    %v2699 = vcombine.high %v2642, %v2658
    %v2701 = vunpack.c.l.s4 1934713408
    %v2702 = vunpack.c.0.s8 %v2701
    %v2703 = vlaneseq
    %v2704 = vshrl.u32 %v2703, 7
    %v2705 = vsub.s32 %v2702, %v2704
    %v2706 = vrot.slane %v2698, %v2705
    %v2708 = vunpack.c.l.s4 1934713408
    %v2709 = vunpack.c.0.s8 %v2708
    %v2710 = vlaneseq
    %v2711 = vshrl.u32 %v2710, 7
    %v2712 = vsub.s32 %v2709, %v2711
    %v2713 = vrot.slane %v2699, %v2712
    %v2714 = vcombine.low %v2649, %v2665
    %v2715 = vcombine.high %v2649, %v2665
    %v2717 = vunpack.c.l.s4 1934713408
    %v2718 = vunpack.c.0.s8 %v2717
    %v2719 = vlaneseq
    %v2720 = vshrl.u32 %v2719, 7
    %v2721 = vsub.s32 %v2718, %v2720
    %v2722 = vrot.slane %v2714, %v2721
    %v2724 = vunpack.c.l.s4 1934713408
    %v2725 = vunpack.c.0.s8 %v2724
    %v2726 = vlaneseq
    %v2727 = vshrl.u32 %v2726, 7
    %v2728 = vsub.s32 %v2725, %v2727
    %v2729 = vrot.slane %v2715, %v2728
    %v2730 = vcombine.low %v2674, %v2690
    %v2731 = vcombine.high %v2674, %v2690
    %v2733 = vunpack.c.l.s4 1934713408
    %v2734 = vunpack.c.0.s8 %v2733
    %v2735 = vlaneseq
    %v2736 = vshrl.u32 %v2735, 7
    %v2737 = vsub.s32 %v2734, %v2736
    %v2738 = vrot.slane %v2730, %v2737
    %v2740 = vunpack.c.l.s4 1934713408
    %v2741 = vunpack.c.0.s8 %v2740
    %v2742 = vlaneseq
    %v2743 = vshrl.u32 %v2742, 7
    %v2744 = vsub.s32 %v2741, %v2743
    %v2745 = vrot.slane %v2731, %v2744
    %v2746 = vcombine.low %v2681, %v2697
    %v2747 = vcombine.high %v2681, %v2697
    %v2749 = vunpack.c.l.s4 1934713408
    %v2750 = vunpack.c.0.s8 %v2749
    %v2751 = vlaneseq
    %v2752 = vshrl.u32 %v2751, 7
    %v2753 = vsub.s32 %v2750, %v2752
    %v2754 = vrot.slane %v2746, %v2753
    %v2756 = vunpack.c.l.s4 1934713408
    %v2757 = vunpack.c.0.s8 %v2756
    %v2758 = vlaneseq
    %v2759 = vshrl.u32 %v2758, 7
    %v2760 = vsub.s32 %v2757, %v2759
    %v2761 = vrot.slane %v2747, %v2760
    %v2762 = vcombine.low %v2706, %v2738
    %v2763 = vcombine.high %v2706, %v2738
    %v2764 = vcombine.low %v2713, %v2745
    %v2765 = vcombine.high %v2713, %v2745
    %v2766 = vcombine.low %v2722, %v2754
    %v2767 = vcombine.high %v2722, %v2754
    %v2768 = vcombine.low %v2729, %v2761
    %v2769 = vcombine.high %v2729, %v2761
    %2771 = vrot.lane.b32.xlu0 %v2763, 32
    %v2772 = vpop.permute.xlu0 %2771
    %2775 = vrot.lane.b32.xlu0 %v2764, 64
    %v2776 = vpop.permute.xlu0 %2775
    %2779 = vrot.lane.b32.xlu0 %v2765, 96
    %v2780 = vpop.permute.xlu0 %2779
    %2783 = vrot.lane.b32.xlu0 %v2767, 32
    %v2784 = vpop.permute.xlu0 %2783
    %2787 = vrot.lane.b32.xlu0 %v2768, 64
    %v2788 = vpop.permute.xlu0 %2787
    %2791 = vrot.lane.b32.xlu0 %v2769, 96
    %v2792 = vpop.permute.xlu0 %2791
    %vm2794 = vcmask 261120
    %v2795 = vsel %vm2794, %v2762, %v2772
    %vm2796 = vcmask 523264
    %v2797 = vsel %vm2796, %v2795, %v2776
    %vm2798 = vcmask 785408
    %v2799 = vsel %vm2798, %v2797, %v2780
    %v2800 = vsel %vm2794, %v2766, %v2784
    %v2801 = vsel %vm2796, %v2800, %v2788
    %v2802 = vsel %vm2798, %v2801, %v2792
    %2803 = vst [vmem:[#allocation6] sm:$0xff] %v2799
    %2804 = vst [vmem:[#allocation6 + $0x8] sm:$0xff] %v2802
    // Predicated region
    $region37: #{tpu_custom_call.1} parent=1 // pred_check
      _
    $region38: #{tpu_custom_call.1} parent=1 // pred_check_branch
      %2806 = sbr.rel (0) target = $region40
    $region39: #{tpu_custom_call.1} parent=1 // pred_region
      %s2808 = ssub.s32 256, 256
      %2809 = vsyncadd [#allocation7], %s2808
      %s2811 = sshll.u32 [#allocation6], 4
      %s2812 = int_to_ptr.vmem [resolvable:$true] %s2811
      %2814 = dma.vmem_to_hbm [thread:$0]  %s2812, 256, %s6, [#allocation7]
    $region40: #{tpu_custom_call.1} parent=1 // pred_fallthru
      _
    // Predicated region
    $region41: #{tpu_custom_call.1} parent=1 // pred_check
      _
    $region42: #{tpu_custom_call.1} parent=1 // pred_check_branch
      %2816 = sbr.rel (0) target = $region44
    $region43: #{tpu_custom_call.1} parent=1 // pred_region
      %2817 = dma.done [#allocation7], 256
    $region44: #{tpu_custom_call.1} parent=1 // pred_fallthru
      _
    %2818 = vsyncpa [#allocation7], 1

</llo_original>
